<compile_context>
chip_gen: v6e
topology: v6e:2x2x1
jax: 0.10.0
libtpu: 0.0.40
codegen_flags: <defaults>
</compile_context>

<pallas_src>
import functools

import jax
import jax.numpy as jnp
from jax.experimental import pallas as pl
from jax.experimental.pallas import tpu as pltpu


def _make_dense_block_kernel(H, W, C0, growth, num_layers):
    """Fused kernel: all BNReluConv layers for one batch element.

    refs layout (positional):
      x_ref                       (1, H, W, C0)
      per layer l (2 refs each):  ss (2, Cin_l)  [row0 = scale, row1 = shift]
                                  w  (9*Cin_l, Cout_pad)
      out_ref                     (1, H*W, Cout_pad)     lane-dense store
      feat_ref  VMEM scratch      (H, W, C_max)          accumulated raw feats
      pad_ref   VMEM scratch      (H+2, W+2, C_max)      zero-halo activations
    """

    def kernel(*refs):
        x_ref = refs[0]
        layer_refs = refs[1:1 + 2 * num_layers]
        out_ref = refs[1 + 2 * num_layers]
        feat_ref, pad_ref = refs[2 + 2 * num_layers:]

        # Zero the padded-activation scratch once per grid step.  The 1-pixel
        # halo stays zero for every layer; the interior (first Cin channels)
        # is fully overwritten each layer before it is read.
        pad_ref[...] = jnp.zeros_like(pad_ref)

        # Seed the resident feature map with the block input channels.
        feat_ref[:, :, :C0] = x_ref[0]

        cin = C0
        for l in range(num_layers):
            ss_ref = layer_refs[2 * l]       # (2, cin) folded BN scale/shift
            w_ref = layer_refs[2 * l + 1]    # (9*cin, Cout_pad)

            # BN(eval) + ReLU on the accumulated raw features of this layer.
            act = jnp.maximum(
                feat_ref[:, :, :cin] * ss_ref[0] + ss_ref[1], 0.0)
            pad_ref[1:H + 1, 1:W + 1, :cin] = act

            # im2col: 9 shifted patches -> one (H*W, 9*cin) slab, then a
            # single MXU matmul with Cout padded to 128 lanes.
            patches = []
            for dy in range(3):
                for dx in range(3):
                    patches.append(
                        pad_ref[dy:dy + H, dx:dx + W, :cin].reshape(H * W, cin))
            col = jnp.concatenate(patches, axis=1)          # (H*W, 9*cin)

            out = jnp.dot(col, w_ref[...],
                          preferred_element_type=jnp.float32)  # (H*W, Cout_pad)

            if l == num_layers - 1:
                # Final layer (is_final=True): single lane-dense HBM store.
                out_ref[0] = out
            else:
                # torch.cat((x, out), dim=1): append the new growth channels
                # to the resident feature map (VMEM only, no HBM traffic).
                feat_ref[:, :, cin:cin + growth] = (
                    out[:, :growth].reshape(H, W, growth))
                cin += growth

    return kernel


def dense_block_pallas(x_nhwc, params, growth_rate):
    """Fused DenseBlock. x_nhwc: (N, H, W, C0) -> (N, H, W, growth_rate)."""
    N, H, W, C0 = x_nhwc.shape
    L = len(params)
    c_max = C0 + (L - 1) * growth_rate
    cout_pad = max(128, pl.cdiv(growth_rate, 128) * 128)

    inputs = [x_nhwc.astype(jnp.float32)]
    in_specs = [pl.BlockSpec((1, H, W, C0), lambda n: (n, 0, 0, 0))]

    flops = 0
    bytes_accessed = x_nhwc.size * 4
    for p in params:
        cin = p["scale"].shape[0]
        ss = jnp.stack([p["scale"], p["shift"]]).astype(jnp.float32)  # (2,cin)
        w_pad = jnp.pad(p["w9"].astype(jnp.float32),
                        ((0, 0), (0, cout_pad - growth_rate)))
        inputs += [ss, w_pad]
        in_specs += [
            pl.BlockSpec((2, cin), lambda n: (0, 0)),
            pl.BlockSpec((9 * cin, cout_pad), lambda n: (0, 0)),
        ]
        flops += N * (2 * H * W * 9 * cin * cout_pad + 3 * H * W * cin)
        bytes_accessed += (2 * cin + 9 * cin * cout_pad) * 4
    bytes_accessed += N * H * W * cout_pad * 4

    kernel = _make_dense_block_kernel(H, W, C0, growth_rate, L)

    out = pl.pallas_call(
        kernel,
        out_shape=jax.ShapeDtypeStruct((N, H * W, cout_pad), jnp.float32),
        grid_spec=pltpu.PrefetchScalarGridSpec(
            num_scalar_prefetch=0,
            grid=(N,),
            in_specs=in_specs,
            out_specs=pl.BlockSpec((1, H * W, cout_pad), lambda n: (n, 0, 0)),
            scratch_shapes=[
                pltpu.VMEM((H, W, c_max), jnp.float32),          # feature map
                pltpu.VMEM((H + 2, W + 2, c_max), jnp.float32),  # padded acts
            ],
        ),
        compiler_params=pltpu.CompilerParams(
            dimension_semantics=("parallel",)),
        cost_estimate=pl.CostEstimate(
            flops=flops, transcendentals=0, bytes_accessed=bytes_accessed),
    )(*inputs)

    # Drop the lane padding and restore (N, H, W, growth).
    return out[:, :, :growth_rate].reshape(N, H, W, growth_rate)


def init_dense_block_params(key, in_channels, growth_rate, num_layers):
    """Deterministic synthetic parameters for every DenseLayer."""
    params = []
    c = in_channels
    for _ in range(num_layers):
        key, k_g, k_b, k_m, k_v, k_w = jax.random.split(key, 6)
        gamma = jax.random.uniform(k_g, (c,), jnp.float32, 0.5, 1.5)
        beta = 0.1 * jax.random.normal(k_b, (c,), jnp.float32)
        running_mean = 0.1 * jax.random.normal(k_m, (c,), jnp.float32)
        running_var = jax.random.uniform(k_v, (c,), jnp.float32, 0.5, 1.5)
        eps = 1e-5  # PyTorch BatchNorm2d default
        scale = gamma / jnp.sqrt(running_var + eps)
        shift = beta - running_mean * scale

        # PyTorch Conv2d weight layout: (Cout, Cin, kh, kw), bias=False.
        w_pt = 0.1 * jax.random.normal(k_w, (growth_rate, c, 3, 3), jnp.float32)
        w_hwio = jnp.transpose(w_pt, (2, 3, 1, 0))       # (3, 3, Cin, Cout)
        w9 = w_hwio.reshape(9 * c, growth_rate)          # row = (kh*3+kw)*Cin + c

        params.append({"scale": scale, "shift": shift,
                       "w9": w9, "w_hwio": w_hwio})
        c += growth_rate
    return params


@functools.partial(jax.jit, static_argnums=(2,))
def dense_block_forward(x_nchw, params, growth_rate):
    """DenseBlock.forward. Input/output are NCHW like the PyTorch module."""
    x = jnp.transpose(x_nchw, (0, 2, 3, 1))              # NCHW -> NHWC
    out = dense_block_pallas(x, params, growth_rate)     # single fused kernel
    return jnp.transpose(out, (0, 3, 1, 2))              # NHWC -> NCHW


def dense_block_reference(x_nchw, params):
    """Pure-JAX reference (lax conv) for numerical verification."""
    x = jnp.transpose(x_nchw, (0, 2, 3, 1))
    n_layers = len(params)
    for i, p in enumerate(params):
        act = jnp.maximum(x * p["scale"] + p["shift"], 0.0)
        out = jax.lax.conv_general_dilated(
            act, p["w_hwio"], window_strides=(1, 1), padding="SAME",
            dimension_numbers=("NHWC", "HWIO", "NHWC"))
        x = out if i == n_layers - 1 else jnp.concatenate([x, out], axis=-1)
    return jnp.transpose(x, (0, 3, 1, 2))


if __name__ == "__main__":
    key = jax.random.PRNGKey(0)
    key, kx = jax.random.split(key)

    # Small shapes consistent with the module's NCHW conv input.
    N, C, H, W = 2, 4, 16, 16
    growth_rate, num_layers = 8, 3

    x = jax.random.normal(kx, (N, C, H, W), jnp.float32)
    params = init_dense_block_params(key, C, growth_rate, num_layers)

    # TODO(synk): BatchNorm running-stat updates (training mode) are not
    # modeled; BN is folded in eval mode as in inference.
    out = dense_block_forward(x, params, growth_rate)
    out = jax.block_until_ready(out)

    # Final DenseLayer has is_final=True -> output channels == growth_rate.
    assert out.shape == (N, growth_rate, H, W), out.shape

    ref = dense_block_reference(x, params)
    max_err = float(jnp.max(jnp.abs(out - ref)))
    assert max_err < 2e-3, f"max abs error {max_err}"

    print("KERNEL_OK")
</pallas_src>

<mosaic_0001>
module attributes {stable_mosaic.version = 11 : i64} {
  func.func @kernel(%arg0: i32, %arg1: memref<1x16x16x4xf32, #tpu.memory_space<vmem>>, %arg2: memref<2x4xf32, #tpu.memory_space<vmem>>, %arg3: memref<36x128xf32, #tpu.memory_space<vmem>>, %arg4: memref<2x12xf32, #tpu.memory_space<vmem>>, %arg5: memref<108x128xf32, #tpu.memory_space<vmem>>, %arg6: memref<2x20xf32, #tpu.memory_space<vmem>>, %arg7: memref<180x128xf32, #tpu.memory_space<vmem>>, %arg8: memref<1x256x128xf32, #tpu.memory_space<vmem>>, %arg9: memref<16x16x20xf32, #tpu.memory_space<vmem>>, %arg10: memref<18x18x20xf32, #tpu.memory_space<vmem>>) attributes {dimension_semantics = [#tpu.dimension_semantics<parallel>], iteration_bounds = array<i64: 2>, scalar_prefetch = 0 : i64, scratch_operands = 2 : i64, tpu.core_type = #tpu.core_type<tc>, window_params = [{transform_indices = @transform_0, window_bounds = array<i64: 1, 16, 16, 4>}, {pipeline_mode = #tpu.pipeline_mode<synchronous>, transform_indices = @transform_1, window_bounds = array<i64: 2, 4>}, {pipeline_mode = #tpu.pipeline_mode<synchronous>, transform_indices = @transform_2, window_bounds = array<i64: 36, 128>}, {pipeline_mode = #tpu.pipeline_mode<synchronous>, transform_indices = @transform_3, window_bounds = array<i64: 2, 12>}, {pipeline_mode = #tpu.pipeline_mode<synchronous>, transform_indices = @transform_4, window_bounds = array<i64: 108, 128>}, {pipeline_mode = #tpu.pipeline_mode<synchronous>, transform_indices = @transform_5, window_bounds = array<i64: 2, 20>}, {pipeline_mode = #tpu.pipeline_mode<synchronous>, transform_indices = @transform_6, window_bounds = array<i64: 180, 128>}, {transform_indices = @transform_7, window_bounds = array<i64: 1, 256, 128>}]} {
    %cst = arith.constant 0.000000e+00 : f32
    %0 = vector.broadcast %cst : f32 to vector<18x18x20xf32>
    %c0 = arith.constant 0 : index
    %c0_0 = arith.constant 0 : index
    %c0_1 = arith.constant 0 : index
    %1 = vector.load %arg10[%c0, %c0_0, %c0_1] : memref<18x18x20xf32, #tpu.memory_space<vmem>>, vector<18x18x20xf32>
    tpu.vector_store %arg10[%c0, %c0_0, %c0_1], %0 {strides = array<i32>} : memref<18x18x20xf32, #tpu.memory_space<vmem>>, vector<18x18x20xf32>,
    %c0_2 = arith.constant 0 : index
    %c0_3 = arith.constant 0 : index
    %c0_4 = arith.constant 0 : index
    %c0_5 = arith.constant 0 : index
    %2 = vector.load %arg1[%c0_2, %c0_3, %c0_4, %c0_5] : memref<1x16x16x4xf32, #tpu.memory_space<vmem>>, vector<1x16x16x4xf32>
    %3 = vector.shape_cast %2 : vector<1x16x16x4xf32> to vector<16x16x4xf32>
    %c0_6 = arith.constant 0 : index
    %c0_7 = arith.constant 0 : index
    %c0_8 = arith.constant 0 : index
    %4 = vector.load %arg9[%c0_6, %c0_7, %c0_8] : memref<16x16x20xf32, #tpu.memory_space<vmem>>, vector<16x16x4xf32>
    tpu.vector_store %arg9[%c0_6, %c0_7, %c0_8], %3 {strides = array<i32>} : memref<16x16x20xf32, #tpu.memory_space<vmem>>, vector<16x16x4xf32>,
    %c0_9 = arith.constant 0 : index
    %c0_10 = arith.constant 0 : index
    %c0_11 = arith.constant 0 : index
    %5 = vector.load %arg9[%c0_9, %c0_10, %c0_11] : memref<16x16x20xf32, #tpu.memory_space<vmem>>, vector<16x16x4xf32>
    %c0_12 = arith.constant 0 : index
    %c0_13 = arith.constant 0 : index
    %6 = vector.load %arg2[%c0_12, %c0_13] : memref<2x4xf32, #tpu.memory_space<vmem>>, vector<1x4xf32>
    %7 = vector.shape_cast %6 : vector<1x4xf32> to vector<4xf32>
    %8 = vector.shape_cast %7 : vector<4xf32> to vector<1x1x4xf32>
    %9 = vector.broadcast %8 : vector<1x1x4xf32> to vector<16x16x4xf32>
    %10 = arith.mulf %5, %9 : vector<16x16x4xf32>
    %c1 = arith.constant 1 : index
    %c0_14 = arith.constant 0 : index
    %11 = vector.load %arg2[%c1, %c0_14] : memref<2x4xf32, #tpu.memory_space<vmem>>, vector<1x4xf32>
    %12 = vector.shape_cast %11 : vector<1x4xf32> to vector<4xf32>
    %13 = vector.shape_cast %12 : vector<4xf32> to vector<1x1x4xf32>
    %14 = vector.broadcast %13 : vector<1x1x4xf32> to vector<16x16x4xf32>
    %15 = arith.addf %10, %14 : vector<16x16x4xf32>
    %cst_15 = arith.constant 0.000000e+00 : f32
    %16 = vector.broadcast %cst_15 : f32 to vector<16x16x4xf32>
    %17 = arith.maximumf %15, %16 : vector<16x16x4xf32>
    %c1_16 = arith.constant 1 : index
    %c1_17 = arith.constant 1 : index
    %c0_18 = arith.constant 0 : index
    %18 = vector.load %arg10[%c1_16, %c1_17, %c0_18] : memref<18x18x20xf32, #tpu.memory_space<vmem>>, vector<16x16x4xf32>
    tpu.vector_store %arg10[%c1_16, %c1_17, %c0_18], %17 {strides = array<i32>} : memref<18x18x20xf32, #tpu.memory_space<vmem>>, vector<16x16x4xf32>,
    %c0_19 = arith.constant 0 : index
    %c0_20 = arith.constant 0 : index
    %c0_21 = arith.constant 0 : index
    %19 = vector.load %arg10[%c0_19, %c0_20, %c0_21] : memref<18x18x20xf32, #tpu.memory_space<vmem>>, vector<16x16x4xf32>
    %20 = vector.shape_cast %19 : vector<16x16x4xf32> to vector<256x4xf32>
    %c0_22 = arith.constant 0 : index
    %c1_23 = arith.constant 1 : index
    %c0_24 = arith.constant 0 : index
    %21 = vector.load %arg10[%c0_22, %c1_23, %c0_24] : memref<18x18x20xf32, #tpu.memory_space<vmem>>, vector<16x16x4xf32>
    %22 = vector.shape_cast %21 : vector<16x16x4xf32> to vector<256x4xf32>
    %c0_25 = arith.constant 0 : index
    %c2 = arith.constant 2 : index
    %c0_26 = arith.constant 0 : index
    %23 = vector.load %arg10[%c0_25, %c2, %c0_26] : memref<18x18x20xf32, #tpu.memory_space<vmem>>, vector<16x16x4xf32>
    %24 = vector.shape_cast %23 : vector<16x16x4xf32> to vector<256x4xf32>
    %c1_27 = arith.constant 1 : index
    %c0_28 = arith.constant 0 : index
    %c0_29 = arith.constant 0 : index
    %25 = vector.load %arg10[%c1_27, %c0_28, %c0_29] : memref<18x18x20xf32, #tpu.memory_space<vmem>>, vector<16x16x4xf32>
    %26 = vector.shape_cast %25 : vector<16x16x4xf32> to vector<256x4xf32>
    %c1_30 = arith.constant 1 : index
    %c1_31 = arith.constant 1 : index
    %c0_32 = arith.constant 0 : index
    %27 = vector.load %arg10[%c1_30, %c1_31, %c0_32] : memref<18x18x20xf32, #tpu.memory_space<vmem>>, vector<16x16x4xf32>
    %28 = vector.shape_cast %27 : vector<16x16x4xf32> to vector<256x4xf32>
    %c1_33 = arith.constant 1 : index
    %c2_34 = arith.constant 2 : index
    %c0_35 = arith.constant 0 : index
    %29 = vector.load %arg10[%c1_33, %c2_34, %c0_35] : memref<18x18x20xf32, #tpu.memory_space<vmem>>, vector<16x16x4xf32>
    %30 = vector.shape_cast %29 : vector<16x16x4xf32> to vector<256x4xf32>
    %c2_36 = arith.constant 2 : index
    %c0_37 = arith.constant 0 : index
    %c0_38 = arith.constant 0 : index
    %31 = vector.load %arg10[%c2_36, %c0_37, %c0_38] : memref<18x18x20xf32, #tpu.memory_space<vmem>>, vector<16x16x4xf32>
    %32 = vector.shape_cast %31 : vector<16x16x4xf32> to vector<256x4xf32>
    %c2_39 = arith.constant 2 : index
    %c1_40 = arith.constant 1 : index
    %c0_41 = arith.constant 0 : index
    %33 = vector.load %arg10[%c2_39, %c1_40, %c0_41] : memref<18x18x20xf32, #tpu.memory_space<vmem>>, vector<16x16x4xf32>
    %34 = vector.shape_cast %33 : vector<16x16x4xf32> to vector<256x4xf32>
    %c2_42 = arith.constant 2 : index
    %c2_43 = arith.constant 2 : index
    %c0_44 = arith.constant 0 : index
    %35 = vector.load %arg10[%c2_42, %c2_43, %c0_44] : memref<18x18x20xf32, #tpu.memory_space<vmem>>, vector<16x16x4xf32>
    %36 = vector.shape_cast %35 : vector<16x16x4xf32> to vector<256x4xf32>
    %37 = tpu.concatenate %20, %22, %24, %26, %28, %30, %32, %34, %36 in 1 : vector<256x4xf32>, vector<256x4xf32>, vector<256x4xf32>, vector<256x4xf32>, vector<256x4xf32>, vector<256x4xf32>, vector<256x4xf32>, vector<256x4xf32>, vector<256x4xf32> -> vector<256x36xf32>
    %c0_45 = arith.constant 0 : index
    %c0_46 = arith.constant 0 : index
    %38 = vector.load %arg3[%c0_45, %c0_46] : memref<36x128xf32, #tpu.memory_space<vmem>>, vector<36x128xf32>
    %cst_47 = arith.constant dense<0.000000e+00> : vector<256x128xf32>
    %39 = tpu.matmul %37, %38, %cst_47 {dimension_numbers = #tpu.dot_dimension_numbers<[1], [0], [0], [1], [0, 0, 1, 1], [], []>} : vector<256x36xf32>, vector<36x128xf32>, vector<256x128xf32> -> vector<256x128xf32>
    %40 = vector.extract_strided_slice %39 {offsets = [0, 0], sizes = [256, 8], strides = [1, 1]} : vector<256x128xf32> to vector<256x8xf32>
    %41 = vector.shape_cast %40 : vector<256x8xf32> to vector<16x16x8xf32>
    %c0_48 = arith.constant 0 : index
    %c0_49 = arith.constant 0 : index
    %c4 = arith.constant 4 : index
    %42 = vector.load %arg9[%c0_48, %c0_49, %c4] : memref<16x16x20xf32, #tpu.memory_space<vmem>>, vector<16x16x8xf32>
    tpu.vector_store %arg9[%c0_48, %c0_49, %c4], %41 {strides = array<i32>} : memref<16x16x20xf32, #tpu.memory_space<vmem>>, vector<16x16x8xf32>,
    %c0_50 = arith.constant 0 : index
    %c0_51 = arith.constant 0 : index
    %c0_52 = arith.constant 0 : index
    %43 = vector.load %arg9[%c0_50, %c0_51, %c0_52] : memref<16x16x20xf32, #tpu.memory_space<vmem>>, vector<16x16x12xf32>
    %c0_53 = arith.constant 0 : index
    %c0_54 = arith.constant 0 : index
    %44 = vector.load %arg4[%c0_53, %c0_54] : memref<2x12xf32, #tpu.memory_space<vmem>>, vector<1x12xf32>
    %45 = vector.shape_cast %44 : vector<1x12xf32> to vector<12xf32>
    %46 = vector.shape_cast %45 : vector<12xf32> to vector<1x1x12xf32>
    %47 = vector.broadcast %46 : vector<1x1x12xf32> to vector<16x16x12xf32>
    %48 = arith.mulf %43, %47 : vector<16x16x12xf32>
    %c1_55 = arith.constant 1 : index
    %c0_56 = arith.constant 0 : index
    %49 = vector.load %arg4[%c1_55, %c0_56] : memref<2x12xf32, #tpu.memory_space<vmem>>, vector<1x12xf32>
    %50 = vector.shape_cast %49 : vector<1x12xf32> to vector<12xf32>
    %51 = vector.shape_cast %50 : vector<12xf32> to vector<1x1x12xf32>
    %52 = vector.broadcast %51 : vector<1x1x12xf32> to vector<16x16x12xf32>
    %53 = arith.addf %48, %52 : vector<16x16x12xf32>
    %cst_57 = arith.constant 0.000000e+00 : f32
    %54 = vector.broadcast %cst_57 : f32 to vector<16x16x12xf32>
    %55 = arith.maximumf %53, %54 : vector<16x16x12xf32>
    %c1_58 = arith.constant 1 : index
    %c1_59 = arith.constant 1 : index
    %c0_60 = arith.constant 0 : index
    %56 = vector.load %arg10[%c1_58, %c1_59, %c0_60] : memref<18x18x20xf32, #tpu.memory_space<vmem>>, vector<16x16x12xf32>
    tpu.vector_store %arg10[%c1_58, %c1_59, %c0_60], %55 {strides = array<i32>} : memref<18x18x20xf32, #tpu.memory_space<vmem>>, vector<16x16x12xf32>,
    %c0_61 = arith.constant 0 : index
    %c0_62 = arith.constant 0 : index
    %c0_63 = arith.constant 0 : index
    %57 = vector.load %arg10[%c0_61, %c0_62, %c0_63] : memref<18x18x20xf32, #tpu.memory_space<vmem>>, vector<16x16x12xf32>
    %58 = vector.shape_cast %57 : vector<16x16x12xf32> to vector<256x12xf32>
    %c0_64 = arith.constant 0 : index
    %c1_65 = arith.constant 1 : index
    %c0_66 = arith.constant 0 : index
    %59 = vector.load %arg10[%c0_64, %c1_65, %c0_66] : memref<18x18x20xf32, #tpu.memory_space<vmem>>, vector<16x16x12xf32>
    %60 = vector.shape_cast %59 : vector<16x16x12xf32> to vector<256x12xf32>
    %c0_67 = arith.constant 0 : index
    %c2_68 = arith.constant 2 : index
    %c0_69 = arith.constant 0 : index
    %61 = vector.load %arg10[%c0_67, %c2_68, %c0_69] : memref<18x18x20xf32, #tpu.memory_space<vmem>>, vector<16x16x12xf32>
    %62 = vector.shape_cast %61 : vector<16x16x12xf32> to vector<256x12xf32>
    %c1_70 = arith.constant 1 : index
    %c0_71 = arith.constant 0 : index
    %c0_72 = arith.constant 0 : index
    %63 = vector.load %arg10[%c1_70, %c0_71, %c0_72] : memref<18x18x20xf32, #tpu.memory_space<vmem>>, vector<16x16x12xf32>
    %64 = vector.shape_cast %63 : vector<16x16x12xf32> to vector<256x12xf32>
    %c1_73 = arith.constant 1 : index
    %c1_74 = arith.constant 1 : index
    %c0_75 = arith.constant 0 : index
    %65 = vector.load %arg10[%c1_73, %c1_74, %c0_75] : memref<18x18x20xf32, #tpu.memory_space<vmem>>, vector<16x16x12xf32>
    %66 = vector.shape_cast %65 : vector<16x16x12xf32> to vector<256x12xf32>
    %c1_76 = arith.constant 1 : index
    %c2_77 = arith.constant 2 : index
    %c0_78 = arith.constant 0 : index
    %67 = vector.load %arg10[%c1_76, %c2_77, %c0_78] : memref<18x18x20xf32, #tpu.memory_space<vmem>>, vector<16x16x12xf32>
    %68 = vector.shape_cast %67 : vector<16x16x12xf32> to vector<256x12xf32>
    %c2_79 = arith.constant 2 : index
    %c0_80 = arith.constant 0 : index
    %c0_81 = arith.constant 0 : index
    %69 = vector.load %arg10[%c2_79, %c0_80, %c0_81] : memref<18x18x20xf32, #tpu.memory_space<vmem>>, vector<16x16x12xf32>
    %70 = vector.shape_cast %69 : vector<16x16x12xf32> to vector<256x12xf32>
    %c2_82 = arith.constant 2 : index
    %c1_83 = arith.constant 1 : index
    %c0_84 = arith.constant 0 : index
    %71 = vector.load %arg10[%c2_82, %c1_83, %c0_84] : memref<18x18x20xf32, #tpu.memory_space<vmem>>, vector<16x16x12xf32>
    %72 = vector.shape_cast %71 : vector<16x16x12xf32> to vector<256x12xf32>
    %c2_85 = arith.constant 2 : index
    %c2_86 = arith.constant 2 : index
    %c0_87 = arith.constant 0 : index
    %73 = vector.load %arg10[%c2_85, %c2_86, %c0_87] : memref<18x18x20xf32, #tpu.memory_space<vmem>>, vector<16x16x12xf32>
    %74 = vector.shape_cast %73 : vector<16x16x12xf32> to vector<256x12xf32>
    %75 = tpu.concatenate %58, %60, %62, %64, %66, %68, %70, %72, %74 in 1 : vector<256x12xf32>, vector<256x12xf32>, vector<256x12xf32>, vector<256x12xf32>, vector<256x12xf32>, vector<256x12xf32>, vector<256x12xf32>, vector<256x12xf32>, vector<256x12xf32> -> vector<256x108xf32>
    %c0_88 = arith.constant 0 : index
    %c0_89 = arith.constant 0 : index
    %76 = vector.load %arg5[%c0_88, %c0_89] : memref<108x128xf32, #tpu.memory_space<vmem>>, vector<108x128xf32>
    %cst_90 = arith.constant dense<0.000000e+00> : vector<256x128xf32>
    %77 = tpu.matmul %75, %76, %cst_90 {dimension_numbers = #tpu.dot_dimension_numbers<[1], [0], [0], [1], [0, 0, 1, 1], [], []>} : vector<256x108xf32>, vector<108x128xf32>, vector<256x128xf32> -> vector<256x128xf32>
    %78 = vector.extract_strided_slice %77 {offsets = [0, 0], sizes = [256, 8], strides = [1, 1]} : vector<256x128xf32> to vector<256x8xf32>
    %79 = vector.shape_cast %78 : vector<256x8xf32> to vector<16x16x8xf32>
    %c0_91 = arith.constant 0 : index
    %c0_92 = arith.constant 0 : index
    %c12 = arith.constant 12 : index
    %80 = vector.load %arg9[%c0_91, %c0_92, %c12] : memref<16x16x20xf32, #tpu.memory_space<vmem>>, vector<16x16x8xf32>
    tpu.vector_store %arg9[%c0_91, %c0_92, %c12], %79 {strides = array<i32>} : memref<16x16x20xf32, #tpu.memory_space<vmem>>, vector<16x16x8xf32>,
    %c0_93 = arith.constant 0 : index
    %c0_94 = arith.constant 0 : index
    %c0_95 = arith.constant 0 : index
    %81 = vector.load %arg9[%c0_93, %c0_94, %c0_95] : memref<16x16x20xf32, #tpu.memory_space<vmem>>, vector<16x16x20xf32>
    %c0_96 = arith.constant 0 : index
    %c0_97 = arith.constant 0 : index
    %82 = vector.load %arg6[%c0_96, %c0_97] : memref<2x20xf32, #tpu.memory_space<vmem>>, vector<1x20xf32>
    %83 = vector.shape_cast %82 : vector<1x20xf32> to vector<20xf32>
    %84 = vector.shape_cast %83 : vector<20xf32> to vector<1x1x20xf32>
    %85 = vector.broadcast %84 : vector<1x1x20xf32> to vector<16x16x20xf32>
    %86 = arith.mulf %81, %85 : vector<16x16x20xf32>
    %c1_98 = arith.constant 1 : index
    %c0_99 = arith.constant 0 : index
    %87 = vector.load %arg6[%c1_98, %c0_99] : memref<2x20xf32, #tpu.memory_space<vmem>>, vector<1x20xf32>
    %88 = vector.shape_cast %87 : vector<1x20xf32> to vector<20xf32>
    %89 = vector.shape_cast %88 : vector<20xf32> to vector<1x1x20xf32>
    %90 = vector.broadcast %89 : vector<1x1x20xf32> to vector<16x16x20xf32>
    %91 = arith.addf %86, %90 : vector<16x16x20xf32>
    %cst_100 = arith.constant 0.000000e+00 : f32
    %92 = vector.broadcast %cst_100 : f32 to vector<16x16x20xf32>
    %93 = arith.maximumf %91, %92 : vector<16x16x20xf32>
    %c1_101 = arith.constant 1 : index
    %c1_102 = arith.constant 1 : index
    %c0_103 = arith.constant 0 : index
    %94 = vector.load %arg10[%c1_101, %c1_102, %c0_103] : memref<18x18x20xf32, #tpu.memory_space<vmem>>, vector<16x16x20xf32>
    tpu.vector_store %arg10[%c1_101, %c1_102, %c0_103], %93 {strides = array<i32>} : memref<18x18x20xf32, #tpu.memory_space<vmem>>, vector<16x16x20xf32>,
    %c0_104 = arith.constant 0 : index
    %c0_105 = arith.constant 0 : index
    %c0_106 = arith.constant 0 : index
    %95 = vector.load %arg10[%c0_104, %c0_105, %c0_106] : memref<18x18x20xf32, #tpu.memory_space<vmem>>, vector<16x16x20xf32>
    %96 = vector.shape_cast %95 : vector<16x16x20xf32> to vector<256x20xf32>
    %c0_107 = arith.constant 0 : index
    %c1_108 = arith.constant 1 : index
    %c0_109 = arith.constant 0 : index
    %97 = vector.load %arg10[%c0_107, %c1_108, %c0_109] : memref<18x18x20xf32, #tpu.memory_space<vmem>>, vector<16x16x20xf32>
    %98 = vector.shape_cast %97 : vector<16x16x20xf32> to vector<256x20xf32>
    %c0_110 = arith.constant 0 : index
    %c2_111 = arith.constant 2 : index
    %c0_112 = arith.constant 0 : index
    %99 = vector.load %arg10[%c0_110, %c2_111, %c0_112] : memref<18x18x20xf32, #tpu.memory_space<vmem>>, vector<16x16x20xf32>
    %100 = vector.shape_cast %99 : vector<16x16x20xf32> to vector<256x20xf32>
    %c1_113 = arith.constant 1 : index
    %c0_114 = arith.constant 0 : index
    %c0_115 = arith.constant 0 : index
    %101 = vector.load %arg10[%c1_113, %c0_114, %c0_115] : memref<18x18x20xf32, #tpu.memory_space<vmem>>, vector<16x16x20xf32>
    %102 = vector.shape_cast %101 : vector<16x16x20xf32> to vector<256x20xf32>
    %c1_116 = arith.constant 1 : index
    %c1_117 = arith.constant 1 : index
    %c0_118 = arith.constant 0 : index
    %103 = vector.load %arg10[%c1_116, %c1_117, %c0_118] : memref<18x18x20xf32, #tpu.memory_space<vmem>>, vector<16x16x20xf32>
    %104 = vector.shape_cast %103 : vector<16x16x20xf32> to vector<256x20xf32>
    %c1_119 = arith.constant 1 : index
    %c2_120 = arith.constant 2 : index
    %c0_121 = arith.constant 0 : index
    %105 = vector.load %arg10[%c1_119, %c2_120, %c0_121] : memref<18x18x20xf32, #tpu.memory_space<vmem>>, vector<16x16x20xf32>
    %106 = vector.shape_cast %105 : vector<16x16x20xf32> to vector<256x20xf32>
    %c2_122 = arith.constant 2 : index
    %c0_123 = arith.constant 0 : index
    %c0_124 = arith.constant 0 : index
    %107 = vector.load %arg10[%c2_122, %c0_123, %c0_124] : memref<18x18x20xf32, #tpu.memory_space<vmem>>, vector<16x16x20xf32>
    %108 = vector.shape_cast %107 : vector<16x16x20xf32> to vector<256x20xf32>
    %c2_125 = arith.constant 2 : index
    %c1_126 = arith.constant 1 : index
    %c0_127 = arith.constant 0 : index
    %109 = vector.load %arg10[%c2_125, %c1_126, %c0_127] : memref<18x18x20xf32, #tpu.memory_space<vmem>>, vector<16x16x20xf32>
    %110 = vector.shape_cast %109 : vector<16x16x20xf32> to vector<256x20xf32>
    %c2_128 = arith.constant 2 : index
    %c2_129 = arith.constant 2 : index
    %c0_130 = arith.constant 0 : index
    %111 = vector.load %arg10[%c2_128, %c2_129, %c0_130] : memref<18x18x20xf32, #tpu.memory_space<vmem>>, vector<16x16x20xf32>
    %112 = vector.shape_cast %111 : vector<16x16x20xf32> to vector<256x20xf32>
    %113 = tpu.concatenate %96, %98, %100, %102, %104, %106, %108, %110, %112 in 1 : vector<256x20xf32>, vector<256x20xf32>, vector<256x20xf32>, vector<256x20xf32>, vector<256x20xf32>, vector<256x20xf32>, vector<256x20xf32>, vector<256x20xf32>, vector<256x20xf32> -> vector<256x180xf32>
    %c0_131 = arith.constant 0 : index
    %c0_132 = arith.constant 0 : index
    %114 = vector.load %arg7[%c0_131, %c0_132] : memref<180x128xf32, #tpu.memory_space<vmem>>, vector<180x128xf32>
    %cst_133 = arith.constant dense<0.000000e+00> : vector<256x128xf32>
    %115 = tpu.matmul %113, %114, %cst_133 {dimension_numbers = #tpu.dot_dimension_numbers<[1], [0], [0], [1], [0, 0, 1, 1], [], []>} : vector<256x180xf32>, vector<180x128xf32>, vector<256x128xf32> -> vector<256x128xf32>
    %c0_134 = arith.constant 0 : index
    %c0_135 = arith.constant 0 : index
    %c0_136 = arith.constant 0 : index
    %116 = vector.load %arg8[%c0_134, %c0_135, %c0_136] : memref<1x256x128xf32, #tpu.memory_space<vmem>>, vector<1x256x128xf32>
    %117 = vector.shape_cast %116 : vector<1x256x128xf32> to vector<256x128xf32>
    %118 = vector.shape_cast %115 : vector<256x128xf32> to vector<1x256x128xf32>
    tpu.vector_store %arg8[%c0_134, %c0_135, %c0_136], %118 {strides = array<i32>} : memref<1x256x128xf32, #tpu.memory_space<vmem>>, vector<1x256x128xf32>,
    return
  }
  func.func @transform_0(%arg0: i32) -> (i32, i32, i32, i32) {
    %c0_i32 = arith.constant 0 : i32
    %c0_i32_0 = arith.constant 0 : i32
    %c0_i32_1 = arith.constant 0 : i32
    %c0_i32_2 = arith.constant 0 : i32
    return %arg0, %c0_i32, %c0_i32_0, %c0_i32_1 : i32, i32, i32, i32
  }
  func.func @transform_1(%arg0: i32) -> (i32, i32) {
    %c0_i32 = arith.constant 0 : i32
    %c0_i32_0 = arith.constant 0 : i32
    %c0_i32_1 = arith.constant 0 : i32
    return %c0_i32, %c0_i32_0 : i32, i32
  }
  func.func @transform_2(%arg0: i32) -> (i32, i32) {
    %c0_i32 = arith.constant 0 : i32
    %c0_i32_0 = arith.constant 0 : i32
    %c0_i32_1 = arith.constant 0 : i32
    return %c0_i32, %c0_i32_0 : i32, i32
  }
  func.func @transform_3(%arg0: i32) -> (i32, i32) {
    %c0_i32 = arith.constant 0 : i32
    %c0_i32_0 = arith.constant 0 : i32
    %c0_i32_1 = arith.constant 0 : i32
    return %c0_i32, %c0_i32_0 : i32, i32
  }
  func.func @transform_4(%arg0: i32) -> (i32, i32) {
    %c0_i32 = arith.constant 0 : i32
    %c0_i32_0 = arith.constant 0 : i32
    %c0_i32_1 = arith.constant 0 : i32
    return %c0_i32, %c0_i32_0 : i32, i32
  }
  func.func @transform_5(%arg0: i32) -> (i32, i32) {
    %c0_i32 = arith.constant 0 : i32
    %c0_i32_0 = arith.constant 0 : i32
    %c0_i32_1 = arith.constant 0 : i32
    return %c0_i32, %c0_i32_0 : i32, i32
  }
  func.func @transform_6(%arg0: i32) -> (i32, i32) {
    %c0_i32 = arith.constant 0 : i32
    %c0_i32_0 = arith.constant 0 : i32
    %c0_i32_1 = arith.constant 0 : i32
    return %c0_i32, %c0_i32_0 : i32, i32
  }
  func.func @transform_7(%arg0: i32) -> (i32, i32, i32) {
    %c0_i32 = arith.constant 0 : i32
    %c0_i32_0 = arith.constant 0 : i32
    %c0_i32_1 = arith.constant 0 : i32
    return %arg0, %c0_i32, %c0_i32_0 : i32, i32, i32
  }
}

</mosaic_0001>

<llo_original>
// kernel: dense_block_forward.1
$region0: #{dense_block_forward.1}
  #allocation0 [shape = 'u32[]', space=smem, size = 0x4, offset = 0x4, fixed_abs, tag = 'smem constant byte address 0x4 - core index']
  #allocation1 [shape = 'u32[144,128]{1,0:T(1,128)}', space=vmem, size = 0x12000, scoped, tag = 'internal scratch']
  #allocation2 [shape = 'f32[16,16,20]{2,1,0:T(8,128)}', space=vmem, size = 0x20000, scoped, tag = 'scratch operand']
  #allocation3 [shape = 'f32[18,18,20]{2,1,0:T(8,128)}', space=vmem, size = 0x36000, scoped, tag = 'scratch operand']
  %s0 = inlined_call_operand.vmem [shape: f32[2,16,16,4], index: 0, kind: input, shape index: {}]
  %s1 = inlined_call_operand.vmem [shape: f32[2,4], index: 1, kind: input, shape index: {}]
  %s2 = inlined_call_operand.vmem [shape: f32[36,128], index: 2, kind: input, shape index: {}]
  %s3 = inlined_call_operand.vmem [shape: f32[2,12], index: 3, kind: input, shape index: {}]
  %s4 = inlined_call_operand.vmem [shape: f32[108,128], index: 4, kind: input, shape index: {}]
  %s5 = inlined_call_operand.vmem [shape: f32[2,20], index: 5, kind: input, shape index: {}]
  %s6 = inlined_call_operand.vmem [shape: f32[180,128], index: 6, kind: input, shape index: {}]
  %s7 = inlined_call_operand.vmem [shape: f32[2,256,128], index: 7, kind: output, shape index: {}]
  %s8 = sld [smem:[#allocation0]]
  $region61: #{dense_block_forward.1} parent=0
    _
  %s10 = ssub.s32 1, %s8
  %s11 = scalar_select 0, %s10, %s8
  loop: start=0, step=1, limit=4
  $region2: #{dense_block_forward.1} parent=0 // loop_pre_header
    _
  $region3: #{dense_block_forward.1} parent=0 // loop_header
    %s13 = sphi 0, %s17
    %p14 = scmp.ge.s32.totalorder %s13, 4
    %s23 = sphi 0, %s25
    %s26 = sphi 0, %s23
    %s27 = sphi 0, %s26
    %s43 = sphi 0, %s27
    %s47 = sphi 0, %s47
    %s49 = sphi 0, %s47
    %s50 = sphi 0, %s49
    %s64 = sphi 0, %s50
    %s68 = sphi 0, %s68
    %s70 = sphi 0, %s68
    %s71 = sphi 0, %s70
    %s85 = sphi 0, %s71
    %s89 = sphi 0, %s89
    %s91 = sphi 0, %s89
    %s92 = sphi 0, %s91
    %s106 = sphi 0, %s92
    %s110 = sphi 0, %s110
    %s112 = sphi 0, %s110
    %s113 = sphi 0, %s112
    %s127 = sphi 0, %s113
    %s131 = sphi 0, %s131
    %s133 = sphi 0, %s131
    %s134 = sphi 0, %s133
    %s148 = sphi 0, %s134
    %s152 = sphi 0, %s152
    %s154 = sphi 0, %s152
    %s155 = sphi 0, %s154
    %s169 = sphi 0, %s155
    %s175 = sphi 0, %s177
    %s178 = sphi 0, %s175
    %s179 = sphi 0, %s178
    %s195 = sphi 0, %s179
  $region4: #{dense_block_forward.1} parent=0 // loop_header_branch
    %16 = sbr.rel (%p14) target = $region8
  $region5: #{dense_block_forward.1} parent=0 // loop_body
    %s18 = ssub.s32 %s13, 1
    %s19 = ssub.s32 %s13, 2
    %s20 = sadd.s32 %s13, 1
    %s21 = ssub.s32 %s13, %s20
    %p22 = scmp.eq.s32.totalorder %s21, 0
    %s24 = sadd.s32 %s23, 1
    %s25 = scalar_select %p22, %s23, %s24
    %p28 = pneg %p22
    %p29 = scmp.eq.s32.totalorder %s13, 1
    %p30 = por %p28, %p29
    %p31 = scmp.ne.s32.totalorder %s23, %s26
    %p32 = scmp.eq.s32.totalorder %s13, 0
    %p33 = por %p31, %p32
    %p34 = scmp.ne.s32.totalorder %s23, %s26
    %p35 = scmp.eq.s32.totalorder %s18, 1
    %p36 = por %p34, %p35
    %p37 = scmp.ne.s32.totalorder %s26, %s27
    %p38 = scmp.eq.s32.totalorder %s18, 0
    %p39 = por %p37, %p38
    %p40 = scmp.ne.s32.totalorder %s26, %s27
    %p41 = scmp.eq.s32.totalorder %s19, 1
    %p42 = por %p40, %p41
    %p44 = scmp.ne.s32.totalorder %s27, %s43
    %p45 = scmp.eq.s32.totalorder %s19, 0
    %p46 = por %p44, %p45
    %s48 = sadd.s32 %s47, 1
    %p51 = scmp.eq.s32.totalorder %s13, 1
    %p52 = scmp.ne.s32.totalorder %s47, %s49
    %p53 = scmp.eq.s32.totalorder %s13, 0
    %p54 = por %p52, %p53
    %p55 = scmp.ne.s32.totalorder %s47, %s49
    %p56 = scmp.eq.s32.totalorder %s18, 1
    %p57 = por %p55, %p56
    %p58 = scmp.ne.s32.totalorder %s49, %s50
    %p59 = scmp.eq.s32.totalorder %s18, 0
    %p60 = por %p58, %p59
    %p61 = scmp.ne.s32.totalorder %s49, %s50
    %p62 = scmp.eq.s32.totalorder %s19, 1
    %p63 = por %p61, %p62
    %p65 = scmp.ne.s32.totalorder %s50, %s64
    %p66 = scmp.eq.s32.totalorder %s19, 0
    %p67 = por %p65, %p66
    %s69 = sadd.s32 %s68, 1
    %p72 = scmp.eq.s32.totalorder %s13, 1
    %p73 = scmp.ne.s32.totalorder %s68, %s70
    %p74 = scmp.eq.s32.totalorder %s13, 0
    %p75 = por %p73, %p74
    %p76 = scmp.ne.s32.totalorder %s68, %s70
    %p77 = scmp.eq.s32.totalorder %s18, 1
    %p78 = por %p76, %p77
    %p79 = scmp.ne.s32.totalorder %s70, %s71
    %p80 = scmp.eq.s32.totalorder %s18, 0
    %p81 = por %p79, %p80
    %p82 = scmp.ne.s32.totalorder %s70, %s71
    %p83 = scmp.eq.s32.totalorder %s19, 1
    %p84 = por %p82, %p83
    %p86 = scmp.ne.s32.totalorder %s71, %s85
    %p87 = scmp.eq.s32.totalorder %s19, 0
    %p88 = por %p86, %p87
    %s90 = sadd.s32 %s89, 1
    %p93 = scmp.eq.s32.totalorder %s13, 1
    %p94 = scmp.ne.s32.totalorder %s89, %s91
    %p95 = scmp.eq.s32.totalorder %s13, 0
    %p96 = por %p94, %p95
    %p97 = scmp.ne.s32.totalorder %s89, %s91
    %p98 = scmp.eq.s32.totalorder %s18, 1
    %p99 = por %p97, %p98
    %p100 = scmp.ne.s32.totalorder %s91, %s92
    %p101 = scmp.eq.s32.totalorder %s18, 0
    %p102 = por %p100, %p101
    %p103 = scmp.ne.s32.totalorder %s91, %s92
    %p104 = scmp.eq.s32.totalorder %s19, 1
    %p105 = por %p103, %p104
    %p107 = scmp.ne.s32.totalorder %s92, %s106
    %p108 = scmp.eq.s32.totalorder %s19, 0
    %p109 = por %p107, %p108
    %s111 = sadd.s32 %s110, 1
    %p114 = scmp.eq.s32.totalorder %s13, 1
    %p115 = scmp.ne.s32.totalorder %s110, %s112
    %p116 = scmp.eq.s32.totalorder %s13, 0
    %p117 = por %p115, %p116
    %p118 = scmp.ne.s32.totalorder %s110, %s112
    %p119 = scmp.eq.s32.totalorder %s18, 1
    %p120 = por %p118, %p119
    %p121 = scmp.ne.s32.totalorder %s112, %s113
    %p122 = scmp.eq.s32.totalorder %s18, 0
    %p123 = por %p121, %p122
    %p124 = scmp.ne.s32.totalorder %s112, %s113
    %p125 = scmp.eq.s32.totalorder %s19, 1
    %p126 = por %p124, %p125
    %p128 = scmp.ne.s32.totalorder %s113, %s127
    %p129 = scmp.eq.s32.totalorder %s19, 0
    %p130 = por %p128, %p129
    %s132 = sadd.s32 %s131, 1
    %p135 = scmp.eq.s32.totalorder %s13, 1
    %p136 = scmp.ne.s32.totalorder %s131, %s133
    %p137 = scmp.eq.s32.totalorder %s13, 0
    %p138 = por %p136, %p137
    %p139 = scmp.ne.s32.totalorder %s131, %s133
    %p140 = scmp.eq.s32.totalorder %s18, 1
    %p141 = por %p139, %p140
    %p142 = scmp.ne.s32.totalorder %s133, %s134
    %p143 = scmp.eq.s32.totalorder %s18, 0
    %p144 = por %p142, %p143
    %p145 = scmp.ne.s32.totalorder %s133, %s134
    %p146 = scmp.eq.s32.totalorder %s19, 1
    %p147 = por %p145, %p146
    %p149 = scmp.ne.s32.totalorder %s134, %s148
    %p150 = scmp.eq.s32.totalorder %s19, 0
    %p151 = por %p149, %p150
    %s153 = sadd.s32 %s152, 1
    %p156 = scmp.eq.s32.totalorder %s13, 1
    %p157 = scmp.ne.s32.totalorder %s152, %s154
    %p158 = scmp.eq.s32.totalorder %s13, 0
    %p159 = por %p157, %p158
    %p160 = scmp.ne.s32.totalorder %s152, %s154
    %p161 = scmp.eq.s32.totalorder %s18, 1
    %p162 = por %p160, %p161
    %p163 = scmp.ne.s32.totalorder %s154, %s155
    %p164 = scmp.eq.s32.totalorder %s18, 0
    %p165 = por %p163, %p164
    %p166 = scmp.ne.s32.totalorder %s154, %s155
    %p167 = scmp.eq.s32.totalorder %s19, 1
    %p168 = por %p166, %p167
    %p170 = scmp.ne.s32.totalorder %s155, %s169
    %p171 = scmp.eq.s32.totalorder %s19, 0
    %p172 = por %p170, %p171
    %s173 = ssub.s32 %s13, %s20
    %p174 = scmp.eq.s32.totalorder %s173, 0
    %s176 = sadd.s32 %s175, 1
    %s177 = scalar_select %p174, %s175, %s176
    %p180 = pneg %p174
    %p181 = scmp.eq.s32.totalorder %s13, 1
    %p182 = por %p180, %p181
    %p183 = scmp.ne.s32.totalorder %s175, %s178
    %p184 = scmp.eq.s32.totalorder %s13, 0
    %p185 = por %p183, %p184
    %p186 = scmp.ne.s32.totalorder %s175, %s178
    %p187 = scmp.eq.s32.totalorder %s18, 1
    %p188 = por %p186, %p187
    %p189 = scmp.ne.s32.totalorder %s178, %s179
    %p190 = scmp.eq.s32.totalorder %s18, 0
    %p191 = por %p189, %p190
    %p192 = scmp.ne.s32.totalorder %s178, %s179
    %p193 = scmp.eq.s32.totalorder %s19, 1
    %p194 = por %p192, %p193
    %p196 = scmp.ne.s32.totalorder %s179, %s195
    %p197 = scmp.eq.s32.totalorder %s19, 0
    %p198 = por %p196, %p197
    %p199 = scmp.le.s32.totalorder 1, %s13
    %p200 = scmp.lt.s32.totalorder %s13, 3
    %p201 = pnand %p199, %p200
    %p202 = pneg %p201
    // Predicated region
    $region9: #{dense_block_forward.1} parent=5 // pred_check
      _
    $region10: #{dense_block_forward.1} parent=5 // pred_check_branch
      %204 = sbr.rel (%p201) target = $region12
    $region11: #{dense_block_forward.1} parent=5 // pred_region
      %s205 = ssub.s32 %s13, 1
      // Predicated region
      $region13: #{dense_block_forward.1} parent=11 // pred_check
        %p206 = pneg %p60
      $region14: #{dense_block_forward.1} parent=11 // pred_check_branch
        %208 = sbr.rel (%p206) target = $region16
      $region15: #{dense_block_forward.1} parent=11 // pred_region
        _
      $region16: #{dense_block_forward.1} parent=11 // pred_fallthru
        _
      // Predicated region
      $region17: #{dense_block_forward.1} parent=11 // pred_check
        %p209 = pneg %p81
      $region18: #{dense_block_forward.1} parent=11 // pred_check_branch
        %211 = sbr.rel (%p209) target = $region20
      $region19: #{dense_block_forward.1} parent=11 // pred_region
        _
      $region20: #{dense_block_forward.1} parent=11 // pred_fallthru
        _
      // Predicated region
      $region21: #{dense_block_forward.1} parent=11 // pred_check
        %p212 = pneg %p102
      $region22: #{dense_block_forward.1} parent=11 // pred_check_branch
        %214 = sbr.rel (%p212) target = $region24
      $region23: #{dense_block_forward.1} parent=11 // pred_region
        _
      $region24: #{dense_block_forward.1} parent=11 // pred_fallthru
        _
      // Predicated region
      $region25: #{dense_block_forward.1} parent=11 // pred_check
        %p215 = pneg %p123
      $region26: #{dense_block_forward.1} parent=11 // pred_check_branch
        %217 = sbr.rel (%p215) target = $region28
      $region27: #{dense_block_forward.1} parent=11 // pred_region
        _
      $region28: #{dense_block_forward.1} parent=11 // pred_fallthru
        _
      // Predicated region
      $region29: #{dense_block_forward.1} parent=11 // pred_check
        %p218 = pneg %p144
      $region30: #{dense_block_forward.1} parent=11 // pred_check_branch
        %220 = sbr.rel (%p218) target = $region32
      $region31: #{dense_block_forward.1} parent=11 // pred_region
        _
      $region32: #{dense_block_forward.1} parent=11 // pred_fallthru
        _
      // Predicated region
      $region33: #{dense_block_forward.1} parent=11 // pred_check
        %p221 = pneg %p165
      $region34: #{dense_block_forward.1} parent=11 // pred_check_branch
        %223 = sbr.rel (%p221) target = $region36
      $region35: #{dense_block_forward.1} parent=11 // pred_region
        _
      $region36: #{dense_block_forward.1} parent=11 // pred_fallthru
        _
    $region12: #{dense_block_forward.1} parent=5 // pred_fallthru
      _
    %p224 = scmp.lt.s32.totalorder %s13, 2
    // Predicated region
    $region37: #{dense_block_forward.1} parent=5 // pred_check
      %p225 = pneg %p224
    $region38: #{dense_block_forward.1} parent=5 // pred_check_branch
      %227 = sbr.rel (%p225) target = $region40
    $region39: #{dense_block_forward.1} parent=5 // pred_region
      // Predicated region
      $region41: #{dense_block_forward.1} parent=39 // pred_check
        %p228 = pneg %p33
      $region42: #{dense_block_forward.1} parent=39 // pred_check_branch
        %230 = sbr.rel (%p228) target = $region44
      $region43: #{dense_block_forward.1} parent=39 // pred_region
        %p231 = scmp.lt.s32.totalorder %s13, 1
        %s232 = scalar_select %p231, %s13, 1
        %s233 = smul.addr %s232, 32
        %s234 = smul.addr %s233, 8
        %s235 = scalar_lea.vmem %s0, %s234
      $region44: #{dense_block_forward.1} parent=39 // pred_fallthru
        _
    $region40: #{dense_block_forward.1} parent=5 // pred_fallthru
      _
    %p236 = scmp.le.s32.totalorder 1, %s13
    %p237 = scmp.lt.s32.totalorder %s13, 3
    %p238 = pnand %p236, %p237
    %p239 = pneg %p238
    // Predicated region
    $region45: #{dense_block_forward.1} parent=5 // pred_check
      _
    $region46: #{dense_block_forward.1} parent=5 // pred_check_branch
      %241 = sbr.rel (%p238) target = $region48
    $region47: #{dense_block_forward.1} parent=5 // pred_region
      %s242 = ssub.s32 %s13, 1
      %p243 = scmp.lt.s32.totalorder %s18, 1
      %s244 = scalar_select %p243, %s18, 1
      %s245 = smul.addr %s244, 32
      %s246 = smul.addr %s245, 8
      %s247 = scalar_lea.vmem %s0, %s246
      %p248 = pneg %p39
      %p249 = pneg %p36
      %p250 = pneg %p60
      %p251 = pneg %p57
      %p252 = pneg %p81
      %p253 = pneg %p78
      %p254 = pneg %p102
      %p255 = pneg %p99
      %p256 = pneg %p123
      %p257 = pneg %p120
      %p258 = pneg %p144
      %p259 = pneg %p141
      %p260 = pneg %p165
      %p261 = pneg %p162
      %p262 = pneg %p191
      %p263 = pneg %p188
      %p264 = scmp.lt.s32.totalorder %s18, 1
      %s265 = scalar_select %p264, %s18, 1
      %s266 = smul.addr %s265, 32
      %s267 = smul.addr %s266, 8
      %s268 = scalar_lea.vmem %s7, %s267
      %p269 = scmp.lt.s32.totalorder %s18, 1
      %s270 = scalar_select %p269, %s18, 1
      %s271 = smul.addr %s270, 32
      %s272 = smul.addr %s271, 8
      %s273 = scalar_lea.vmem %s0, %s272
      %p274 = scmp.lt.s32.totalorder %s18, 1
      %s275 = scalar_select %p274, %s18, 1
      %s276 = smul.addr %s275, 32
      %s277 = smul.addr %s276, 8
      %s278 = scalar_lea.vmem %s7, %s277
      %vm279 = vcmask 162816
      %280 = vst.msk [vmem:[#allocation3] sm:$0xff] %vm279, 0.0
      %281 = vst.msk [vmem:[#allocation3 + $0x8] sm:$0xff] %vm279, 0.0
      %vm282 = vcmask 156672
      %283 = vst.msk [vmem:[#allocation3 + $0x10] sm:$0x3] %vm282, 0.0
      %284 = vst.msk [vmem:[#allocation3 + $0x18] sm:$0xff] %vm279, 0.0
      %285 = vst.msk [vmem:[#allocation3 + $0x20] sm:$0xff] %vm279, 0.0
      %286 = vst.msk [vmem:[#allocation3 + $0x28] sm:$0x3] %vm282, 0.0
      %287 = vst.msk [vmem:[#allocation3 + $0x30] sm:$0xff] %vm279, 0.0
      %288 = vst.msk [vmem:[#allocation3 + $0x38] sm:$0xff] %vm279, 0.0
      %289 = vst.msk [vmem:[#allocation3 + $0x40] sm:$0x3] %vm282, 0.0
      %290 = vst.msk [vmem:[#allocation3 + $0x48] sm:$0xff] %vm279, 0.0
      %291 = vst.msk [vmem:[#allocation3 + $0x50] sm:$0xff] %vm279, 0.0
      %292 = vst.msk [vmem:[#allocation3 + $0x58] sm:$0x3] %vm282, 0.0
      %293 = vst.msk [vmem:[#allocation3 + $0x60] sm:$0xff] %vm279, 0.0
      %294 = vst.msk [vmem:[#allocation3 + $0x68] sm:$0xff] %vm279, 0.0
      %295 = vst.msk [vmem:[#allocation3 + $0x70] sm:$0x3] %vm282, 0.0
      %296 = vst.msk [vmem:[#allocation3 + $0x78] sm:$0xff] %vm279, 0.0
      %297 = vst.msk [vmem:[#allocation3 + $0x80] sm:$0xff] %vm279, 0.0
      %298 = vst.msk [vmem:[#allocation3 + $0x88] sm:$0x3] %vm282, 0.0
      %299 = vst.msk [vmem:[#allocation3 + $0x90] sm:$0xff] %vm279, 0.0
      %300 = vst.msk [vmem:[#allocation3 + $0x98] sm:$0xff] %vm279, 0.0
      %301 = vst.msk [vmem:[#allocation3 + $0xa0] sm:$0x3] %vm282, 0.0
      %302 = vst.msk [vmem:[#allocation3 + $0xa8] sm:$0xff] %vm279, 0.0
      %303 = vst.msk [vmem:[#allocation3 + $0xb0] sm:$0xff] %vm279, 0.0
      %304 = vst.msk [vmem:[#allocation3 + $0xb8] sm:$0x3] %vm282, 0.0
      %305 = vst.msk [vmem:[#allocation3 + $0xc0] sm:$0xff] %vm279, 0.0
      %306 = vst.msk [vmem:[#allocation3 + $0xc8] sm:$0xff] %vm279, 0.0
      %307 = vst.msk [vmem:[#allocation3 + $0xd0] sm:$0x3] %vm282, 0.0
      %308 = vst.msk [vmem:[#allocation3 + $0xd8] sm:$0xff] %vm279, 0.0
      %309 = vst.msk [vmem:[#allocation3 + $0xe0] sm:$0xff] %vm279, 0.0
      %310 = vst.msk [vmem:[#allocation3 + $0xe8] sm:$0x3] %vm282, 0.0
      %311 = vst.msk [vmem:[#allocation3 + $0xf0] sm:$0xff] %vm279, 0.0
      %312 = vst.msk [vmem:[#allocation3 + $0xf8] sm:$0xff] %vm279, 0.0
      %313 = vst.msk [vmem:[#allocation3 + $0x100] sm:$0x3] %vm282, 0.0
      %314 = vst.msk [vmem:[#allocation3 + $0x108] sm:$0xff] %vm279, 0.0
      %315 = vst.msk [vmem:[#allocation3 + $0x110] sm:$0xff] %vm279, 0.0
      %316 = vst.msk [vmem:[#allocation3 + $0x118] sm:$0x3] %vm282, 0.0
      %317 = vst.msk [vmem:[#allocation3 + $0x120] sm:$0xff] %vm279, 0.0
      %318 = vst.msk [vmem:[#allocation3 + $0x128] sm:$0xff] %vm279, 0.0
      %319 = vst.msk [vmem:[#allocation3 + $0x130] sm:$0x3] %vm282, 0.0
      %320 = vst.msk [vmem:[#allocation3 + $0x138] sm:$0xff] %vm279, 0.0
      %321 = vst.msk [vmem:[#allocation3 + $0x140] sm:$0xff] %vm279, 0.0
      %322 = vst.msk [vmem:[#allocation3 + $0x148] sm:$0x3] %vm282, 0.0
      %323 = vst.msk [vmem:[#allocation3 + $0x150] sm:$0xff] %vm279, 0.0
      %324 = vst.msk [vmem:[#allocation3 + $0x158] sm:$0xff] %vm279, 0.0
      %325 = vst.msk [vmem:[#allocation3 + $0x160] sm:$0x3] %vm282, 0.0
      %326 = vst.msk [vmem:[#allocation3 + $0x168] sm:$0xff] %vm279, 0.0
      %327 = vst.msk [vmem:[#allocation3 + $0x170] sm:$0xff] %vm279, 0.0
      %328 = vst.msk [vmem:[#allocation3 + $0x178] sm:$0x3] %vm282, 0.0
      %329 = vst.msk [vmem:[#allocation3 + $0x180] sm:$0xff] %vm279, 0.0
      %330 = vst.msk [vmem:[#allocation3 + $0x188] sm:$0xff] %vm279, 0.0
      %331 = vst.msk [vmem:[#allocation3 + $0x190] sm:$0x3] %vm282, 0.0
      %332 = vst.msk [vmem:[#allocation3 + $0x198] sm:$0xff] %vm279, 0.0
      %333 = vst.msk [vmem:[#allocation3 + $0x1a0] sm:$0xff] %vm279, 0.0
      %334 = vst.msk [vmem:[#allocation3 + $0x1a8] sm:$0x3] %vm282, 0.0
      %v335 = vld [vmem:[%s273] sm:$0xff]
      %v336 = vld [vmem:[%s273 + $0x8] sm:$0xff]
      %v337 = vld [vmem:[%s273 + $0x10] sm:$0xff]
      %v338 = vld [vmem:[%s273 + $0x18] sm:$0xff]
      %v339 = vld [vmem:[%s273 + $0x20] sm:$0xff]
      %v340 = vld [vmem:[%s273 + $0x28] sm:$0xff]
      %v341 = vld [vmem:[%s273 + $0x30] sm:$0xff]
      %v342 = vld [vmem:[%s273 + $0x38] sm:$0xff]
      %v343 = vld [vmem:[%s273 + $0x40] sm:$0xff]
      %v344 = vld [vmem:[%s273 + $0x48] sm:$0xff]
      %v345 = vld [vmem:[%s273 + $0x50] sm:$0xff]
      %v346 = vld [vmem:[%s273 + $0x58] sm:$0xff]
      %v347 = vld [vmem:[%s273 + $0x60] sm:$0xff]
      %v348 = vld [vmem:[%s273 + $0x68] sm:$0xff]
      %v349 = vld [vmem:[%s273 + $0x70] sm:$0xff]
      %v350 = vld [vmem:[%s273 + $0x78] sm:$0xff]
      %v351 = vld [vmem:[%s273 + $0x80] sm:$0xff]
      %v352 = vld [vmem:[%s273 + $0x88] sm:$0xff]
      %v353 = vld [vmem:[%s273 + $0x90] sm:$0xff]
      %v354 = vld [vmem:[%s273 + $0x98] sm:$0xff]
      %v355 = vld [vmem:[%s273 + $0xa0] sm:$0xff]
      %v356 = vld [vmem:[%s273 + $0xa8] sm:$0xff]
      %v357 = vld [vmem:[%s273 + $0xb0] sm:$0xff]
      %v358 = vld [vmem:[%s273 + $0xb8] sm:$0xff]
      %v359 = vld [vmem:[%s273 + $0xc0] sm:$0xff]
      %v360 = vld [vmem:[%s273 + $0xc8] sm:$0xff]
      %v361 = vld [vmem:[%s273 + $0xd0] sm:$0xff]
      %v362 = vld [vmem:[%s273 + $0xd8] sm:$0xff]
      %v363 = vld [vmem:[%s273 + $0xe0] sm:$0xff]
      %v364 = vld [vmem:[%s273 + $0xe8] sm:$0xff]
      %v365 = vld [vmem:[%s273 + $0xf0] sm:$0xff]
      %v366 = vld [vmem:[%s273 + $0xf8] sm:$0xff]
      %vm367 = vcmask 31744
      %368 = vst.msk [vmem:[#allocation2] sm:$0xff] %vm367, %v335
      %369 = vst.msk [vmem:[#allocation2 + $0x8] sm:$0xff] %vm367, %v336
      %370 = vst.msk [vmem:[#allocation2 + $0x10] sm:$0xff] %vm367, %v337
      %371 = vst.msk [vmem:[#allocation2 + $0x18] sm:$0xff] %vm367, %v338
      %372 = vst.msk [vmem:[#allocation2 + $0x20] sm:$0xff] %vm367, %v339
      %373 = vst.msk [vmem:[#allocation2 + $0x28] sm:$0xff] %vm367, %v340
      %374 = vst.msk [vmem:[#allocation2 + $0x30] sm:$0xff] %vm367, %v341
      %375 = vst.msk [vmem:[#allocation2 + $0x38] sm:$0xff] %vm367, %v342
      %376 = vst.msk [vmem:[#allocation2 + $0x40] sm:$0xff] %vm367, %v343
      %377 = vst.msk [vmem:[#allocation2 + $0x48] sm:$0xff] %vm367, %v344
      %378 = vst.msk [vmem:[#allocation2 + $0x50] sm:$0xff] %vm367, %v345
      %379 = vst.msk [vmem:[#allocation2 + $0x58] sm:$0xff] %vm367, %v346
      %380 = vst.msk [vmem:[#allocation2 + $0x60] sm:$0xff] %vm367, %v347
      %381 = vst.msk [vmem:[#allocation2 + $0x68] sm:$0xff] %vm367, %v348
      %382 = vst.msk [vmem:[#allocation2 + $0x70] sm:$0xff] %vm367, %v349
      %383 = vst.msk [vmem:[#allocation2 + $0x78] sm:$0xff] %vm367, %v350
      %384 = vst.msk [vmem:[#allocation2 + $0x80] sm:$0xff] %vm367, %v351
      %385 = vst.msk [vmem:[#allocation2 + $0x88] sm:$0xff] %vm367, %v352
      %386 = vst.msk [vmem:[#allocation2 + $0x90] sm:$0xff] %vm367, %v353
      %387 = vst.msk [vmem:[#allocation2 + $0x98] sm:$0xff] %vm367, %v354
      %388 = vst.msk [vmem:[#allocation2 + $0xa0] sm:$0xff] %vm367, %v355
      %389 = vst.msk [vmem:[#allocation2 + $0xa8] sm:$0xff] %vm367, %v356
      %390 = vst.msk [vmem:[#allocation2 + $0xb0] sm:$0xff] %vm367, %v357
      %391 = vst.msk [vmem:[#allocation2 + $0xb8] sm:$0xff] %vm367, %v358
      %392 = vst.msk [vmem:[#allocation2 + $0xc0] sm:$0xff] %vm367, %v359
      %393 = vst.msk [vmem:[#allocation2 + $0xc8] sm:$0xff] %vm367, %v360
      %394 = vst.msk [vmem:[#allocation2 + $0xd0] sm:$0xff] %vm367, %v361
      %395 = vst.msk [vmem:[#allocation2 + $0xd8] sm:$0xff] %vm367, %v362
      %396 = vst.msk [vmem:[#allocation2 + $0xe0] sm:$0xff] %vm367, %v363
      %397 = vst.msk [vmem:[#allocation2 + $0xe8] sm:$0xff] %vm367, %v364
      %398 = vst.msk [vmem:[#allocation2 + $0xf0] sm:$0xff] %vm367, %v365
      %399 = vst.msk [vmem:[#allocation2 + $0xf8] sm:$0xff] %vm367, %v366
      %v400 = vld [vmem:[#allocation2] sm:$0xff]
      %v401 = vld [vmem:[#allocation2 + $0x8] sm:$0xff]
      %v402 = vld [vmem:[#allocation2 + $0x10] sm:$0xff]
      %v403 = vld [vmem:[#allocation2 + $0x18] sm:$0xff]
      %v404 = vld [vmem:[#allocation2 + $0x20] sm:$0xff]
      %v405 = vld [vmem:[#allocation2 + $0x28] sm:$0xff]
      %v406 = vld [vmem:[#allocation2 + $0x30] sm:$0xff]
      %v407 = vld [vmem:[#allocation2 + $0x38] sm:$0xff]
      %v408 = vld [vmem:[#allocation2 + $0x40] sm:$0xff]
      %v409 = vld [vmem:[#allocation2 + $0x48] sm:$0xff]
      %v410 = vld [vmem:[#allocation2 + $0x50] sm:$0xff]
      %v411 = vld [vmem:[#allocation2 + $0x58] sm:$0xff]
      %v412 = vld [vmem:[#allocation2 + $0x60] sm:$0xff]
      %v413 = vld [vmem:[#allocation2 + $0x68] sm:$0xff]
      %v414 = vld [vmem:[#allocation2 + $0x70] sm:$0xff]
      %v415 = vld [vmem:[#allocation2 + $0x78] sm:$0xff]
      %v416 = vld [vmem:[#allocation2 + $0x80] sm:$0xff]
      %v417 = vld [vmem:[#allocation2 + $0x88] sm:$0xff]
      %v418 = vld [vmem:[#allocation2 + $0x90] sm:$0xff]
      %v419 = vld [vmem:[#allocation2 + $0x98] sm:$0xff]
      %v420 = vld [vmem:[#allocation2 + $0xa0] sm:$0xff]
      %v421 = vld [vmem:[#allocation2 + $0xa8] sm:$0xff]
      %v422 = vld [vmem:[#allocation2 + $0xb0] sm:$0xff]
      %v423 = vld [vmem:[#allocation2 + $0xb8] sm:$0xff]
      %v424 = vld [vmem:[#allocation2 + $0xc0] sm:$0xff]
      %v425 = vld [vmem:[#allocation2 + $0xc8] sm:$0xff]
      %v426 = vld [vmem:[#allocation2 + $0xd0] sm:$0xff]
      %v427 = vld [vmem:[#allocation2 + $0xd8] sm:$0xff]
      %v428 = vld [vmem:[#allocation2 + $0xe0] sm:$0xff]
      %v429 = vld [vmem:[#allocation2 + $0xe8] sm:$0xff]
      %v430 = vld [vmem:[#allocation2 + $0xf0] sm:$0xff]
      %v431 = vld [vmem:[#allocation2 + $0xf8] sm:$0xff]
      %v432 = vld [vmem:[%s1] sm:$0x1]
      %v433 = vlaneseq
      %v434 = vshrl.u32 %v433, 7
      %v435 = vsub.s32 0, %v434
      %v436 = vrot.slane %v432, %v435
      %v437 = vmul.f32 %v400, %v436
      %v438 = vmul.f32 %v401, %v436
      %v439 = vmul.f32 %v402, %v436
      %v440 = vmul.f32 %v403, %v436
      %v441 = vmul.f32 %v404, %v436
      %v442 = vmul.f32 %v405, %v436
      %v443 = vmul.f32 %v406, %v436
      %v444 = vmul.f32 %v407, %v436
      %v445 = vmul.f32 %v408, %v436
      %v446 = vmul.f32 %v409, %v436
      %v447 = vmul.f32 %v410, %v436
      %v448 = vmul.f32 %v411, %v436
      %v449 = vmul.f32 %v412, %v436
      %v450 = vmul.f32 %v413, %v436
      %v451 = vmul.f32 %v414, %v436
      %v452 = vmul.f32 %v415, %v436
      %v453 = vmul.f32 %v416, %v436
      %v454 = vmul.f32 %v417, %v436
      %v455 = vmul.f32 %v418, %v436
      %v456 = vmul.f32 %v419, %v436
      %v457 = vmul.f32 %v420, %v436
      %v458 = vmul.f32 %v421, %v436
      %v459 = vmul.f32 %v422, %v436
      %v460 = vmul.f32 %v423, %v436
      %v461 = vmul.f32 %v424, %v436
      %v462 = vmul.f32 %v425, %v436
      %v463 = vmul.f32 %v426, %v436
      %v464 = vmul.f32 %v427, %v436
      %v465 = vmul.f32 %v428, %v436
      %v466 = vmul.f32 %v429, %v436
      %v467 = vmul.f32 %v430, %v436
      %v468 = vmul.f32 %v431, %v436
      %v469 = vld [vmem:[%s1 + $0x1] sm:$0x1]
      %v470 = vlaneseq
      %v471 = vshrl.u32 %v470, 7
      %v472 = vsub.s32 0, %v471
      %v473 = vrot.slane %v469, %v472
      %v474 = vadd.f32 %v437, %v473
      %v475 = vadd.f32 %v438, %v473
      %v476 = vadd.f32 %v439, %v473
      %v477 = vadd.f32 %v440, %v473
      %v478 = vadd.f32 %v441, %v473
      %v479 = vadd.f32 %v442, %v473
      %v480 = vadd.f32 %v443, %v473
      %v481 = vadd.f32 %v444, %v473
      %v482 = vadd.f32 %v445, %v473
      %v483 = vadd.f32 %v446, %v473
      %v484 = vadd.f32 %v447, %v473
      %v485 = vadd.f32 %v448, %v473
      %v486 = vadd.f32 %v449, %v473
      %v487 = vadd.f32 %v450, %v473
      %v488 = vadd.f32 %v451, %v473
      %v489 = vadd.f32 %v452, %v473
      %v490 = vadd.f32 %v453, %v473
      %v491 = vadd.f32 %v454, %v473
      %v492 = vadd.f32 %v455, %v473
      %v493 = vadd.f32 %v456, %v473
      %v494 = vadd.f32 %v457, %v473
      %v495 = vadd.f32 %v458, %v473
      %v496 = vadd.f32 %v459, %v473
      %v497 = vadd.f32 %v460, %v473
      %v498 = vadd.f32 %v461, %v473
      %v499 = vadd.f32 %v462, %v473
      %v500 = vadd.f32 %v463, %v473
      %v501 = vadd.f32 %v464, %v473
      %v502 = vadd.f32 %v465, %v473
      %v503 = vadd.f32 %v466, %v473
      %v504 = vadd.f32 %v467, %v473
      %v505 = vadd.f32 %v468, %v473
      %v506 = vmax.f32 %v474, 0.0
      %v507 = vmax.f32 %v475, 0.0
      %v508 = vmax.f32 %v476, 0.0
      %v509 = vmax.f32 %v477, 0.0
      %v510 = vmax.f32 %v478, 0.0
      %v511 = vmax.f32 %v479, 0.0
      %v512 = vmax.f32 %v480, 0.0
      %v513 = vmax.f32 %v481, 0.0
      %v514 = vmax.f32 %v482, 0.0
      %v515 = vmax.f32 %v483, 0.0
      %v516 = vmax.f32 %v484, 0.0
      %v517 = vmax.f32 %v485, 0.0
      %v518 = vmax.f32 %v486, 0.0
      %v519 = vmax.f32 %v487, 0.0
      %v520 = vmax.f32 %v488, 0.0
      %v521 = vmax.f32 %v489, 0.0
      %v522 = vmax.f32 %v490, 0.0
      %v523 = vmax.f32 %v491, 0.0
      %v524 = vmax.f32 %v492, 0.0
      %v525 = vmax.f32 %v493, 0.0
      %v526 = vmax.f32 %v494, 0.0
      %v527 = vmax.f32 %v495, 0.0
      %v528 = vmax.f32 %v496, 0.0
      %v529 = vmax.f32 %v497, 0.0
      %v530 = vmax.f32 %v498, 0.0
      %v531 = vmax.f32 %v499, 0.0
      %v532 = vmax.f32 %v500, 0.0
      %v533 = vmax.f32 %v501, 0.0
      %v534 = vmax.f32 %v502, 0.0
      %v535 = vmax.f32 %v503, 0.0
      %v536 = vmax.f32 %v504, 0.0
      %v537 = vmax.f32 %v505, 0.0
      %s538 = scalar_lea.vmem [#allocation3], 24
      %539 = vst.msk [vmem:[%s538 + $0x1] sm:$0xff] %vm367, %v506
      %540 = vst.msk [vmem:[%s538 + $0x9] sm:$0xff] %vm367, %v507
      %541 = vst.msk [vmem:[%s538 + $0x19] sm:$0xff] %vm367, %v508
      %542 = vst.msk [vmem:[%s538 + $0x21] sm:$0xff] %vm367, %v509
      %543 = vst.msk [vmem:[%s538 + $0x31] sm:$0xff] %vm367, %v510
      %544 = vst.msk [vmem:[%s538 + $0x39] sm:$0xff] %vm367, %v511
      %545 = vst.msk [vmem:[%s538 + $0x49] sm:$0xff] %vm367, %v512
      %546 = vst.msk [vmem:[%s538 + $0x51] sm:$0xff] %vm367, %v513
      %547 = vst.msk [vmem:[%s538 + $0x61] sm:$0xff] %vm367, %v514
      %548 = vst.msk [vmem:[%s538 + $0x69] sm:$0xff] %vm367, %v515
      %549 = vst.msk [vmem:[%s538 + $0x79] sm:$0xff] %vm367, %v516
      %550 = vst.msk [vmem:[%s538 + $0x81] sm:$0xff] %vm367, %v517
      %551 = vst.msk [vmem:[%s538 + $0x91] sm:$0xff] %vm367, %v518
      %552 = vst.msk [vmem:[%s538 + $0x99] sm:$0xff] %vm367, %v519
      %553 = vst.msk [vmem:[%s538 + $0xa9] sm:$0xff] %vm367, %v520
      %554 = vst.msk [vmem:[%s538 + $0xb1] sm:$0xff] %vm367, %v521
      %555 = vst.msk [vmem:[%s538 + $0xc1] sm:$0xff] %vm367, %v522
      %556 = vst.msk [vmem:[%s538 + $0xc9] sm:$0xff] %vm367, %v523
      %557 = vst.msk [vmem:[%s538 + $0xd9] sm:$0xff] %vm367, %v524
      %558 = vst.msk [vmem:[%s538 + $0xe1] sm:$0xff] %vm367, %v525
      %559 = vst.msk [vmem:[%s538 + $0xf1] sm:$0xff] %vm367, %v526
      %560 = vst.msk [vmem:[%s538 + $0xf9] sm:$0xff] %vm367, %v527
      %561 = vst.msk [vmem:[%s538 + $0x109] sm:$0xff] %vm367, %v528
      %562 = vst.msk [vmem:[%s538 + $0x111] sm:$0xff] %vm367, %v529
      %563 = vst.msk [vmem:[%s538 + $0x121] sm:$0xff] %vm367, %v530
      %564 = vst.msk [vmem:[%s538 + $0x129] sm:$0xff] %vm367, %v531
      %565 = vst.msk [vmem:[%s538 + $0x139] sm:$0xff] %vm367, %v532
      %566 = vst.msk [vmem:[%s538 + $0x141] sm:$0xff] %vm367, %v533
      %567 = vst.msk [vmem:[%s538 + $0x151] sm:$0xff] %vm367, %v534
      %568 = vst.msk [vmem:[%s538 + $0x159] sm:$0xff] %vm367, %v535
      %569 = vst.msk [vmem:[%s538 + $0x169] sm:$0xff] %vm367, %v536
      %570 = vst.msk [vmem:[%s538 + $0x171] sm:$0xff] %vm367, %v537
      %v571 = vld [vmem:[#allocation3] sm:$0xff]
      %v572 = vld [vmem:[#allocation3 + $0x8] sm:$0xff]
      %v573 = vld [vmem:[#allocation3 + $0x18] sm:$0xff]
      %v574 = vld [vmem:[#allocation3 + $0x20] sm:$0xff]
      %v575 = vld [vmem:[#allocation3 + $0x30] sm:$0xff]
      %v576 = vld [vmem:[#allocation3 + $0x38] sm:$0xff]
      %v577 = vld [vmem:[#allocation3 + $0x48] sm:$0xff]
      %v578 = vld [vmem:[#allocation3 + $0x50] sm:$0xff]
      %v579 = vld [vmem:[#allocation3 + $0x60] sm:$0xff]
      %v580 = vld [vmem:[#allocation3 + $0x68] sm:$0xff]
      %v581 = vld [vmem:[#allocation3 + $0x78] sm:$0xff]
      %v582 = vld [vmem:[#allocation3 + $0x80] sm:$0xff]
      %v583 = vld [vmem:[#allocation3 + $0x90] sm:$0xff]
      %v584 = vld [vmem:[#allocation3 + $0x98] sm:$0xff]
      %v585 = vld [vmem:[#allocation3 + $0xa8] sm:$0xff]
      %v586 = vld [vmem:[#allocation3 + $0xb0] sm:$0xff]
      %v587 = vld [vmem:[#allocation3 + $0xc0] sm:$0xff]
      %v588 = vld [vmem:[#allocation3 + $0xc8] sm:$0xff]
      %v589 = vld [vmem:[#allocation3 + $0xd8] sm:$0xff]
      %v590 = vld [vmem:[#allocation3 + $0xe0] sm:$0xff]
      %v591 = vld [vmem:[#allocation3 + $0xf0] sm:$0xff]
      %v592 = vld [vmem:[#allocation3 + $0xf8] sm:$0xff]
      %v593 = vld [vmem:[#allocation3 + $0x108] sm:$0xff]
      %v594 = vld [vmem:[#allocation3 + $0x110] sm:$0xff]
      %v595 = vld [vmem:[#allocation3 + $0x120] sm:$0xff]
      %v596 = vld [vmem:[#allocation3 + $0x128] sm:$0xff]
      %v597 = vld [vmem:[#allocation3 + $0x138] sm:$0xff]
      %v598 = vld [vmem:[#allocation3 + $0x140] sm:$0xff]
      %v599 = vld [vmem:[#allocation3 + $0x150] sm:$0xff]
      %v600 = vld [vmem:[#allocation3 + $0x158] sm:$0xff]
      %v601 = vld [vmem:[#allocation3 + $0x168] sm:$0xff]
      %v602 = vld [vmem:[#allocation3 + $0x170] sm:$0xff]
      %v603 = vld [vmem:[#allocation3 + $0x1] sm:$0xff]
      %v604 = vld [vmem:[#allocation3 + $0x9] sm:$0xff]
      %v605 = vld [vmem:[#allocation3 + $0x19] sm:$0xff]
      %v606 = vld [vmem:[#allocation3 + $0x21] sm:$0xff]
      %v607 = vld [vmem:[#allocation3 + $0x31] sm:$0xff]
      %v608 = vld [vmem:[#allocation3 + $0x39] sm:$0xff]
      %v609 = vld [vmem:[#allocation3 + $0x49] sm:$0xff]
      %v610 = vld [vmem:[#allocation3 + $0x51] sm:$0xff]
      %v611 = vld [vmem:[#allocation3 + $0x61] sm:$0xff]
      %v612 = vld [vmem:[#allocation3 + $0x69] sm:$0xff]
      %v613 = vld [vmem:[#allocation3 + $0x79] sm:$0xff]
      %v614 = vld [vmem:[#allocation3 + $0x81] sm:$0xff]
      %v615 = vld [vmem:[#allocation3 + $0x91] sm:$0xff]
      %v616 = vld [vmem:[#allocation3 + $0x99] sm:$0xff]
      %v617 = vld [vmem:[#allocation3 + $0xa9] sm:$0xff]
      %v618 = vld [vmem:[#allocation3 + $0xb1] sm:$0xff]
      %v619 = vld [vmem:[#allocation3 + $0xc1] sm:$0xff]
      %v620 = vld [vmem:[#allocation3 + $0xc9] sm:$0xff]
      %v621 = vld [vmem:[#allocation3 + $0xd9] sm:$0xff]
      %v622 = vld [vmem:[#allocation3 + $0xe1] sm:$0xff]
      %v623 = vld [vmem:[#allocation3 + $0xf1] sm:$0xff]
      %v624 = vld [vmem:[#allocation3 + $0xf9] sm:$0xff]
      %v625 = vld [vmem:[#allocation3 + $0x109] sm:$0xff]
      %v626 = vld [vmem:[#allocation3 + $0x111] sm:$0xff]
      %v627 = vld [vmem:[#allocation3 + $0x121] sm:$0xff]
      %v628 = vld [vmem:[#allocation3 + $0x129] sm:$0xff]
      %v629 = vld [vmem:[#allocation3 + $0x139] sm:$0xff]
      %v630 = vld [vmem:[#allocation3 + $0x141] sm:$0xff]
      %v631 = vld [vmem:[#allocation3 + $0x151] sm:$0xff]
      %v632 = vld [vmem:[#allocation3 + $0x159] sm:$0xff]
      %v633 = vld [vmem:[#allocation3 + $0x169] sm:$0xff]
      %v634 = vld [vmem:[#allocation3 + $0x171] sm:$0xff]
      %v635 = vld [vmem:[#allocation3 + $0x2] sm:$0xff]
      %v636 = vld [vmem:[#allocation3 + $0xa] sm:$0xff]
      %v637 = vld [vmem:[#allocation3 + $0x1a] sm:$0xff]
      %v638 = vld [vmem:[#allocation3 + $0x22] sm:$0xff]
      %v639 = vld [vmem:[#allocation3 + $0x32] sm:$0xff]
      %v640 = vld [vmem:[#allocation3 + $0x3a] sm:$0xff]
      %v641 = vld [vmem:[#allocation3 + $0x4a] sm:$0xff]
      %v642 = vld [vmem:[#allocation3 + $0x52] sm:$0xff]
      %v643 = vld [vmem:[#allocation3 + $0x62] sm:$0xff]
      %v644 = vld [vmem:[#allocation3 + $0x6a] sm:$0xff]
      %v645 = vld [vmem:[#allocation3 + $0x7a] sm:$0xff]
      %v646 = vld [vmem:[#allocation3 + $0x82] sm:$0xff]
      %v647 = vld [vmem:[#allocation3 + $0x92] sm:$0xff]
      %v648 = vld [vmem:[#allocation3 + $0x9a] sm:$0xff]
      %v649 = vld [vmem:[#allocation3 + $0xaa] sm:$0xff]
      %v650 = vld [vmem:[#allocation3 + $0xb2] sm:$0xff]
      %v651 = vld [vmem:[#allocation3 + $0xc2] sm:$0xff]
      %v652 = vld [vmem:[#allocation3 + $0xca] sm:$0xff]
      %v653 = vld [vmem:[#allocation3 + $0xda] sm:$0xff]
      %v654 = vld [vmem:[#allocation3 + $0xe2] sm:$0xff]
      %v655 = vld [vmem:[#allocation3 + $0xf2] sm:$0xff]
      %v656 = vld [vmem:[#allocation3 + $0xfa] sm:$0xff]
      %v657 = vld [vmem:[#allocation3 + $0x10a] sm:$0xff]
      %v658 = vld [vmem:[#allocation3 + $0x112] sm:$0xff]
      %v659 = vld [vmem:[#allocation3 + $0x122] sm:$0xff]
      %v660 = vld [vmem:[#allocation3 + $0x12a] sm:$0xff]
      %v661 = vld [vmem:[#allocation3 + $0x13a] sm:$0xff]
      %v662 = vld [vmem:[#allocation3 + $0x142] sm:$0xff]
      %v663 = vld [vmem:[#allocation3 + $0x152] sm:$0xff]
      %v664 = vld [vmem:[#allocation3 + $0x15a] sm:$0xff]
      %v665 = vld [vmem:[#allocation3 + $0x16a] sm:$0xff]
      %v666 = vld [vmem:[#allocation3 + $0x172] sm:$0xff]
      %v667 = vld [vmem:[%s538] sm:$0xff]
      %v668 = vld [vmem:[%s538 + $0x8] sm:$0xff]
      %v669 = vld [vmem:[%s538 + $0x18] sm:$0xff]
      %v670 = vld [vmem:[%s538 + $0x20] sm:$0xff]
      %v671 = vld [vmem:[%s538 + $0x30] sm:$0xff]
      %v672 = vld [vmem:[%s538 + $0x38] sm:$0xff]
      %v673 = vld [vmem:[%s538 + $0x48] sm:$0xff]
      %v674 = vld [vmem:[%s538 + $0x50] sm:$0xff]
      %v675 = vld [vmem:[%s538 + $0x60] sm:$0xff]
      %v676 = vld [vmem:[%s538 + $0x68] sm:$0xff]
      %v677 = vld [vmem:[%s538 + $0x78] sm:$0xff]
      %v678 = vld [vmem:[%s538 + $0x80] sm:$0xff]
      %v679 = vld [vmem:[%s538 + $0x90] sm:$0xff]
      %v680 = vld [vmem:[%s538 + $0x98] sm:$0xff]
      %v681 = vld [vmem:[%s538 + $0xa8] sm:$0xff]
      %v682 = vld [vmem:[%s538 + $0xb0] sm:$0xff]
      %v683 = vld [vmem:[%s538 + $0xc0] sm:$0xff]
      %v684 = vld [vmem:[%s538 + $0xc8] sm:$0xff]
      %v685 = vld [vmem:[%s538 + $0xd8] sm:$0xff]
      %v686 = vld [vmem:[%s538 + $0xe0] sm:$0xff]
      %v687 = vld [vmem:[%s538 + $0xf0] sm:$0xff]
      %v688 = vld [vmem:[%s538 + $0xf8] sm:$0xff]
      %v689 = vld [vmem:[%s538 + $0x108] sm:$0xff]
      %v690 = vld [vmem:[%s538 + $0x110] sm:$0xff]
      %v691 = vld [vmem:[%s538 + $0x120] sm:$0xff]
      %v692 = vld [vmem:[%s538 + $0x128] sm:$0xff]
      %v693 = vld [vmem:[%s538 + $0x138] sm:$0xff]
      %v694 = vld [vmem:[%s538 + $0x140] sm:$0xff]
      %v695 = vld [vmem:[%s538 + $0x150] sm:$0xff]
      %v696 = vld [vmem:[%s538 + $0x158] sm:$0xff]
      %v697 = vld [vmem:[%s538 + $0x168] sm:$0xff]
      %v698 = vld [vmem:[%s538 + $0x170] sm:$0xff]
      %v699 = vld [vmem:[%s538 + $0x1] sm:$0xff]
      %v700 = vld [vmem:[%s538 + $0x9] sm:$0xff]
      %v701 = vld [vmem:[%s538 + $0x19] sm:$0xff]
      %v702 = vld [vmem:[%s538 + $0x21] sm:$0xff]
      %v703 = vld [vmem:[%s538 + $0x31] sm:$0xff]
      %v704 = vld [vmem:[%s538 + $0x39] sm:$0xff]
      %v705 = vld [vmem:[%s538 + $0x49] sm:$0xff]
      %v706 = vld [vmem:[%s538 + $0x51] sm:$0xff]
      %v707 = vld [vmem:[%s538 + $0x61] sm:$0xff]
      %v708 = vld [vmem:[%s538 + $0x69] sm:$0xff]
      %v709 = vld [vmem:[%s538 + $0x79] sm:$0xff]
      %v710 = vld [vmem:[%s538 + $0x81] sm:$0xff]
      %v711 = vld [vmem:[%s538 + $0x91] sm:$0xff]
      %v712 = vld [vmem:[%s538 + $0x99] sm:$0xff]
      %v713 = vld [vmem:[%s538 + $0xa9] sm:$0xff]
      %v714 = vld [vmem:[%s538 + $0xb1] sm:$0xff]
      %v715 = vld [vmem:[%s538 + $0xc1] sm:$0xff]
      %v716 = vld [vmem:[%s538 + $0xc9] sm:$0xff]
      %v717 = vld [vmem:[%s538 + $0xd9] sm:$0xff]
      %v718 = vld [vmem:[%s538 + $0xe1] sm:$0xff]
      %v719 = vld [vmem:[%s538 + $0xf1] sm:$0xff]
      %v720 = vld [vmem:[%s538 + $0xf9] sm:$0xff]
      %v721 = vld [vmem:[%s538 + $0x109] sm:$0xff]
      %v722 = vld [vmem:[%s538 + $0x111] sm:$0xff]
      %v723 = vld [vmem:[%s538 + $0x121] sm:$0xff]
      %v724 = vld [vmem:[%s538 + $0x129] sm:$0xff]
      %v725 = vld [vmem:[%s538 + $0x139] sm:$0xff]
      %v726 = vld [vmem:[%s538 + $0x141] sm:$0xff]
      %v727 = vld [vmem:[%s538 + $0x151] sm:$0xff]
      %v728 = vld [vmem:[%s538 + $0x159] sm:$0xff]
      %v729 = vld [vmem:[%s538 + $0x169] sm:$0xff]
      %v730 = vld [vmem:[%s538 + $0x171] sm:$0xff]
      %v731 = vld [vmem:[%s538 + $0x2] sm:$0xff]
      %v732 = vld [vmem:[%s538 + $0xa] sm:$0xff]
      %v733 = vld [vmem:[%s538 + $0x1a] sm:$0xff]
      %v734 = vld [vmem:[%s538 + $0x22] sm:$0xff]
      %v735 = vld [vmem:[%s538 + $0x32] sm:$0xff]
      %v736 = vld [vmem:[%s538 + $0x3a] sm:$0xff]
      %v737 = vld [vmem:[%s538 + $0x4a] sm:$0xff]
      %v738 = vld [vmem:[%s538 + $0x52] sm:$0xff]
      %v739 = vld [vmem:[%s538 + $0x62] sm:$0xff]
      %v740 = vld [vmem:[%s538 + $0x6a] sm:$0xff]
      %v741 = vld [vmem:[%s538 + $0x7a] sm:$0xff]
      %v742 = vld [vmem:[%s538 + $0x82] sm:$0xff]
      %v743 = vld [vmem:[%s538 + $0x92] sm:$0xff]
      %v744 = vld [vmem:[%s538 + $0x9a] sm:$0xff]
      %v745 = vld [vmem:[%s538 + $0xaa] sm:$0xff]
      %v746 = vld [vmem:[%s538 + $0xb2] sm:$0xff]
      %v747 = vld [vmem:[%s538 + $0xc2] sm:$0xff]
      %v748 = vld [vmem:[%s538 + $0xca] sm:$0xff]
      %v749 = vld [vmem:[%s538 + $0xda] sm:$0xff]
      %v750 = vld [vmem:[%s538 + $0xe2] sm:$0xff]
      %v751 = vld [vmem:[%s538 + $0xf2] sm:$0xff]
      %v752 = vld [vmem:[%s538 + $0xfa] sm:$0xff]
      %v753 = vld [vmem:[%s538 + $0x10a] sm:$0xff]
      %v754 = vld [vmem:[%s538 + $0x112] sm:$0xff]
      %v755 = vld [vmem:[%s538 + $0x122] sm:$0xff]
      %v756 = vld [vmem:[%s538 + $0x12a] sm:$0xff]
      %v757 = vld [vmem:[%s538 + $0x13a] sm:$0xff]
      %v758 = vld [vmem:[%s538 + $0x142] sm:$0xff]
      %v759 = vld [vmem:[%s538 + $0x152] sm:$0xff]
      %v760 = vld [vmem:[%s538 + $0x15a] sm:$0xff]
      %v761 = vld [vmem:[%s538 + $0x16a] sm:$0xff]
      %v762 = vld [vmem:[%s538 + $0x172] sm:$0xff]
      %s763 = scalar_lea.vmem [#allocation3], 48
      %v764 = vld [vmem:[%s763] sm:$0xff]
      %v765 = vld [vmem:[%s763 + $0x8] sm:$0xff]
      %v766 = vld [vmem:[%s763 + $0x18] sm:$0xff]
      %v767 = vld [vmem:[%s763 + $0x20] sm:$0xff]
      %v768 = vld [vmem:[%s763 + $0x30] sm:$0xff]
      %v769 = vld [vmem:[%s763 + $0x38] sm:$0xff]
      %v770 = vld [vmem:[%s763 + $0x48] sm:$0xff]
      %v771 = vld [vmem:[%s763 + $0x50] sm:$0xff]
      %v772 = vld [vmem:[%s763 + $0x60] sm:$0xff]
      %v773 = vld [vmem:[%s763 + $0x68] sm:$0xff]
      %v774 = vld [vmem:[%s763 + $0x78] sm:$0xff]
      %v775 = vld [vmem:[%s763 + $0x80] sm:$0xff]
      %v776 = vld [vmem:[%s763 + $0x90] sm:$0xff]
      %v777 = vld [vmem:[%s763 + $0x98] sm:$0xff]
      %v778 = vld [vmem:[%s763 + $0xa8] sm:$0xff]
      %v779 = vld [vmem:[%s763 + $0xb0] sm:$0xff]
      %v780 = vld [vmem:[%s763 + $0xc0] sm:$0xff]
      %v781 = vld [vmem:[%s763 + $0xc8] sm:$0xff]
      %v782 = vld [vmem:[%s763 + $0xd8] sm:$0xff]
      %v783 = vld [vmem:[%s763 + $0xe0] sm:$0xff]
      %v784 = vld [vmem:[%s763 + $0xf0] sm:$0xff]
      %v785 = vld [vmem:[%s763 + $0xf8] sm:$0xff]
      %v786 = vld [vmem:[%s763 + $0x108] sm:$0xff]
      %v787 = vld [vmem:[%s763 + $0x110] sm:$0xff]
      %v788 = vld [vmem:[%s763 + $0x120] sm:$0xff]
      %v789 = vld [vmem:[%s763 + $0x128] sm:$0xff]
      %v790 = vld [vmem:[%s763 + $0x138] sm:$0xff]
      %v791 = vld [vmem:[%s763 + $0x140] sm:$0xff]
      %v792 = vld [vmem:[%s763 + $0x150] sm:$0xff]
      %v793 = vld [vmem:[%s763 + $0x158] sm:$0xff]
      %v794 = vld [vmem:[%s763 + $0x168] sm:$0xff]
      %v795 = vld [vmem:[%s763 + $0x170] sm:$0xff]
      %v796 = vld [vmem:[%s763 + $0x1] sm:$0xff]
      %v797 = vld [vmem:[%s763 + $0x9] sm:$0xff]
      %v798 = vld [vmem:[%s763 + $0x19] sm:$0xff]
      %v799 = vld [vmem:[%s763 + $0x21] sm:$0xff]
      %v800 = vld [vmem:[%s763 + $0x31] sm:$0xff]
      %v801 = vld [vmem:[%s763 + $0x39] sm:$0xff]
      %v802 = vld [vmem:[%s763 + $0x49] sm:$0xff]
      %v803 = vld [vmem:[%s763 + $0x51] sm:$0xff]
      %v804 = vld [vmem:[%s763 + $0x61] sm:$0xff]
      %v805 = vld [vmem:[%s763 + $0x69] sm:$0xff]
      %v806 = vld [vmem:[%s763 + $0x79] sm:$0xff]
      %v807 = vld [vmem:[%s763 + $0x81] sm:$0xff]
      %v808 = vld [vmem:[%s763 + $0x91] sm:$0xff]
      %v809 = vld [vmem:[%s763 + $0x99] sm:$0xff]
      %v810 = vld [vmem:[%s763 + $0xa9] sm:$0xff]
      %v811 = vld [vmem:[%s763 + $0xb1] sm:$0xff]
      %v812 = vld [vmem:[%s763 + $0xc1] sm:$0xff]
      %v813 = vld [vmem:[%s763 + $0xc9] sm:$0xff]
      %v814 = vld [vmem:[%s763 + $0xd9] sm:$0xff]
      %v815 = vld [vmem:[%s763 + $0xe1] sm:$0xff]
      %v816 = vld [vmem:[%s763 + $0xf1] sm:$0xff]
      %v817 = vld [vmem:[%s763 + $0xf9] sm:$0xff]
      %v818 = vld [vmem:[%s763 + $0x109] sm:$0xff]
      %v819 = vld [vmem:[%s763 + $0x111] sm:$0xff]
      %v820 = vld [vmem:[%s763 + $0x121] sm:$0xff]
      %v821 = vld [vmem:[%s763 + $0x129] sm:$0xff]
      %v822 = vld [vmem:[%s763 + $0x139] sm:$0xff]
      %v823 = vld [vmem:[%s763 + $0x141] sm:$0xff]
      %v824 = vld [vmem:[%s763 + $0x151] sm:$0xff]
      %v825 = vld [vmem:[%s763 + $0x159] sm:$0xff]
      %v826 = vld [vmem:[%s763 + $0x169] sm:$0xff]
      %v827 = vld [vmem:[%s763 + $0x171] sm:$0xff]
      %v828 = vld [vmem:[%s763 + $0x2] sm:$0xff]
      %v829 = vld [vmem:[%s763 + $0xa] sm:$0xff]
      %v830 = vld [vmem:[%s763 + $0x1a] sm:$0xff]
      %v831 = vld [vmem:[%s763 + $0x22] sm:$0xff]
      %v832 = vld [vmem:[%s763 + $0x32] sm:$0xff]
      %v833 = vld [vmem:[%s763 + $0x3a] sm:$0xff]
      %v834 = vld [vmem:[%s763 + $0x4a] sm:$0xff]
      %v835 = vld [vmem:[%s763 + $0x52] sm:$0xff]
      %v836 = vld [vmem:[%s763 + $0x62] sm:$0xff]
      %v837 = vld [vmem:[%s763 + $0x6a] sm:$0xff]
      %v838 = vld [vmem:[%s763 + $0x7a] sm:$0xff]
      %v839 = vld [vmem:[%s763 + $0x82] sm:$0xff]
      %v840 = vld [vmem:[%s763 + $0x92] sm:$0xff]
      %v841 = vld [vmem:[%s763 + $0x9a] sm:$0xff]
      %v842 = vld [vmem:[%s763 + $0xaa] sm:$0xff]
      %v843 = vld [vmem:[%s763 + $0xb2] sm:$0xff]
      %v844 = vld [vmem:[%s763 + $0xc2] sm:$0xff]
      %v845 = vld [vmem:[%s763 + $0xca] sm:$0xff]
      %v846 = vld [vmem:[%s763 + $0xda] sm:$0xff]
      %v847 = vld [vmem:[%s763 + $0xe2] sm:$0xff]
      %v848 = vld [vmem:[%s763 + $0xf2] sm:$0xff]
      %v849 = vld [vmem:[%s763 + $0xfa] sm:$0xff]
      %v850 = vld [vmem:[%s763 + $0x10a] sm:$0xff]
      %v851 = vld [vmem:[%s763 + $0x112] sm:$0xff]
      %v852 = vld [vmem:[%s763 + $0x122] sm:$0xff]
      %v853 = vld [vmem:[%s763 + $0x12a] sm:$0xff]
      %v854 = vld [vmem:[%s763 + $0x13a] sm:$0xff]
      %v855 = vld [vmem:[%s763 + $0x142] sm:$0xff]
      %v856 = vld [vmem:[%s763 + $0x152] sm:$0xff]
      %v857 = vld [vmem:[%s763 + $0x15a] sm:$0xff]
      %v858 = vld [vmem:[%s763 + $0x16a] sm:$0xff]
      %v859 = vld [vmem:[%s763 + $0x172] sm:$0xff]
      %892 = vrot.lane.b32.xlu0 %v603, 4
      %v893 = vpop.permute.xlu0 %892
      %894 = vrot.lane.b32.xlu0 %v604, 4
      %v895 = vpop.permute.xlu0 %894
      %896 = vrot.lane.b32.xlu0 %v605, 4
      %v897 = vpop.permute.xlu0 %896
      %898 = vrot.lane.b32.xlu0 %v606, 4
      %v899 = vpop.permute.xlu0 %898
      %900 = vrot.lane.b32.xlu0 %v607, 4
      %v901 = vpop.permute.xlu0 %900
      %902 = vrot.lane.b32.xlu0 %v608, 4
      %v903 = vpop.permute.xlu0 %902
      %904 = vrot.lane.b32.xlu0 %v609, 4
      %v905 = vpop.permute.xlu0 %904
      %906 = vrot.lane.b32.xlu0 %v610, 4
      %v907 = vpop.permute.xlu0 %906
      %908 = vrot.lane.b32.xlu0 %v611, 4
      %v909 = vpop.permute.xlu0 %908
      %910 = vrot.lane.b32.xlu0 %v612, 4
      %v911 = vpop.permute.xlu0 %910
      %912 = vrot.lane.b32.xlu0 %v613, 4
      %v913 = vpop.permute.xlu0 %912
      %914 = vrot.lane.b32.xlu0 %v614, 4
      %v915 = vpop.permute.xlu0 %914
      %916 = vrot.lane.b32.xlu0 %v615, 4
      %v917 = vpop.permute.xlu0 %916
      %918 = vrot.lane.b32.xlu0 %v616, 4
      %v919 = vpop.permute.xlu0 %918
      %920 = vrot.lane.b32.xlu0 %v617, 4
      %v921 = vpop.permute.xlu0 %920
      %922 = vrot.lane.b32.xlu0 %v618, 4
      %v923 = vpop.permute.xlu0 %922
      %924 = vrot.lane.b32.xlu0 %v619, 4
      %v925 = vpop.permute.xlu0 %924
      %926 = vrot.lane.b32.xlu0 %v620, 4
      %v927 = vpop.permute.xlu0 %926
      %928 = vrot.lane.b32.xlu0 %v621, 4
      %v929 = vpop.permute.xlu0 %928
      %930 = vrot.lane.b32.xlu0 %v622, 4
      %v931 = vpop.permute.xlu0 %930
      %932 = vrot.lane.b32.xlu0 %v623, 4
      %v933 = vpop.permute.xlu0 %932
      %934 = vrot.lane.b32.xlu0 %v624, 4
      %v935 = vpop.permute.xlu0 %934
      %936 = vrot.lane.b32.xlu0 %v625, 4
      %v937 = vpop.permute.xlu0 %936
      %938 = vrot.lane.b32.xlu0 %v626, 4
      %v939 = vpop.permute.xlu0 %938
      %940 = vrot.lane.b32.xlu0 %v627, 4
      %v941 = vpop.permute.xlu0 %940
      %942 = vrot.lane.b32.xlu0 %v628, 4
      %v943 = vpop.permute.xlu0 %942
      %944 = vrot.lane.b32.xlu0 %v629, 4
      %v945 = vpop.permute.xlu0 %944
      %946 = vrot.lane.b32.xlu0 %v630, 4
      %v947 = vpop.permute.xlu0 %946
      %948 = vrot.lane.b32.xlu0 %v631, 4
      %v949 = vpop.permute.xlu0 %948
      %950 = vrot.lane.b32.xlu0 %v632, 4
      %v951 = vpop.permute.xlu0 %950
      %952 = vrot.lane.b32.xlu0 %v633, 4
      %v953 = vpop.permute.xlu0 %952
      %954 = vrot.lane.b32.xlu0 %v634, 4
      %v955 = vpop.permute.xlu0 %954
      %1020 = vrot.lane.b32.xlu0 %v635, 8
      %v1021 = vpop.permute.xlu0 %1020
      %1022 = vrot.lane.b32.xlu0 %v636, 8
      %v1023 = vpop.permute.xlu0 %1022
      %1024 = vrot.lane.b32.xlu0 %v637, 8
      %v1025 = vpop.permute.xlu0 %1024
      %1026 = vrot.lane.b32.xlu0 %v638, 8
      %v1027 = vpop.permute.xlu0 %1026
      %1028 = vrot.lane.b32.xlu0 %v639, 8
      %v1029 = vpop.permute.xlu0 %1028
      %1030 = vrot.lane.b32.xlu0 %v640, 8
      %v1031 = vpop.permute.xlu0 %1030
      %1032 = vrot.lane.b32.xlu0 %v641, 8
      %v1033 = vpop.permute.xlu0 %1032
      %1034 = vrot.lane.b32.xlu0 %v642, 8
      %v1035 = vpop.permute.xlu0 %1034
      %1036 = vrot.lane.b32.xlu0 %v643, 8
      %v1037 = vpop.permute.xlu0 %1036
      %1038 = vrot.lane.b32.xlu0 %v644, 8
      %v1039 = vpop.permute.xlu0 %1038
      %1040 = vrot.lane.b32.xlu0 %v645, 8
      %v1041 = vpop.permute.xlu0 %1040
      %1042 = vrot.lane.b32.xlu0 %v646, 8
      %v1043 = vpop.permute.xlu0 %1042
      %1044 = vrot.lane.b32.xlu0 %v647, 8
      %v1045 = vpop.permute.xlu0 %1044
      %1046 = vrot.lane.b32.xlu0 %v648, 8
      %v1047 = vpop.permute.xlu0 %1046
      %1048 = vrot.lane.b32.xlu0 %v649, 8
      %v1049 = vpop.permute.xlu0 %1048
      %1050 = vrot.lane.b32.xlu0 %v650, 8
      %v1051 = vpop.permute.xlu0 %1050
      %1052 = vrot.lane.b32.xlu0 %v651, 8
      %v1053 = vpop.permute.xlu0 %1052
      %1054 = vrot.lane.b32.xlu0 %v652, 8
      %v1055 = vpop.permute.xlu0 %1054
      %1056 = vrot.lane.b32.xlu0 %v653, 8
      %v1057 = vpop.permute.xlu0 %1056
      %1058 = vrot.lane.b32.xlu0 %v654, 8
      %v1059 = vpop.permute.xlu0 %1058
      %1060 = vrot.lane.b32.xlu0 %v655, 8
      %v1061 = vpop.permute.xlu0 %1060
      %1062 = vrot.lane.b32.xlu0 %v656, 8
      %v1063 = vpop.permute.xlu0 %1062
      %1064 = vrot.lane.b32.xlu0 %v657, 8
      %v1065 = vpop.permute.xlu0 %1064
      %1066 = vrot.lane.b32.xlu0 %v658, 8
      %v1067 = vpop.permute.xlu0 %1066
      %1068 = vrot.lane.b32.xlu0 %v659, 8
      %v1069 = vpop.permute.xlu0 %1068
      %1070 = vrot.lane.b32.xlu0 %v660, 8
      %v1071 = vpop.permute.xlu0 %1070
      %1072 = vrot.lane.b32.xlu0 %v661, 8
      %v1073 = vpop.permute.xlu0 %1072
      %1074 = vrot.lane.b32.xlu0 %v662, 8
      %v1075 = vpop.permute.xlu0 %1074
      %1076 = vrot.lane.b32.xlu0 %v663, 8
      %v1077 = vpop.permute.xlu0 %1076
      %1078 = vrot.lane.b32.xlu0 %v664, 8
      %v1079 = vpop.permute.xlu0 %1078
      %1080 = vrot.lane.b32.xlu0 %v665, 8
      %v1081 = vpop.permute.xlu0 %1080
      %1082 = vrot.lane.b32.xlu0 %v666, 8
      %v1083 = vpop.permute.xlu0 %1082
      %1148 = vrot.lane.b32.xlu0 %v667, 12
      %v1149 = vpop.permute.xlu0 %1148
      %1150 = vrot.lane.b32.xlu0 %v668, 12
      %v1151 = vpop.permute.xlu0 %1150
      %1152 = vrot.lane.b32.xlu0 %v669, 12
      %v1153 = vpop.permute.xlu0 %1152
      %1154 = vrot.lane.b32.xlu0 %v670, 12
      %v1155 = vpop.permute.xlu0 %1154
      %1156 = vrot.lane.b32.xlu0 %v671, 12
      %v1157 = vpop.permute.xlu0 %1156
      %1158 = vrot.lane.b32.xlu0 %v672, 12
      %v1159 = vpop.permute.xlu0 %1158
      %1160 = vrot.lane.b32.xlu0 %v673, 12
      %v1161 = vpop.permute.xlu0 %1160
      %1162 = vrot.lane.b32.xlu0 %v674, 12
      %v1163 = vpop.permute.xlu0 %1162
      %1164 = vrot.lane.b32.xlu0 %v675, 12
      %v1165 = vpop.permute.xlu0 %1164
      %1166 = vrot.lane.b32.xlu0 %v676, 12
      %v1167 = vpop.permute.xlu0 %1166
      %1168 = vrot.lane.b32.xlu0 %v677, 12
      %v1169 = vpop.permute.xlu0 %1168
      %1170 = vrot.lane.b32.xlu0 %v678, 12
      %v1171 = vpop.permute.xlu0 %1170
      %1172 = vrot.lane.b32.xlu0 %v679, 12
      %v1173 = vpop.permute.xlu0 %1172
      %1174 = vrot.lane.b32.xlu0 %v680, 12
      %v1175 = vpop.permute.xlu0 %1174
      %1176 = vrot.lane.b32.xlu0 %v681, 12
      %v1177 = vpop.permute.xlu0 %1176
      %1178 = vrot.lane.b32.xlu0 %v682, 12
      %v1179 = vpop.permute.xlu0 %1178
      %1180 = vrot.lane.b32.xlu0 %v683, 12
      %v1181 = vpop.permute.xlu0 %1180
      %1182 = vrot.lane.b32.xlu0 %v684, 12
      %v1183 = vpop.permute.xlu0 %1182
      %1184 = vrot.lane.b32.xlu0 %v685, 12
      %v1185 = vpop.permute.xlu0 %1184
      %1186 = vrot.lane.b32.xlu0 %v686, 12
      %v1187 = vpop.permute.xlu0 %1186
      %1188 = vrot.lane.b32.xlu0 %v687, 12
      %v1189 = vpop.permute.xlu0 %1188
      %1190 = vrot.lane.b32.xlu0 %v688, 12
      %v1191 = vpop.permute.xlu0 %1190
      %1192 = vrot.lane.b32.xlu0 %v689, 12
      %v1193 = vpop.permute.xlu0 %1192
      %1194 = vrot.lane.b32.xlu0 %v690, 12
      %v1195 = vpop.permute.xlu0 %1194
      %1196 = vrot.lane.b32.xlu0 %v691, 12
      %v1197 = vpop.permute.xlu0 %1196
      %1198 = vrot.lane.b32.xlu0 %v692, 12
      %v1199 = vpop.permute.xlu0 %1198
      %1200 = vrot.lane.b32.xlu0 %v693, 12
      %v1201 = vpop.permute.xlu0 %1200
      %1202 = vrot.lane.b32.xlu0 %v694, 12
      %v1203 = vpop.permute.xlu0 %1202
      %1204 = vrot.lane.b32.xlu0 %v695, 12
      %v1205 = vpop.permute.xlu0 %1204
      %1206 = vrot.lane.b32.xlu0 %v696, 12
      %v1207 = vpop.permute.xlu0 %1206
      %1208 = vrot.lane.b32.xlu0 %v697, 12
      %v1209 = vpop.permute.xlu0 %1208
      %1210 = vrot.lane.b32.xlu0 %v698, 12
      %v1211 = vpop.permute.xlu0 %1210
      %1276 = vrot.lane.b32.xlu0 %v699, 16
      %v1277 = vpop.permute.xlu0 %1276
      %1278 = vrot.lane.b32.xlu0 %v700, 16
      %v1279 = vpop.permute.xlu0 %1278
      %1280 = vrot.lane.b32.xlu0 %v701, 16
      %v1281 = vpop.permute.xlu0 %1280
      %1282 = vrot.lane.b32.xlu0 %v702, 16
      %v1283 = vpop.permute.xlu0 %1282
      %1284 = vrot.lane.b32.xlu0 %v703, 16
      %v1285 = vpop.permute.xlu0 %1284
      %1286 = vrot.lane.b32.xlu0 %v704, 16
      %v1287 = vpop.permute.xlu0 %1286
      %1288 = vrot.lane.b32.xlu0 %v705, 16
      %v1289 = vpop.permute.xlu0 %1288
      %1290 = vrot.lane.b32.xlu0 %v706, 16
      %v1291 = vpop.permute.xlu0 %1290
      %1292 = vrot.lane.b32.xlu0 %v707, 16
      %v1293 = vpop.permute.xlu0 %1292
      %1294 = vrot.lane.b32.xlu0 %v708, 16
      %v1295 = vpop.permute.xlu0 %1294
      %1296 = vrot.lane.b32.xlu0 %v709, 16
      %v1297 = vpop.permute.xlu0 %1296
      %1298 = vrot.lane.b32.xlu0 %v710, 16
      %v1299 = vpop.permute.xlu0 %1298
      %1300 = vrot.lane.b32.xlu0 %v711, 16
      %v1301 = vpop.permute.xlu0 %1300
      %1302 = vrot.lane.b32.xlu0 %v712, 16
      %v1303 = vpop.permute.xlu0 %1302
      %1304 = vrot.lane.b32.xlu0 %v713, 16
      %v1305 = vpop.permute.xlu0 %1304
      %1306 = vrot.lane.b32.xlu0 %v714, 16
      %v1307 = vpop.permute.xlu0 %1306
      %1308 = vrot.lane.b32.xlu0 %v715, 16
      %v1309 = vpop.permute.xlu0 %1308
      %1310 = vrot.lane.b32.xlu0 %v716, 16
      %v1311 = vpop.permute.xlu0 %1310
      %1312 = vrot.lane.b32.xlu0 %v717, 16
      %v1313 = vpop.permute.xlu0 %1312
      %1314 = vrot.lane.b32.xlu0 %v718, 16
      %v1315 = vpop.permute.xlu0 %1314
      %1316 = vrot.lane.b32.xlu0 %v719, 16
      %v1317 = vpop.permute.xlu0 %1316
      %1318 = vrot.lane.b32.xlu0 %v720, 16
      %v1319 = vpop.permute.xlu0 %1318
      %1320 = vrot.lane.b32.xlu0 %v721, 16
      %v1321 = vpop.permute.xlu0 %1320
      %1322 = vrot.lane.b32.xlu0 %v722, 16
      %v1323 = vpop.permute.xlu0 %1322
      %1324 = vrot.lane.b32.xlu0 %v723, 16
      %v1325 = vpop.permute.xlu0 %1324
      %1326 = vrot.lane.b32.xlu0 %v724, 16
      %v1327 = vpop.permute.xlu0 %1326
      %1328 = vrot.lane.b32.xlu0 %v725, 16
      %v1329 = vpop.permute.xlu0 %1328
      %1330 = vrot.lane.b32.xlu0 %v726, 16
      %v1331 = vpop.permute.xlu0 %1330
      %1332 = vrot.lane.b32.xlu0 %v727, 16
      %v1333 = vpop.permute.xlu0 %1332
      %1334 = vrot.lane.b32.xlu0 %v728, 16
      %v1335 = vpop.permute.xlu0 %1334
      %1336 = vrot.lane.b32.xlu0 %v729, 16
      %v1337 = vpop.permute.xlu0 %1336
      %1338 = vrot.lane.b32.xlu0 %v730, 16
      %v1339 = vpop.permute.xlu0 %1338
      %1404 = vrot.lane.b32.xlu0 %v731, 20
      %v1405 = vpop.permute.xlu0 %1404
      %1406 = vrot.lane.b32.xlu0 %v732, 20
      %v1407 = vpop.permute.xlu0 %1406
      %1408 = vrot.lane.b32.xlu0 %v733, 20
      %v1409 = vpop.permute.xlu0 %1408
      %1410 = vrot.lane.b32.xlu0 %v734, 20
      %v1411 = vpop.permute.xlu0 %1410
      %1412 = vrot.lane.b32.xlu0 %v735, 20
      %v1413 = vpop.permute.xlu0 %1412
      %1414 = vrot.lane.b32.xlu0 %v736, 20
      %v1415 = vpop.permute.xlu0 %1414
      %1416 = vrot.lane.b32.xlu0 %v737, 20
      %v1417 = vpop.permute.xlu0 %1416
      %1418 = vrot.lane.b32.xlu0 %v738, 20
      %v1419 = vpop.permute.xlu0 %1418
      %1420 = vrot.lane.b32.xlu0 %v739, 20
      %v1421 = vpop.permute.xlu0 %1420
      %1422 = vrot.lane.b32.xlu0 %v740, 20
      %v1423 = vpop.permute.xlu0 %1422
      %1424 = vrot.lane.b32.xlu0 %v741, 20
      %v1425 = vpop.permute.xlu0 %1424
      %1426 = vrot.lane.b32.xlu0 %v742, 20
      %v1427 = vpop.permute.xlu0 %1426
      %1428 = vrot.lane.b32.xlu0 %v743, 20
      %v1429 = vpop.permute.xlu0 %1428
      %1430 = vrot.lane.b32.xlu0 %v744, 20
      %v1431 = vpop.permute.xlu0 %1430
      %1432 = vrot.lane.b32.xlu0 %v745, 20
      %v1433 = vpop.permute.xlu0 %1432
      %1434 = vrot.lane.b32.xlu0 %v746, 20
      %v1435 = vpop.permute.xlu0 %1434
      %1436 = vrot.lane.b32.xlu0 %v747, 20
      %v1437 = vpop.permute.xlu0 %1436
      %1438 = vrot.lane.b32.xlu0 %v748, 20
      %v1439 = vpop.permute.xlu0 %1438
      %1440 = vrot.lane.b32.xlu0 %v749, 20
      %v1441 = vpop.permute.xlu0 %1440
      %1442 = vrot.lane.b32.xlu0 %v750, 20
      %v1443 = vpop.permute.xlu0 %1442
      %1444 = vrot.lane.b32.xlu0 %v751, 20
      %v1445 = vpop.permute.xlu0 %1444
      %1446 = vrot.lane.b32.xlu0 %v752, 20
      %v1447 = vpop.permute.xlu0 %1446
      %1448 = vrot.lane.b32.xlu0 %v753, 20
      %v1449 = vpop.permute.xlu0 %1448
      %1450 = vrot.lane.b32.xlu0 %v754, 20
      %v1451 = vpop.permute.xlu0 %1450
      %1452 = vrot.lane.b32.xlu0 %v755, 20
      %v1453 = vpop.permute.xlu0 %1452
      %1454 = vrot.lane.b32.xlu0 %v756, 20
      %v1455 = vpop.permute.xlu0 %1454
      %1456 = vrot.lane.b32.xlu0 %v757, 20
      %v1457 = vpop.permute.xlu0 %1456
      %1458 = vrot.lane.b32.xlu0 %v758, 20
      %v1459 = vpop.permute.xlu0 %1458
      %1460 = vrot.lane.b32.xlu0 %v759, 20
      %v1461 = vpop.permute.xlu0 %1460
      %1462 = vrot.lane.b32.xlu0 %v760, 20
      %v1463 = vpop.permute.xlu0 %1462
      %1464 = vrot.lane.b32.xlu0 %v761, 20
      %v1465 = vpop.permute.xlu0 %1464
      %1466 = vrot.lane.b32.xlu0 %v762, 20
      %v1467 = vpop.permute.xlu0 %1466
      %1532 = vrot.lane.b32.xlu0 %v764, 24
      %v1533 = vpop.permute.xlu0 %1532
      %1534 = vrot.lane.b32.xlu0 %v765, 24
      %v1535 = vpop.permute.xlu0 %1534
      %1536 = vrot.lane.b32.xlu0 %v766, 24
      %v1537 = vpop.permute.xlu0 %1536
      %1538 = vrot.lane.b32.xlu0 %v767, 24
      %v1539 = vpop.permute.xlu0 %1538
      %1540 = vrot.lane.b32.xlu0 %v768, 24
      %v1541 = vpop.permute.xlu0 %1540
      %1542 = vrot.lane.b32.xlu0 %v769, 24
      %v1543 = vpop.permute.xlu0 %1542
      %1544 = vrot.lane.b32.xlu0 %v770, 24
      %v1545 = vpop.permute.xlu0 %1544
      %1546 = vrot.lane.b32.xlu0 %v771, 24
      %v1547 = vpop.permute.xlu0 %1546
      %1548 = vrot.lane.b32.xlu0 %v772, 24
      %v1549 = vpop.permute.xlu0 %1548
      %1550 = vrot.lane.b32.xlu0 %v773, 24
      %v1551 = vpop.permute.xlu0 %1550
      %1552 = vrot.lane.b32.xlu0 %v774, 24
      %v1553 = vpop.permute.xlu0 %1552
      %1554 = vrot.lane.b32.xlu0 %v775, 24
      %v1555 = vpop.permute.xlu0 %1554
      %1556 = vrot.lane.b32.xlu0 %v776, 24
      %v1557 = vpop.permute.xlu0 %1556
      %1558 = vrot.lane.b32.xlu0 %v777, 24
      %v1559 = vpop.permute.xlu0 %1558
      %1560 = vrot.lane.b32.xlu0 %v778, 24
      %v1561 = vpop.permute.xlu0 %1560
      %1562 = vrot.lane.b32.xlu0 %v779, 24
      %v1563 = vpop.permute.xlu0 %1562
      %1564 = vrot.lane.b32.xlu0 %v780, 24
      %v1565 = vpop.permute.xlu0 %1564
      %1566 = vrot.lane.b32.xlu0 %v781, 24
      %v1567 = vpop.permute.xlu0 %1566
      %1568 = vrot.lane.b32.xlu0 %v782, 24
      %v1569 = vpop.permute.xlu0 %1568
      %1570 = vrot.lane.b32.xlu0 %v783, 24
      %v1571 = vpop.permute.xlu0 %1570
      %1572 = vrot.lane.b32.xlu0 %v784, 24
      %v1573 = vpop.permute.xlu0 %1572
      %1574 = vrot.lane.b32.xlu0 %v785, 24
      %v1575 = vpop.permute.xlu0 %1574
      %1576 = vrot.lane.b32.xlu0 %v786, 24
      %v1577 = vpop.permute.xlu0 %1576
      %1578 = vrot.lane.b32.xlu0 %v787, 24
      %v1579 = vpop.permute.xlu0 %1578
      %1580 = vrot.lane.b32.xlu0 %v788, 24
      %v1581 = vpop.permute.xlu0 %1580
      %1582 = vrot.lane.b32.xlu0 %v789, 24
      %v1583 = vpop.permute.xlu0 %1582
      %1584 = vrot.lane.b32.xlu0 %v790, 24
      %v1585 = vpop.permute.xlu0 %1584
      %1586 = vrot.lane.b32.xlu0 %v791, 24
      %v1587 = vpop.permute.xlu0 %1586
      %1588 = vrot.lane.b32.xlu0 %v792, 24
      %v1589 = vpop.permute.xlu0 %1588
      %1590 = vrot.lane.b32.xlu0 %v793, 24
      %v1591 = vpop.permute.xlu0 %1590
      %1592 = vrot.lane.b32.xlu0 %v794, 24
      %v1593 = vpop.permute.xlu0 %1592
      %1594 = vrot.lane.b32.xlu0 %v795, 24
      %v1595 = vpop.permute.xlu0 %1594
      %1660 = vrot.lane.b32.xlu0 %v796, 28
      %v1661 = vpop.permute.xlu0 %1660
      %1662 = vrot.lane.b32.xlu0 %v797, 28
      %v1663 = vpop.permute.xlu0 %1662
      %1664 = vrot.lane.b32.xlu0 %v798, 28
      %v1665 = vpop.permute.xlu0 %1664
      %1666 = vrot.lane.b32.xlu0 %v799, 28
      %v1667 = vpop.permute.xlu0 %1666
      %1668 = vrot.lane.b32.xlu0 %v800, 28
      %v1669 = vpop.permute.xlu0 %1668
      %1670 = vrot.lane.b32.xlu0 %v801, 28
      %v1671 = vpop.permute.xlu0 %1670
      %1672 = vrot.lane.b32.xlu0 %v802, 28
      %v1673 = vpop.permute.xlu0 %1672
      %1674 = vrot.lane.b32.xlu0 %v803, 28
      %v1675 = vpop.permute.xlu0 %1674
      %1676 = vrot.lane.b32.xlu0 %v804, 28
      %v1677 = vpop.permute.xlu0 %1676
      %1678 = vrot.lane.b32.xlu0 %v805, 28
      %v1679 = vpop.permute.xlu0 %1678
      %1680 = vrot.lane.b32.xlu0 %v806, 28
      %v1681 = vpop.permute.xlu0 %1680
      %1682 = vrot.lane.b32.xlu0 %v807, 28
      %v1683 = vpop.permute.xlu0 %1682
      %1684 = vrot.lane.b32.xlu0 %v808, 28
      %v1685 = vpop.permute.xlu0 %1684
      %1686 = vrot.lane.b32.xlu0 %v809, 28
      %v1687 = vpop.permute.xlu0 %1686
      %1688 = vrot.lane.b32.xlu0 %v810, 28
      %v1689 = vpop.permute.xlu0 %1688
      %1690 = vrot.lane.b32.xlu0 %v811, 28
      %v1691 = vpop.permute.xlu0 %1690
      %1692 = vrot.lane.b32.xlu0 %v812, 28
      %v1693 = vpop.permute.xlu0 %1692
      %1694 = vrot.lane.b32.xlu0 %v813, 28
      %v1695 = vpop.permute.xlu0 %1694
      %1696 = vrot.lane.b32.xlu0 %v814, 28
      %v1697 = vpop.permute.xlu0 %1696
      %1698 = vrot.lane.b32.xlu0 %v815, 28
      %v1699 = vpop.permute.xlu0 %1698
      %1700 = vrot.lane.b32.xlu0 %v816, 28
      %v1701 = vpop.permute.xlu0 %1700
      %1702 = vrot.lane.b32.xlu0 %v817, 28
      %v1703 = vpop.permute.xlu0 %1702
      %1704 = vrot.lane.b32.xlu0 %v818, 28
      %v1705 = vpop.permute.xlu0 %1704
      %1706 = vrot.lane.b32.xlu0 %v819, 28
      %v1707 = vpop.permute.xlu0 %1706
      %1708 = vrot.lane.b32.xlu0 %v820, 28
      %v1709 = vpop.permute.xlu0 %1708
      %1710 = vrot.lane.b32.xlu0 %v821, 28
      %v1711 = vpop.permute.xlu0 %1710
      %1712 = vrot.lane.b32.xlu0 %v822, 28
      %v1713 = vpop.permute.xlu0 %1712
      %1714 = vrot.lane.b32.xlu0 %v823, 28
      %v1715 = vpop.permute.xlu0 %1714
      %1716 = vrot.lane.b32.xlu0 %v824, 28
      %v1717 = vpop.permute.xlu0 %1716
      %1718 = vrot.lane.b32.xlu0 %v825, 28
      %v1719 = vpop.permute.xlu0 %1718
      %1720 = vrot.lane.b32.xlu0 %v826, 28
      %v1721 = vpop.permute.xlu0 %1720
      %1722 = vrot.lane.b32.xlu0 %v827, 28
      %v1723 = vpop.permute.xlu0 %1722
      %1788 = vrot.lane.b32.xlu0 %v828, 32
      %v1789 = vpop.permute.xlu0 %1788
      %1790 = vrot.lane.b32.xlu0 %v829, 32
      %v1791 = vpop.permute.xlu0 %1790
      %1792 = vrot.lane.b32.xlu0 %v830, 32
      %v1793 = vpop.permute.xlu0 %1792
      %1794 = vrot.lane.b32.xlu0 %v831, 32
      %v1795 = vpop.permute.xlu0 %1794
      %1796 = vrot.lane.b32.xlu0 %v832, 32
      %v1797 = vpop.permute.xlu0 %1796
      %1798 = vrot.lane.b32.xlu0 %v833, 32
      %v1799 = vpop.permute.xlu0 %1798
      %1800 = vrot.lane.b32.xlu0 %v834, 32
      %v1801 = vpop.permute.xlu0 %1800
      %1802 = vrot.lane.b32.xlu0 %v835, 32
      %v1803 = vpop.permute.xlu0 %1802
      %1804 = vrot.lane.b32.xlu0 %v836, 32
      %v1805 = vpop.permute.xlu0 %1804
      %1806 = vrot.lane.b32.xlu0 %v837, 32
      %v1807 = vpop.permute.xlu0 %1806
      %1808 = vrot.lane.b32.xlu0 %v838, 32
      %v1809 = vpop.permute.xlu0 %1808
      %1810 = vrot.lane.b32.xlu0 %v839, 32
      %v1811 = vpop.permute.xlu0 %1810
      %1812 = vrot.lane.b32.xlu0 %v840, 32
      %v1813 = vpop.permute.xlu0 %1812
      %1814 = vrot.lane.b32.xlu0 %v841, 32
      %v1815 = vpop.permute.xlu0 %1814
      %1816 = vrot.lane.b32.xlu0 %v842, 32
      %v1817 = vpop.permute.xlu0 %1816
      %1818 = vrot.lane.b32.xlu0 %v843, 32
      %v1819 = vpop.permute.xlu0 %1818
      %1820 = vrot.lane.b32.xlu0 %v844, 32
      %v1821 = vpop.permute.xlu0 %1820
      %1822 = vrot.lane.b32.xlu0 %v845, 32
      %v1823 = vpop.permute.xlu0 %1822
      %1824 = vrot.lane.b32.xlu0 %v846, 32
      %v1825 = vpop.permute.xlu0 %1824
      %1826 = vrot.lane.b32.xlu0 %v847, 32
      %v1827 = vpop.permute.xlu0 %1826
      %1828 = vrot.lane.b32.xlu0 %v848, 32
      %v1829 = vpop.permute.xlu0 %1828
      %1830 = vrot.lane.b32.xlu0 %v849, 32
      %v1831 = vpop.permute.xlu0 %1830
      %1832 = vrot.lane.b32.xlu0 %v850, 32
      %v1833 = vpop.permute.xlu0 %1832
      %1834 = vrot.lane.b32.xlu0 %v851, 32
      %v1835 = vpop.permute.xlu0 %1834
      %1836 = vrot.lane.b32.xlu0 %v852, 32
      %v1837 = vpop.permute.xlu0 %1836
      %1838 = vrot.lane.b32.xlu0 %v853, 32
      %v1839 = vpop.permute.xlu0 %1838
      %1840 = vrot.lane.b32.xlu0 %v854, 32
      %v1841 = vpop.permute.xlu0 %1840
      %1842 = vrot.lane.b32.xlu0 %v855, 32
      %v1843 = vpop.permute.xlu0 %1842
      %1844 = vrot.lane.b32.xlu0 %v856, 32
      %v1845 = vpop.permute.xlu0 %1844
      %1846 = vrot.lane.b32.xlu0 %v857, 32
      %v1847 = vpop.permute.xlu0 %1846
      %1848 = vrot.lane.b32.xlu0 %v858, 32
      %v1849 = vpop.permute.xlu0 %1848
      %1850 = vrot.lane.b32.xlu0 %v859, 32
      %v1851 = vpop.permute.xlu0 %1850
      %v1884 = vsel %vm367, %v571, %v893
      %v1885 = vsel %vm367, %v572, %v895
      %v1886 = vsel %vm367, %v573, %v897
      %v1887 = vsel %vm367, %v574, %v899
      %v1888 = vsel %vm367, %v575, %v901
      %v1889 = vsel %vm367, %v576, %v903
      %v1890 = vsel %vm367, %v577, %v905
      %v1891 = vsel %vm367, %v578, %v907
      %v1892 = vsel %vm367, %v579, %v909
      %v1893 = vsel %vm367, %v580, %v911
      %v1894 = vsel %vm367, %v581, %v913
      %v1895 = vsel %vm367, %v582, %v915
      %v1896 = vsel %vm367, %v583, %v917
      %v1897 = vsel %vm367, %v584, %v919
      %v1898 = vsel %vm367, %v585, %v921
      %v1899 = vsel %vm367, %v586, %v923
      %v1900 = vsel %vm367, %v587, %v925
      %v1901 = vsel %vm367, %v588, %v927
      %v1902 = vsel %vm367, %v589, %v929
      %v1903 = vsel %vm367, %v590, %v931
      %v1904 = vsel %vm367, %v591, %v933
      %v1905 = vsel %vm367, %v592, %v935
      %v1906 = vsel %vm367, %v593, %v937
      %v1907 = vsel %vm367, %v594, %v939
      %v1908 = vsel %vm367, %v595, %v941
      %v1909 = vsel %vm367, %v596, %v943
      %v1910 = vsel %vm367, %v597, %v945
      %v1911 = vsel %vm367, %v598, %v947
      %v1912 = vsel %vm367, %v599, %v949
      %v1913 = vsel %vm367, %v600, %v951
      %v1914 = vsel %vm367, %v601, %v953
      %v1915 = vsel %vm367, %v602, %v955
      %vm1916 = vcmask 64512
      %v1917 = vsel %vm1916, %v1884, %v1021
      %v1918 = vsel %vm1916, %v1885, %v1023
      %v1919 = vsel %vm1916, %v1886, %v1025
      %v1920 = vsel %vm1916, %v1887, %v1027
      %v1921 = vsel %vm1916, %v1888, %v1029
      %v1922 = vsel %vm1916, %v1889, %v1031
      %v1923 = vsel %vm1916, %v1890, %v1033
      %v1924 = vsel %vm1916, %v1891, %v1035
      %v1925 = vsel %vm1916, %v1892, %v1037
      %v1926 = vsel %vm1916, %v1893, %v1039
      %v1927 = vsel %vm1916, %v1894, %v1041
      %v1928 = vsel %vm1916, %v1895, %v1043
      %v1929 = vsel %vm1916, %v1896, %v1045
      %v1930 = vsel %vm1916, %v1897, %v1047
      %v1931 = vsel %vm1916, %v1898, %v1049
      %v1932 = vsel %vm1916, %v1899, %v1051
      %v1933 = vsel %vm1916, %v1900, %v1053
      %v1934 = vsel %vm1916, %v1901, %v1055
      %v1935 = vsel %vm1916, %v1902, %v1057
      %v1936 = vsel %vm1916, %v1903, %v1059
      %v1937 = vsel %vm1916, %v1904, %v1061
      %v1938 = vsel %vm1916, %v1905, %v1063
      %v1939 = vsel %vm1916, %v1906, %v1065
      %v1940 = vsel %vm1916, %v1907, %v1067
      %v1941 = vsel %vm1916, %v1908, %v1069
      %v1942 = vsel %vm1916, %v1909, %v1071
      %v1943 = vsel %vm1916, %v1910, %v1073
      %v1944 = vsel %vm1916, %v1911, %v1075
      %v1945 = vsel %vm1916, %v1912, %v1077
      %v1946 = vsel %vm1916, %v1913, %v1079
      %v1947 = vsel %vm1916, %v1914, %v1081
      %v1948 = vsel %vm1916, %v1915, %v1083
      %vm1949 = vcmask 97280
      %v1950 = vsel %vm1949, %v1917, %v1149
      %v1951 = vsel %vm1949, %v1918, %v1151
      %v1952 = vsel %vm1949, %v1919, %v1153
      %v1953 = vsel %vm1949, %v1920, %v1155
      %v1954 = vsel %vm1949, %v1921, %v1157
      %v1955 = vsel %vm1949, %v1922, %v1159
      %v1956 = vsel %vm1949, %v1923, %v1161
      %v1957 = vsel %vm1949, %v1924, %v1163
      %v1958 = vsel %vm1949, %v1925, %v1165
      %v1959 = vsel %vm1949, %v1926, %v1167
      %v1960 = vsel %vm1949, %v1927, %v1169
      %v1961 = vsel %vm1949, %v1928, %v1171
      %v1962 = vsel %vm1949, %v1929, %v1173
      %v1963 = vsel %vm1949, %v1930, %v1175
      %v1964 = vsel %vm1949, %v1931, %v1177
      %v1965 = vsel %vm1949, %v1932, %v1179
      %v1966 = vsel %vm1949, %v1933, %v1181
      %v1967 = vsel %vm1949, %v1934, %v1183
      %v1968 = vsel %vm1949, %v1935, %v1185
      %v1969 = vsel %vm1949, %v1936, %v1187
      %v1970 = vsel %vm1949, %v1937, %v1189
      %v1971 = vsel %vm1949, %v1938, %v1191
      %v1972 = vsel %vm1949, %v1939, %v1193
      %v1973 = vsel %vm1949, %v1940, %v1195
      %v1974 = vsel %vm1949, %v1941, %v1197
      %v1975 = vsel %vm1949, %v1942, %v1199
      %v1976 = vsel %vm1949, %v1943, %v1201
      %v1977 = vsel %vm1949, %v1944, %v1203
      %v1978 = vsel %vm1949, %v1945, %v1205
      %v1979 = vsel %vm1949, %v1946, %v1207
      %v1980 = vsel %vm1949, %v1947, %v1209
      %v1981 = vsel %vm1949, %v1948, %v1211
      %vm1982 = vcmask 130048
      %v1983 = vsel %vm1982, %v1950, %v1277
      %v1984 = vsel %vm1982, %v1951, %v1279
      %v1985 = vsel %vm1982, %v1952, %v1281
      %v1986 = vsel %vm1982, %v1953, %v1283
      %v1987 = vsel %vm1982, %v1954, %v1285
      %v1988 = vsel %vm1982, %v1955, %v1287
      %v1989 = vsel %vm1982, %v1956, %v1289
      %v1990 = vsel %vm1982, %v1957, %v1291
      %v1991 = vsel %vm1982, %v1958, %v1293
      %v1992 = vsel %vm1982, %v1959, %v1295
      %v1993 = vsel %vm1982, %v1960, %v1297
      %v1994 = vsel %vm1982, %v1961, %v1299
      %v1995 = vsel %vm1982, %v1962, %v1301
      %v1996 = vsel %vm1982, %v1963, %v1303
      %v1997 = vsel %vm1982, %v1964, %v1305
      %v1998 = vsel %vm1982, %v1965, %v1307
      %v1999 = vsel %vm1982, %v1966, %v1309
      %v2000 = vsel %vm1982, %v1967, %v1311
      %v2001 = vsel %vm1982, %v1968, %v1313
      %v2002 = vsel %vm1982, %v1969, %v1315
      %v2003 = vsel %vm1982, %v1970, %v1317
      %v2004 = vsel %vm1982, %v1971, %v1319
      %v2005 = vsel %vm1982, %v1972, %v1321
      %v2006 = vsel %vm1982, %v1973, %v1323
      %v2007 = vsel %vm1982, %v1974, %v1325
      %v2008 = vsel %vm1982, %v1975, %v1327
      %v2009 = vsel %vm1982, %v1976, %v1329
      %v2010 = vsel %vm1982, %v1977, %v1331
      %v2011 = vsel %vm1982, %v1978, %v1333
      %v2012 = vsel %vm1982, %v1979, %v1335
      %v2013 = vsel %vm1982, %v1980, %v1337
      %v2014 = vsel %vm1982, %v1981, %v1339
      %v2015 = vsel %vm279, %v1983, %v1405
      %v2016 = vsel %vm279, %v1984, %v1407
      %v2017 = vsel %vm279, %v1985, %v1409
      %v2018 = vsel %vm279, %v1986, %v1411
      %v2019 = vsel %vm279, %v1987, %v1413
      %v2020 = vsel %vm279, %v1988, %v1415
      %v2021 = vsel %vm279, %v1989, %v1417
      %v2022 = vsel %vm279, %v1990, %v1419
      %v2023 = vsel %vm279, %v1991, %v1421
      %v2024 = vsel %vm279, %v1992, %v1423
      %v2025 = vsel %vm279, %v1993, %v1425
      %v2026 = vsel %vm279, %v1994, %v1427
      %v2027 = vsel %vm279, %v1995, %v1429
      %v2028 = vsel %vm279, %v1996, %v1431
      %v2029 = vsel %vm279, %v1997, %v1433
      %v2030 = vsel %vm279, %v1998, %v1435
      %v2031 = vsel %vm279, %v1999, %v1437
      %v2032 = vsel %vm279, %v2000, %v1439
      %v2033 = vsel %vm279, %v2001, %v1441
      %v2034 = vsel %vm279, %v2002, %v1443
      %v2035 = vsel %vm279, %v2003, %v1445
      %v2036 = vsel %vm279, %v2004, %v1447
      %v2037 = vsel %vm279, %v2005, %v1449
      %v2038 = vsel %vm279, %v2006, %v1451
      %v2039 = vsel %vm279, %v2007, %v1453
      %v2040 = vsel %vm279, %v2008, %v1455
      %v2041 = vsel %vm279, %v2009, %v1457
      %v2042 = vsel %vm279, %v2010, %v1459
      %v2043 = vsel %vm279, %v2011, %v1461
      %v2044 = vsel %vm279, %v2012, %v1463
      %v2045 = vsel %vm279, %v2013, %v1465
      %v2046 = vsel %vm279, %v2014, %v1467
      %vm2047 = vcmask 195584
      %v2048 = vsel %vm2047, %v2015, %v1533
      %v2049 = vsel %vm2047, %v2016, %v1535
      %v2050 = vsel %vm2047, %v2017, %v1537
      %v2051 = vsel %vm2047, %v2018, %v1539
      %v2052 = vsel %vm2047, %v2019, %v1541
      %v2053 = vsel %vm2047, %v2020, %v1543
      %v2054 = vsel %vm2047, %v2021, %v1545
      %v2055 = vsel %vm2047, %v2022, %v1547
      %v2056 = vsel %vm2047, %v2023, %v1549
      %v2057 = vsel %vm2047, %v2024, %v1551
      %v2058 = vsel %vm2047, %v2025, %v1553
      %v2059 = vsel %vm2047, %v2026, %v1555
      %v2060 = vsel %vm2047, %v2027, %v1557
      %v2061 = vsel %vm2047, %v2028, %v1559
      %v2062 = vsel %vm2047, %v2029, %v1561
      %v2063 = vsel %vm2047, %v2030, %v1563
      %v2064 = vsel %vm2047, %v2031, %v1565
      %v2065 = vsel %vm2047, %v2032, %v1567
      %v2066 = vsel %vm2047, %v2033, %v1569
      %v2067 = vsel %vm2047, %v2034, %v1571
      %v2068 = vsel %vm2047, %v2035, %v1573
      %v2069 = vsel %vm2047, %v2036, %v1575
      %v2070 = vsel %vm2047, %v2037, %v1577
      %v2071 = vsel %vm2047, %v2038, %v1579
      %v2072 = vsel %vm2047, %v2039, %v1581
      %v2073 = vsel %vm2047, %v2040, %v1583
      %v2074 = vsel %vm2047, %v2041, %v1585
      %v2075 = vsel %vm2047, %v2042, %v1587
      %v2076 = vsel %vm2047, %v2043, %v1589
      %v2077 = vsel %vm2047, %v2044, %v1591
      %v2078 = vsel %vm2047, %v2045, %v1593
      %v2079 = vsel %vm2047, %v2046, %v1595
      %vm2080 = vcmask 228352
      %v2081 = vsel %vm2080, %v2048, %v1661
      %v2082 = vsel %vm2080, %v2049, %v1663
      %v2083 = vsel %vm2080, %v2050, %v1665
      %v2084 = vsel %vm2080, %v2051, %v1667
      %v2085 = vsel %vm2080, %v2052, %v1669
      %v2086 = vsel %vm2080, %v2053, %v1671
      %v2087 = vsel %vm2080, %v2054, %v1673
      %v2088 = vsel %vm2080, %v2055, %v1675
      %v2089 = vsel %vm2080, %v2056, %v1677
      %v2090 = vsel %vm2080, %v2057, %v1679
      %v2091 = vsel %vm2080, %v2058, %v1681
      %v2092 = vsel %vm2080, %v2059, %v1683
      %v2093 = vsel %vm2080, %v2060, %v1685
      %v2094 = vsel %vm2080, %v2061, %v1687
      %v2095 = vsel %vm2080, %v2062, %v1689
      %v2096 = vsel %vm2080, %v2063, %v1691
      %v2097 = vsel %vm2080, %v2064, %v1693
      %v2098 = vsel %vm2080, %v2065, %v1695
      %v2099 = vsel %vm2080, %v2066, %v1697
      %v2100 = vsel %vm2080, %v2067, %v1699
      %v2101 = vsel %vm2080, %v2068, %v1701
      %v2102 = vsel %vm2080, %v2069, %v1703
      %v2103 = vsel %vm2080, %v2070, %v1705
      %v2104 = vsel %vm2080, %v2071, %v1707
      %v2105 = vsel %vm2080, %v2072, %v1709
      %v2106 = vsel %vm2080, %v2073, %v1711
      %v2107 = vsel %vm2080, %v2074, %v1713
      %v2108 = vsel %vm2080, %v2075, %v1715
      %v2109 = vsel %vm2080, %v2076, %v1717
      %v2110 = vsel %vm2080, %v2077, %v1719
      %v2111 = vsel %vm2080, %v2078, %v1721
      %v2112 = vsel %vm2080, %v2079, %v1723
      %vm2113 = vcmask 261120
      %v2114 = vsel %vm2113, %v2081, %v1789
      %v2115 = vsel %vm2113, %v2082, %v1791
      %v2116 = vsel %vm2113, %v2083, %v1793
      %v2117 = vsel %vm2113, %v2084, %v1795
      %v2118 = vsel %vm2113, %v2085, %v1797
      %v2119 = vsel %vm2113, %v2086, %v1799
      %v2120 = vsel %vm2113, %v2087, %v1801
      %v2121 = vsel %vm2113, %v2088, %v1803
      %v2122 = vsel %vm2113, %v2089, %v1805
      %v2123 = vsel %vm2113, %v2090, %v1807
      %v2124 = vsel %vm2113, %v2091, %v1809
      %v2125 = vsel %vm2113, %v2092, %v1811
      %v2126 = vsel %vm2113, %v2093, %v1813
      %v2127 = vsel %vm2113, %v2094, %v1815
      %v2128 = vsel %vm2113, %v2095, %v1817
      %v2129 = vsel %vm2113, %v2096, %v1819
      %v2130 = vsel %vm2113, %v2097, %v1821
      %v2131 = vsel %vm2113, %v2098, %v1823
      %v2132 = vsel %vm2113, %v2099, %v1825
      %v2133 = vsel %vm2113, %v2100, %v1827
      %v2134 = vsel %vm2113, %v2101, %v1829
      %v2135 = vsel %vm2113, %v2102, %v1831
      %v2136 = vsel %vm2113, %v2103, %v1833
      %v2137 = vsel %vm2113, %v2104, %v1835
      %v2138 = vsel %vm2113, %v2105, %v1837
      %v2139 = vsel %vm2113, %v2106, %v1839
      %v2140 = vsel %vm2113, %v2107, %v1841
      %v2141 = vsel %vm2113, %v2108, %v1843
      %v2142 = vsel %vm2113, %v2109, %v1845
      %v2143 = vsel %vm2113, %v2110, %v1847
      %v2144 = vsel %vm2113, %v2111, %v1849
      %v2145 = vsel %vm2113, %v2112, %v1851
      %v2146 = vld [vmem:[%s2] sm:$0xff]
      %v2147 = vld [vmem:[%s2 + $0x8] sm:$0xff]
      %v2148 = vld [vmem:[%s2 + $0x10] sm:$0xff]
      %v2149 = vld [vmem:[%s2 + $0x18] sm:$0xff]
      %v2150 = vld [vmem:[%s2 + $0x20] sm:$0xf]
      %vm2151 = vcmask 293888
      %v2153 = vsel %vm2151, %v2114, 0
      %v2156 = vsel %vm2151, %v2115, 0
      %v2159 = vsel %vm2151, %v2116, 0
      %v2162 = vsel %vm2151, %v2117, 0
      %v2165 = vsel %vm2151, %v2118, 0
      %v2168 = vsel %vm2151, %v2119, 0
      %v2171 = vsel %vm2151, %v2120, 0
      %v2174 = vsel %vm2151, %v2121, 0
      %v2177 = vsel %vm2151, %v2122, 0
      %v2180 = vsel %vm2151, %v2123, 0
      %v2183 = vsel %vm2151, %v2124, 0
      %v2186 = vsel %vm2151, %v2125, 0
      %v2189 = vsel %vm2151, %v2126, 0
      %v2192 = vsel %vm2151, %v2127, 0
      %v2195 = vsel %vm2151, %v2128, 0
      %v2198 = vsel %vm2151, %v2129, 0
      %v2201 = vsel %vm2151, %v2130, 0
      %v2204 = vsel %vm2151, %v2131, 0
      %v2207 = vsel %vm2151, %v2132, 0
      %v2210 = vsel %vm2151, %v2133, 0
      %v2213 = vsel %vm2151, %v2134, 0
      %v2216 = vsel %vm2151, %v2135, 0
      %v2219 = vsel %vm2151, %v2136, 0
      %v2222 = vsel %vm2151, %v2137, 0
      %v2225 = vsel %vm2151, %v2138, 0
      %v2228 = vsel %vm2151, %v2139, 0
      %v2231 = vsel %vm2151, %v2140, 0
      %v2234 = vsel %vm2151, %v2141, 0
      %v2237 = vsel %vm2151, %v2142, 0
      %v2240 = vsel %vm2151, %v2143, 0
      %v2243 = vsel %vm2151, %v2144, 0
      %v2246 = vsel %vm2151, %v2145, 0
      %vm2248 = vcmask 1043456
      %v2250 = vsel %vm2248, %v2150, 0
      %2252 = vmatprep.subr.mxu0 0.0
      %2253 = vmatpush1.msra.mxu0 0.0
      %2254 = vmatprep.subr.mxu0 0.0
      %2255 = vmatpush1.msra.mxu0 0.0
      %2256 = vmatprep.subr.mxu0 0.0
      %2257 = vmatpush1.msra.mxu0 0.0
      %2258 = vmatprep.subr.mxu0 0.0
      %2259 = vmatpush1.msra.mxu0 0.0
      %2260 = vmatprep.subr.mxu0 0.0
      %2261 = vmatpush1.msra.mxu0 0.0
      %2262 = vmatprep.subr.mxu0 0.0
      %2263 = vmatpush1.msra.mxu0 0.0
      %2264 = vmatprep.subr.mxu0 0.0
      %2265 = vmatpush1.msra.mxu0 0.0
      %2266 = vmatprep.subr.mxu0 0.0
      %2267 = vmatpush1.msra.mxu0 0.0
      %2268 = vmatprep.subr.mxu0 0.0
      %2269 = vmatpush1.msra.mxu0 0.0
      %2270 = vmatprep.subr.mxu0 0.0
      %2271 = vmatpush1.msra.mxu0 0.0
      %2272 = vmatprep.subr.mxu0 0.0
      %2273 = vmatpush1.msra.mxu0 0.0
      %2274 = vmatprep.subr.mxu0 0.0
      %2275 = vmatpush1.msra.mxu0 %v2250
      %2276 = vmatprep.subr.mxu0 0.0
      %2277 = vmatpush1.msra.mxu0 %v2149
      %2278 = vmatprep.subr.mxu0 0.0
      %2279 = vmatpush1.msra.mxu0 %v2148
      %2280 = vmatprep.subr.mxu0 0.0
      %2281 = vmatpush1.msra.mxu0 %v2147
      %2282 = vmatprep.subr.mxu0 0.0
      %2283 = vmatpush1.msra.mxu0 %v2146
      %2284 = vmatprep.subr.mxu0 0.0
      %2285 = vmatpush2.msra.mxu0 0.0
      %2286 = vmatprep.subr.mxu0 0.0
      %2287 = vmatpush2.msra.mxu0 0.0
      %2288 = vmatprep.subr.mxu0 0.0
      %2289 = vmatpush2.msra.mxu0 0.0
      %2290 = vmatprep.subr.mxu0 0.0
      %2291 = vmatpush2.msra.mxu0 0.0
      %2292 = vmatprep.subr.mxu0 0.0
      %2293 = vmatpush2.msra.mxu0 0.0
      %2294 = vmatprep.subr.mxu0 0.0
      %2295 = vmatpush2.msra.mxu0 0.0
      %2296 = vmatprep.subr.mxu0 0.0
      %2297 = vmatpush2.msra.mxu0 0.0
      %2298 = vmatprep.subr.mxu0 0.0
      %2299 = vmatpush2.msra.mxu0 0.0
      %2300 = vmatprep.subr.mxu0 0.0
      %2301 = vmatpush2.msra.mxu0 0.0
      %2302 = vmatprep.subr.mxu0 0.0
      %2303 = vmatpush2.msra.mxu0 0.0
      %2304 = vmatprep.subr.mxu0 0.0
      %2305 = vmatpush2.msra.mxu0 0.0
      %2306 = vmatprep.subr.mxu0 0.0
      %2307 = vmatpush2.msra.mxu0 0.0
      %2308 = vmatprep.subr.mxu0 0.0
      %2309 = vmatpush2.msra.mxu0 0.0
      %2310 = vmatprep.subr.mxu0 0.0
      %2311 = vmatpush2.msra.mxu0 0.0
      %2312 = vmatprep.subr.mxu0 0.0
      %2313 = vmatpush2.msra.mxu0 0.0
      %2314 = vmatprep.subr.mxu0 0.0
      %2315 = vmatpush2.msra.mxu0 0.0
      %2316 = vmatprep.mubr.f32.mxu0 0.0
      %2317 = vmatmul.mubr.f32.gmra.mxu0 %v2153
      %v2318 = vpop.f32.mrf.mxu0
      %v2319 = vadd.f32 0.0, %v2318
      %v2320 = vpop.f32.mrf.mxu0
      %2321 = vmatprep.mubr.f32.mxu0 0.0
      %2322 = vmatmul.mubr.f32.gmra.mxu0 %v2156
      %v2323 = vpop.f32.mrf.mxu0
      %v2324 = vadd.f32 0.0, %v2323
      %v2325 = vpop.f32.mrf.mxu0
      %2326 = vmatprep.mubr.f32.mxu0 0.0
      %2327 = vmatmul.mubr.f32.gmra.mxu0 %v2159
      %v2328 = vpop.f32.mrf.mxu0
      %v2329 = vadd.f32 0.0, %v2328
      %v2330 = vpop.f32.mrf.mxu0
      %2331 = vmatprep.mubr.f32.mxu0 0.0
      %2332 = vmatmul.mubr.f32.gmra.mxu0 %v2162
      %v2333 = vpop.f32.mrf.mxu0
      %v2334 = vadd.f32 0.0, %v2333
      %v2335 = vpop.f32.mrf.mxu0
      %2336 = vmatprep.mubr.f32.mxu0 0.0
      %2337 = vmatmul.mubr.f32.gmra.mxu0 %v2165
      %v2338 = vpop.f32.mrf.mxu0
      %v2339 = vadd.f32 0.0, %v2338
      %v2340 = vpop.f32.mrf.mxu0
      %2341 = vmatprep.mubr.f32.mxu0 0.0
      %2342 = vmatmul.mubr.f32.gmra.mxu0 %v2168
      %v2343 = vpop.f32.mrf.mxu0
      %v2344 = vadd.f32 0.0, %v2343
      %v2345 = vpop.f32.mrf.mxu0
      %2346 = vmatprep.mubr.f32.mxu0 0.0
      %2347 = vmatmul.mubr.f32.gmra.mxu0 %v2171
      %v2348 = vpop.f32.mrf.mxu0
      %v2349 = vadd.f32 0.0, %v2348
      %v2350 = vpop.f32.mrf.mxu0
      %2351 = vmatprep.mubr.f32.mxu0 0.0
      %2352 = vmatmul.mubr.f32.gmra.mxu0 %v2174
      %v2353 = vpop.f32.mrf.mxu0
      %v2354 = vadd.f32 0.0, %v2353
      %v2355 = vpop.f32.mrf.mxu0
      %2356 = vmatprep.mubr.f32.mxu0 0.0
      %2357 = vmatmul.mubr.f32.gmra.mxu0 %v2177
      %v2358 = vpop.f32.mrf.mxu0
      %v2359 = vadd.f32 0.0, %v2358
      %v2360 = vpop.f32.mrf.mxu0
      %2361 = vmatprep.mubr.f32.mxu0 0.0
      %2362 = vmatmul.mubr.f32.gmra.mxu0 %v2180
      %v2363 = vpop.f32.mrf.mxu0
      %v2364 = vadd.f32 0.0, %v2363
      %v2365 = vpop.f32.mrf.mxu0
      %2366 = vmatprep.mubr.f32.mxu0 0.0
      %2367 = vmatmul.mubr.f32.gmra.mxu0 %v2183
      %v2368 = vpop.f32.mrf.mxu0
      %v2369 = vadd.f32 0.0, %v2368
      %v2370 = vpop.f32.mrf.mxu0
      %2371 = vmatprep.mubr.f32.mxu0 0.0
      %2372 = vmatmul.mubr.f32.gmra.mxu0 %v2186
      %v2373 = vpop.f32.mrf.mxu0
      %v2374 = vadd.f32 0.0, %v2373
      %v2375 = vpop.f32.mrf.mxu0
      %2376 = vmatprep.mubr.f32.mxu0 0.0
      %2377 = vmatmul.mubr.f32.gmra.mxu0 %v2189
      %v2378 = vpop.f32.mrf.mxu0
      %v2379 = vadd.f32 0.0, %v2378
      %v2380 = vpop.f32.mrf.mxu0
      %2381 = vmatprep.mubr.f32.mxu0 0.0
      %2382 = vmatmul.mubr.f32.gmra.mxu0 %v2192
      %v2383 = vpop.f32.mrf.mxu0
      %v2384 = vadd.f32 0.0, %v2383
      %v2385 = vpop.f32.mrf.mxu0
      %2386 = vmatprep.mubr.f32.mxu0 0.0
      %2387 = vmatmul.mubr.f32.gmra.mxu0 %v2195
      %v2388 = vpop.f32.mrf.mxu0
      %v2389 = vadd.f32 0.0, %v2388
      %v2390 = vpop.f32.mrf.mxu0
      %2391 = vmatprep.mubr.f32.mxu0 0.0
      %2392 = vmatmul.mubr.f32.gmra.mxu0 %v2198
      %v2393 = vpop.f32.mrf.mxu0
      %v2394 = vadd.f32 0.0, %v2393
      %v2395 = vpop.f32.mrf.mxu0
      %2396 = vmatprep.mubr.f32.mxu0 0.0
      %2397 = vmatmul.mubr.f32.gmra.mxu0 %v2201
      %v2398 = vpop.f32.mrf.mxu0
      %v2399 = vadd.f32 0.0, %v2398
      %v2400 = vpop.f32.mrf.mxu0
      %2401 = vmatprep.mubr.f32.mxu0 0.0
      %2402 = vmatmul.mubr.f32.gmra.mxu0 %v2204
      %v2403 = vpop.f32.mrf.mxu0
      %v2404 = vadd.f32 0.0, %v2403
      %v2405 = vpop.f32.mrf.mxu0
      %2406 = vmatprep.mubr.f32.mxu0 0.0
      %2407 = vmatmul.mubr.f32.gmra.mxu0 %v2207
      %v2408 = vpop.f32.mrf.mxu0
      %v2409 = vadd.f32 0.0, %v2408
      %v2410 = vpop.f32.mrf.mxu0
      %2411 = vmatprep.mubr.f32.mxu0 0.0
      %2412 = vmatmul.mubr.f32.gmra.mxu0 %v2210
      %v2413 = vpop.f32.mrf.mxu0
      %v2414 = vadd.f32 0.0, %v2413
      %v2415 = vpop.f32.mrf.mxu0
      %2416 = vmatprep.mubr.f32.mxu0 0.0
      %2417 = vmatmul.mubr.f32.gmra.mxu0 %v2213
      %v2418 = vpop.f32.mrf.mxu0
      %v2419 = vadd.f32 0.0, %v2418
      %v2420 = vpop.f32.mrf.mxu0
      %2421 = vmatprep.mubr.f32.mxu0 0.0
      %2422 = vmatmul.mubr.f32.gmra.mxu0 %v2216
      %v2423 = vpop.f32.mrf.mxu0
      %v2424 = vadd.f32 0.0, %v2423
      %v2425 = vpop.f32.mrf.mxu0
      %2426 = vmatprep.mubr.f32.mxu0 0.0
      %2427 = vmatmul.mubr.f32.gmra.mxu0 %v2219
      %v2428 = vpop.f32.mrf.mxu0
      %v2429 = vadd.f32 0.0, %v2428
      %v2430 = vpop.f32.mrf.mxu0
      %2431 = vmatprep.mubr.f32.mxu0 0.0
      %2432 = vmatmul.mubr.f32.gmra.mxu0 %v2222
      %v2433 = vpop.f32.mrf.mxu0
      %v2434 = vadd.f32 0.0, %v2433
      %v2435 = vpop.f32.mrf.mxu0
      %2436 = vmatprep.mubr.f32.mxu0 0.0
      %2437 = vmatmul.mubr.f32.gmra.mxu0 %v2225
      %v2438 = vpop.f32.mrf.mxu0
      %v2439 = vadd.f32 0.0, %v2438
      %v2440 = vpop.f32.mrf.mxu0
      %2441 = vmatprep.mubr.f32.mxu0 0.0
      %2442 = vmatmul.mubr.f32.gmra.mxu0 %v2228
      %v2443 = vpop.f32.mrf.mxu0
      %v2444 = vadd.f32 0.0, %v2443
      %v2445 = vpop.f32.mrf.mxu0
      %2446 = vmatprep.mubr.f32.mxu0 0.0
      %2447 = vmatmul.mubr.f32.gmra.mxu0 %v2231
      %v2448 = vpop.f32.mrf.mxu0
      %v2449 = vadd.f32 0.0, %v2448
      %v2450 = vpop.f32.mrf.mxu0
      %2451 = vmatprep.mubr.f32.mxu0 0.0
      %2452 = vmatmul.mubr.f32.gmra.mxu0 %v2234
      %v2453 = vpop.f32.mrf.mxu0
      %v2454 = vadd.f32 0.0, %v2453
      %v2455 = vpop.f32.mrf.mxu0
      %2456 = vmatprep.mubr.f32.mxu0 0.0
      %2457 = vmatmul.mubr.f32.gmra.mxu0 %v2237
      %v2458 = vpop.f32.mrf.mxu0
      %v2459 = vadd.f32 0.0, %v2458
      %v2460 = vpop.f32.mrf.mxu0
      %2461 = vmatprep.mubr.f32.mxu0 0.0
      %2462 = vmatmul.mubr.f32.gmra.mxu0 %v2240
      %v2463 = vpop.f32.mrf.mxu0
      %v2464 = vadd.f32 0.0, %v2463
      %v2465 = vpop.f32.mrf.mxu0
      %2466 = vmatprep.mubr.f32.mxu0 0.0
      %2467 = vmatmul.mubr.f32.gmra.mxu0 %v2243
      %v2468 = vpop.f32.mrf.mxu0
      %v2469 = vadd.f32 0.0, %v2468
      %v2470 = vpop.f32.mrf.mxu0
      %2471 = vmatprep.mubr.f32.mxu0 0.0
      %2472 = vmatmul.mubr.f32.gmra.mxu0 %v2246
      %v2473 = vpop.f32.mrf.mxu0
      %v2474 = vadd.f32 0.0, %v2473
      %v2475 = vpop.f32.mrf.mxu0
      %2476 = vdwg.mxu0
      %2509 = vrot.lane.b32.xlu0 %v2319, 4
      %v2510 = vpop.permute.xlu0 %2509
      %2511 = vrot.lane.b32.xlu0 %v2324, 4
      %v2512 = vpop.permute.xlu0 %2511
      %2513 = vrot.lane.b32.xlu0 %v2329, 4
      %v2514 = vpop.permute.xlu0 %2513
      %2515 = vrot.lane.b32.xlu0 %v2334, 4
      %v2516 = vpop.permute.xlu0 %2515
      %2517 = vrot.lane.b32.xlu0 %v2339, 4
      %v2518 = vpop.permute.xlu0 %2517
      %2519 = vrot.lane.b32.xlu0 %v2344, 4
      %v2520 = vpop.permute.xlu0 %2519
      %2521 = vrot.lane.b32.xlu0 %v2349, 4
      %v2522 = vpop.permute.xlu0 %2521
      %2523 = vrot.lane.b32.xlu0 %v2354, 4
      %v2524 = vpop.permute.xlu0 %2523
      %2525 = vrot.lane.b32.xlu0 %v2359, 4
      %v2526 = vpop.permute.xlu0 %2525
      %2527 = vrot.lane.b32.xlu0 %v2364, 4
      %v2528 = vpop.permute.xlu0 %2527
      %2529 = vrot.lane.b32.xlu0 %v2369, 4
      %v2530 = vpop.permute.xlu0 %2529
      %2531 = vrot.lane.b32.xlu0 %v2374, 4
      %v2532 = vpop.permute.xlu0 %2531
      %2533 = vrot.lane.b32.xlu0 %v2379, 4
      %v2534 = vpop.permute.xlu0 %2533
      %2535 = vrot.lane.b32.xlu0 %v2384, 4
      %v2536 = vpop.permute.xlu0 %2535
      %2537 = vrot.lane.b32.xlu0 %v2389, 4
      %v2538 = vpop.permute.xlu0 %2537
      %2539 = vrot.lane.b32.xlu0 %v2394, 4
      %v2540 = vpop.permute.xlu0 %2539
      %2541 = vrot.lane.b32.xlu0 %v2399, 4
      %v2542 = vpop.permute.xlu0 %2541
      %2543 = vrot.lane.b32.xlu0 %v2404, 4
      %v2544 = vpop.permute.xlu0 %2543
      %2545 = vrot.lane.b32.xlu0 %v2409, 4
      %v2546 = vpop.permute.xlu0 %2545
      %2547 = vrot.lane.b32.xlu0 %v2414, 4
      %v2548 = vpop.permute.xlu0 %2547
      %2549 = vrot.lane.b32.xlu0 %v2419, 4
      %v2550 = vpop.permute.xlu0 %2549
      %2551 = vrot.lane.b32.xlu0 %v2424, 4
      %v2552 = vpop.permute.xlu0 %2551
      %2553 = vrot.lane.b32.xlu0 %v2429, 4
      %v2554 = vpop.permute.xlu0 %2553
      %2555 = vrot.lane.b32.xlu0 %v2434, 4
      %v2556 = vpop.permute.xlu0 %2555
      %2557 = vrot.lane.b32.xlu0 %v2439, 4
      %v2558 = vpop.permute.xlu0 %2557
      %2559 = vrot.lane.b32.xlu0 %v2444, 4
      %v2560 = vpop.permute.xlu0 %2559
      %2561 = vrot.lane.b32.xlu0 %v2449, 4
      %v2562 = vpop.permute.xlu0 %2561
      %2563 = vrot.lane.b32.xlu0 %v2454, 4
      %v2564 = vpop.permute.xlu0 %2563
      %2565 = vrot.lane.b32.xlu0 %v2459, 4
      %v2566 = vpop.permute.xlu0 %2565
      %2567 = vrot.lane.b32.xlu0 %v2464, 4
      %v2568 = vpop.permute.xlu0 %2567
      %2569 = vrot.lane.b32.xlu0 %v2469, 4
      %v2570 = vpop.permute.xlu0 %2569
      %2571 = vrot.lane.b32.xlu0 %v2474, 4
      %v2572 = vpop.permute.xlu0 %2571
      %vm2605 = vcmask 97312
      %2606 = vst.msk [vmem:[#allocation2] sm:$0xff] %vm2605, %v2510
      %2607 = vst.msk [vmem:[#allocation2 + $0x8] sm:$0xff] %vm2605, %v2512
      %2608 = vst.msk [vmem:[#allocation2 + $0x10] sm:$0xff] %vm2605, %v2514
      %2609 = vst.msk [vmem:[#allocation2 + $0x18] sm:$0xff] %vm2605, %v2516
      %2610 = vst.msk [vmem:[#allocation2 + $0x20] sm:$0xff] %vm2605, %v2518
      %2611 = vst.msk [vmem:[#allocation2 + $0x28] sm:$0xff] %vm2605, %v2520
      %2612 = vst.msk [vmem:[#allocation2 + $0x30] sm:$0xff] %vm2605, %v2522
      %2613 = vst.msk [vmem:[#allocation2 + $0x38] sm:$0xff] %vm2605, %v2524
      %2614 = vst.msk [vmem:[#allocation2 + $0x40] sm:$0xff] %vm2605, %v2526
      %2615 = vst.msk [vmem:[#allocation2 + $0x48] sm:$0xff] %vm2605, %v2528
      %2616 = vst.msk [vmem:[#allocation2 + $0x50] sm:$0xff] %vm2605, %v2530
      %2617 = vst.msk [vmem:[#allocation2 + $0x58] sm:$0xff] %vm2605, %v2532
      %2618 = vst.msk [vmem:[#allocation2 + $0x60] sm:$0xff] %vm2605, %v2534
      %2619 = vst.msk [vmem:[#allocation2 + $0x68] sm:$0xff] %vm2605, %v2536
      %2620 = vst.msk [vmem:[#allocation2 + $0x70] sm:$0xff] %vm2605, %v2538
      %2621 = vst.msk [vmem:[#allocation2 + $0x78] sm:$0xff] %vm2605, %v2540
      %2622 = vst.msk [vmem:[#allocation2 + $0x80] sm:$0xff] %vm2605, %v2542
      %2623 = vst.msk [vmem:[#allocation2 + $0x88] sm:$0xff] %vm2605, %v2544
      %2624 = vst.msk [vmem:[#allocation2 + $0x90] sm:$0xff] %vm2605, %v2546
      %2625 = vst.msk [vmem:[#allocation2 + $0x98] sm:$0xff] %vm2605, %v2548
      %2626 = vst.msk [vmem:[#allocation2 + $0xa0] sm:$0xff] %vm2605, %v2550
      %2627 = vst.msk [vmem:[#allocation2 + $0xa8] sm:$0xff] %vm2605, %v2552
      %2628 = vst.msk [vmem:[#allocation2 + $0xb0] sm:$0xff] %vm2605, %v2554
      %2629 = vst.msk [vmem:[#allocation2 + $0xb8] sm:$0xff] %vm2605, %v2556
      %2630 = vst.msk [vmem:[#allocation2 + $0xc0] sm:$0xff] %vm2605, %v2558
      %2631 = vst.msk [vmem:[#allocation2 + $0xc8] sm:$0xff] %vm2605, %v2560
      %2632 = vst.msk [vmem:[#allocation2 + $0xd0] sm:$0xff] %vm2605, %v2562
      %2633 = vst.msk [vmem:[#allocation2 + $0xd8] sm:$0xff] %vm2605, %v2564
      %2634 = vst.msk [vmem:[#allocation2 + $0xe0] sm:$0xff] %vm2605, %v2566
      %2635 = vst.msk [vmem:[#allocation2 + $0xe8] sm:$0xff] %vm2605, %v2568
      %2636 = vst.msk [vmem:[#allocation2 + $0xf0] sm:$0xff] %vm2605, %v2570
      %2637 = vst.msk [vmem:[#allocation2 + $0xf8] sm:$0xff] %vm2605, %v2572
      %v2638 = vld [vmem:[#allocation2] sm:$0xff]
      %v2639 = vld [vmem:[#allocation2 + $0x8] sm:$0xff]
      %v2640 = vld [vmem:[#allocation2 + $0x10] sm:$0xff]
      %v2641 = vld [vmem:[#allocation2 + $0x18] sm:$0xff]
      %v2642 = vld [vmem:[#allocation2 + $0x20] sm:$0xff]
      %v2643 = vld [vmem:[#allocation2 + $0x28] sm:$0xff]
      %v2644 = vld [vmem:[#allocation2 + $0x30] sm:$0xff]
      %v2645 = vld [vmem:[#allocation2 + $0x38] sm:$0xff]
      %v2646 = vld [vmem:[#allocation2 + $0x40] sm:$0xff]
      %v2647 = vld [vmem:[#allocation2 + $0x48] sm:$0xff]
      %v2648 = vld [vmem:[#allocation2 + $0x50] sm:$0xff]
      %v2649 = vld [vmem:[#allocation2 + $0x58] sm:$0xff]
      %v2650 = vld [vmem:[#allocation2 + $0x60] sm:$0xff]
      %v2651 = vld [vmem:[#allocation2 + $0x68] sm:$0xff]
      %v2652 = vld [vmem:[#allocation2 + $0x70] sm:$0xff]
      %v2653 = vld [vmem:[#allocation2 + $0x78] sm:$0xff]
      %v2654 = vld [vmem:[#allocation2 + $0x80] sm:$0xff]
      %v2655 = vld [vmem:[#allocation2 + $0x88] sm:$0xff]
      %v2656 = vld [vmem:[#allocation2 + $0x90] sm:$0xff]
      %v2657 = vld [vmem:[#allocation2 + $0x98] sm:$0xff]
      %v2658 = vld [vmem:[#allocation2 + $0xa0] sm:$0xff]
      %v2659 = vld [vmem:[#allocation2 + $0xa8] sm:$0xff]
      %v2660 = vld [vmem:[#allocation2 + $0xb0] sm:$0xff]
      %v2661 = vld [vmem:[#allocation2 + $0xb8] sm:$0xff]
      %v2662 = vld [vmem:[#allocation2 + $0xc0] sm:$0xff]
      %v2663 = vld [vmem:[#allocation2 + $0xc8] sm:$0xff]
      %v2664 = vld [vmem:[#allocation2 + $0xd0] sm:$0xff]
      %v2665 = vld [vmem:[#allocation2 + $0xd8] sm:$0xff]
      %v2666 = vld [vmem:[#allocation2 + $0xe0] sm:$0xff]
      %v2667 = vld [vmem:[#allocation2 + $0xe8] sm:$0xff]
      %v2668 = vld [vmem:[#allocation2 + $0xf0] sm:$0xff]
      %v2669 = vld [vmem:[#allocation2 + $0xf8] sm:$0xff]
      %v2670 = vld [vmem:[%s3] sm:$0x1]
      %v2671 = vlaneseq
      %v2672 = vshrl.u32 %v2671, 7
      %v2673 = vsub.s32 0, %v2672
      %v2674 = vrot.slane %v2670, %v2673
      %v2675 = vmul.f32 %v2638, %v2674
      %v2676 = vmul.f32 %v2639, %v2674
      %v2677 = vmul.f32 %v2640, %v2674
      %v2678 = vmul.f32 %v2641, %v2674
      %v2679 = vmul.f32 %v2642, %v2674
      %v2680 = vmul.f32 %v2643, %v2674
      %v2681 = vmul.f32 %v2644, %v2674
      %v2682 = vmul.f32 %v2645, %v2674
      %v2683 = vmul.f32 %v2646, %v2674
      %v2684 = vmul.f32 %v2647, %v2674
      %v2685 = vmul.f32 %v2648, %v2674
      %v2686 = vmul.f32 %v2649, %v2674
      %v2687 = vmul.f32 %v2650, %v2674
      %v2688 = vmul.f32 %v2651, %v2674
      %v2689 = vmul.f32 %v2652, %v2674
      %v2690 = vmul.f32 %v2653, %v2674
      %v2691 = vmul.f32 %v2654, %v2674
      %v2692 = vmul.f32 %v2655, %v2674
      %v2693 = vmul.f32 %v2656, %v2674
      %v2694 = vmul.f32 %v2657, %v2674
      %v2695 = vmul.f32 %v2658, %v2674
      %v2696 = vmul.f32 %v2659, %v2674
      %v2697 = vmul.f32 %v2660, %v2674
      %v2698 = vmul.f32 %v2661, %v2674
      %v2699 = vmul.f32 %v2662, %v2674
      %v2700 = vmul.f32 %v2663, %v2674
      %v2701 = vmul.f32 %v2664, %v2674
      %v2702 = vmul.f32 %v2665, %v2674
      %v2703 = vmul.f32 %v2666, %v2674
      %v2704 = vmul.f32 %v2667, %v2674
      %v2705 = vmul.f32 %v2668, %v2674
      %v2706 = vmul.f32 %v2669, %v2674
      %v2707 = vld [vmem:[%s3 + $0x1] sm:$0x1]
      %v2708 = vlaneseq
      %v2709 = vshrl.u32 %v2708, 7
      %v2710 = vsub.s32 0, %v2709
      %v2711 = vrot.slane %v2707, %v2710
      %v2712 = vadd.f32 %v2675, %v2711
      %v2713 = vadd.f32 %v2676, %v2711
      %v2714 = vadd.f32 %v2677, %v2711
      %v2715 = vadd.f32 %v2678, %v2711
      %v2716 = vadd.f32 %v2679, %v2711
      %v2717 = vadd.f32 %v2680, %v2711
      %v2718 = vadd.f32 %v2681, %v2711
      %v2719 = vadd.f32 %v2682, %v2711
      %v2720 = vadd.f32 %v2683, %v2711
      %v2721 = vadd.f32 %v2684, %v2711
      %v2722 = vadd.f32 %v2685, %v2711
      %v2723 = vadd.f32 %v2686, %v2711
      %v2724 = vadd.f32 %v2687, %v2711
      %v2725 = vadd.f32 %v2688, %v2711
      %v2726 = vadd.f32 %v2689, %v2711
      %v2727 = vadd.f32 %v2690, %v2711
      %v2728 = vadd.f32 %v2691, %v2711
      %v2729 = vadd.f32 %v2692, %v2711
      %v2730 = vadd.f32 %v2693, %v2711
      %v2731 = vadd.f32 %v2694, %v2711
      %v2732 = vadd.f32 %v2695, %v2711
      %v2733 = vadd.f32 %v2696, %v2711
      %v2734 = vadd.f32 %v2697, %v2711
      %v2735 = vadd.f32 %v2698, %v2711
      %v2736 = vadd.f32 %v2699, %v2711
      %v2737 = vadd.f32 %v2700, %v2711
      %v2738 = vadd.f32 %v2701, %v2711
      %v2739 = vadd.f32 %v2702, %v2711
      %v2740 = vadd.f32 %v2703, %v2711
      %v2741 = vadd.f32 %v2704, %v2711
      %v2742 = vadd.f32 %v2705, %v2711
      %v2743 = vadd.f32 %v2706, %v2711
      %v2744 = vmax.f32 %v2712, 0.0
      %v2745 = vmax.f32 %v2713, 0.0
      %v2746 = vmax.f32 %v2714, 0.0
      %v2747 = vmax.f32 %v2715, 0.0
      %v2748 = vmax.f32 %v2716, 0.0
      %v2749 = vmax.f32 %v2717, 0.0
      %v2750 = vmax.f32 %v2718, 0.0
      %v2751 = vmax.f32 %v2719, 0.0
      %v2752 = vmax.f32 %v2720, 0.0
      %v2753 = vmax.f32 %v2721, 0.0
      %v2754 = vmax.f32 %v2722, 0.0
      %v2755 = vmax.f32 %v2723, 0.0
      %v2756 = vmax.f32 %v2724, 0.0
      %v2757 = vmax.f32 %v2725, 0.0
      %v2758 = vmax.f32 %v2726, 0.0
      %v2759 = vmax.f32 %v2727, 0.0
      %v2760 = vmax.f32 %v2728, 0.0
      %v2761 = vmax.f32 %v2729, 0.0
      %v2762 = vmax.f32 %v2730, 0.0
      %v2763 = vmax.f32 %v2731, 0.0
      %v2764 = vmax.f32 %v2732, 0.0
      %v2765 = vmax.f32 %v2733, 0.0
      %v2766 = vmax.f32 %v2734, 0.0
      %v2767 = vmax.f32 %v2735, 0.0
      %v2768 = vmax.f32 %v2736, 0.0
      %v2769 = vmax.f32 %v2737, 0.0
      %v2770 = vmax.f32 %v2738, 0.0
      %v2771 = vmax.f32 %v2739, 0.0
      %v2772 = vmax.f32 %v2740, 0.0
      %v2773 = vmax.f32 %v2741, 0.0
      %v2774 = vmax.f32 %v2742, 0.0
      %v2775 = vmax.f32 %v2743, 0.0
      %2776 = vst.msk [vmem:[%s538 + $0x1] sm:$0xff] %vm1949, %v2744
      %2777 = vst.msk [vmem:[%s538 + $0x9] sm:$0xff] %vm1949, %v2745
      %2778 = vst.msk [vmem:[%s538 + $0x19] sm:$0xff] %vm1949, %v2746
      %2779 = vst.msk [vmem:[%s538 + $0x21] sm:$0xff] %vm1949, %v2747
      %2780 = vst.msk [vmem:[%s538 + $0x31] sm:$0xff] %vm1949, %v2748
      %2781 = vst.msk [vmem:[%s538 + $0x39] sm:$0xff] %vm1949, %v2749
      %2782 = vst.msk [vmem:[%s538 + $0x49] sm:$0xff] %vm1949, %v2750
      %2783 = vst.msk [vmem:[%s538 + $0x51] sm:$0xff] %vm1949, %v2751
      %2784 = vst.msk [vmem:[%s538 + $0x61] sm:$0xff] %vm1949, %v2752
      %2785 = vst.msk [vmem:[%s538 + $0x69] sm:$0xff] %vm1949, %v2753
      %2786 = vst.msk [vmem:[%s538 + $0x79] sm:$0xff] %vm1949, %v2754
      %2787 = vst.msk [vmem:[%s538 + $0x81] sm:$0xff] %vm1949, %v2755
      %2788 = vst.msk [vmem:[%s538 + $0x91] sm:$0xff] %vm1949, %v2756
      %2789 = vst.msk [vmem:[%s538 + $0x99] sm:$0xff] %vm1949, %v2757
      %2790 = vst.msk [vmem:[%s538 + $0xa9] sm:$0xff] %vm1949, %v2758
      %2791 = vst.msk [vmem:[%s538 + $0xb1] sm:$0xff] %vm1949, %v2759
      %2792 = vst.msk [vmem:[%s538 + $0xc1] sm:$0xff] %vm1949, %v2760
      %2793 = vst.msk [vmem:[%s538 + $0xc9] sm:$0xff] %vm1949, %v2761
      %2794 = vst.msk [vmem:[%s538 + $0xd9] sm:$0xff] %vm1949, %v2762
      %2795 = vst.msk [vmem:[%s538 + $0xe1] sm:$0xff] %vm1949, %v2763
      %2796 = vst.msk [vmem:[%s538 + $0xf1] sm:$0xff] %vm1949, %v2764
      %2797 = vst.msk [vmem:[%s538 + $0xf9] sm:$0xff] %vm1949, %v2765
      %2798 = vst.msk [vmem:[%s538 + $0x109] sm:$0xff] %vm1949, %v2766
      %2799 = vst.msk [vmem:[%s538 + $0x111] sm:$0xff] %vm1949, %v2767
      %2800 = vst.msk [vmem:[%s538 + $0x121] sm:$0xff] %vm1949, %v2768
      %2801 = vst.msk [vmem:[%s538 + $0x129] sm:$0xff] %vm1949, %v2769
      %2802 = vst.msk [vmem:[%s538 + $0x139] sm:$0xff] %vm1949, %v2770
      %2803 = vst.msk [vmem:[%s538 + $0x141] sm:$0xff] %vm1949, %v2771
      %2804 = vst.msk [vmem:[%s538 + $0x151] sm:$0xff] %vm1949, %v2772
      %2805 = vst.msk [vmem:[%s538 + $0x159] sm:$0xff] %vm1949, %v2773
      %2806 = vst.msk [vmem:[%s538 + $0x169] sm:$0xff] %vm1949, %v2774
      %2807 = vst.msk [vmem:[%s538 + $0x171] sm:$0xff] %vm1949, %v2775
      %v2808 = vld [vmem:[#allocation3] sm:$0xff]
      %v2809 = vld [vmem:[#allocation3 + $0x8] sm:$0xff]
      %v2810 = vld [vmem:[#allocation3 + $0x18] sm:$0xff]
      %v2811 = vld [vmem:[#allocation3 + $0x20] sm:$0xff]
      %v2812 = vld [vmem:[#allocation3 + $0x30] sm:$0xff]
      %v2813 = vld [vmem:[#allocation3 + $0x38] sm:$0xff]
      %v2814 = vld [vmem:[#allocation3 + $0x48] sm:$0xff]
      %v2815 = vld [vmem:[#allocation3 + $0x50] sm:$0xff]
      %v2816 = vld [vmem:[#allocation3 + $0x60] sm:$0xff]
      %v2817 = vld [vmem:[#allocation3 + $0x68] sm:$0xff]
      %v2818 = vld [vmem:[#allocation3 + $0x78] sm:$0xff]
      %v2819 = vld [vmem:[#allocation3 + $0x80] sm:$0xff]
      %v2820 = vld [vmem:[#allocation3 + $0x90] sm:$0xff]
      %v2821 = vld [vmem:[#allocation3 + $0x98] sm:$0xff]
      %v2822 = vld [vmem:[#allocation3 + $0xa8] sm:$0xff]
      %v2823 = vld [vmem:[#allocation3 + $0xb0] sm:$0xff]
      %v2824 = vld [vmem:[#allocation3 + $0xc0] sm:$0xff]
      %v2825 = vld [vmem:[#allocation3 + $0xc8] sm:$0xff]
      %v2826 = vld [vmem:[#allocation3 + $0xd8] sm:$0xff]
      %v2827 = vld [vmem:[#allocation3 + $0xe0] sm:$0xff]
      %v2828 = vld [vmem:[#allocation3 + $0xf0] sm:$0xff]
      %v2829 = vld [vmem:[#allocation3 + $0xf8] sm:$0xff]
      %v2830 = vld [vmem:[#allocation3 + $0x108] sm:$0xff]
      %v2831 = vld [vmem:[#allocation3 + $0x110] sm:$0xff]
      %v2832 = vld [vmem:[#allocation3 + $0x120] sm:$0xff]
      %v2833 = vld [vmem:[#allocation3 + $0x128] sm:$0xff]
      %v2834 = vld [vmem:[#allocation3 + $0x138] sm:$0xff]
      %v2835 = vld [vmem:[#allocation3 + $0x140] sm:$0xff]
      %v2836 = vld [vmem:[#allocation3 + $0x150] sm:$0xff]
      %v2837 = vld [vmem:[#allocation3 + $0x158] sm:$0xff]
      %v2838 = vld [vmem:[#allocation3 + $0x168] sm:$0xff]
      %v2839 = vld [vmem:[#allocation3 + $0x170] sm:$0xff]
      %v2840 = vld [vmem:[#allocation3 + $0x1] sm:$0xff]
      %v2841 = vld [vmem:[#allocation3 + $0x9] sm:$0xff]
      %v2842 = vld [vmem:[#allocation3 + $0x19] sm:$0xff]
      %v2843 = vld [vmem:[#allocation3 + $0x21] sm:$0xff]
      %v2844 = vld [vmem:[#allocation3 + $0x31] sm:$0xff]
      %v2845 = vld [vmem:[#allocation3 + $0x39] sm:$0xff]
      %v2846 = vld [vmem:[#allocation3 + $0x49] sm:$0xff]
      %v2847 = vld [vmem:[#allocation3 + $0x51] sm:$0xff]
      %v2848 = vld [vmem:[#allocation3 + $0x61] sm:$0xff]
      %v2849 = vld [vmem:[#allocation3 + $0x69] sm:$0xff]
      %v2850 = vld [vmem:[#allocation3 + $0x79] sm:$0xff]
      %v2851 = vld [vmem:[#allocation3 + $0x81] sm:$0xff]
      %v2852 = vld [vmem:[#allocation3 + $0x91] sm:$0xff]
      %v2853 = vld [vmem:[#allocation3 + $0x99] sm:$0xff]
      %v2854 = vld [vmem:[#allocation3 + $0xa9] sm:$0xff]
      %v2855 = vld [vmem:[#allocation3 + $0xb1] sm:$0xff]
      %v2856 = vld [vmem:[#allocation3 + $0xc1] sm:$0xff]
      %v2857 = vld [vmem:[#allocation3 + $0xc9] sm:$0xff]
      %v2858 = vld [vmem:[#allocation3 + $0xd9] sm:$0xff]
      %v2859 = vld [vmem:[#allocation3 + $0xe1] sm:$0xff]
      %v2860 = vld [vmem:[#allocation3 + $0xf1] sm:$0xff]
      %v2861 = vld [vmem:[#allocation3 + $0xf9] sm:$0xff]
      %v2862 = vld [vmem:[#allocation3 + $0x109] sm:$0xff]
      %v2863 = vld [vmem:[#allocation3 + $0x111] sm:$0xff]
      %v2864 = vld [vmem:[#allocation3 + $0x121] sm:$0xff]
      %v2865 = vld [vmem:[#allocation3 + $0x129] sm:$0xff]
      %v2866 = vld [vmem:[#allocation3 + $0x139] sm:$0xff]
      %v2867 = vld [vmem:[#allocation3 + $0x141] sm:$0xff]
      %v2868 = vld [vmem:[#allocation3 + $0x151] sm:$0xff]
      %v2869 = vld [vmem:[#allocation3 + $0x159] sm:$0xff]
      %v2870 = vld [vmem:[#allocation3 + $0x169] sm:$0xff]
      %v2871 = vld [vmem:[#allocation3 + $0x171] sm:$0xff]
      %v2872 = vld [vmem:[#allocation3 + $0x2] sm:$0xff]
      %v2873 = vld [vmem:[#allocation3 + $0xa] sm:$0xff]
      %v2874 = vld [vmem:[#allocation3 + $0x1a] sm:$0xff]
      %v2875 = vld [vmem:[#allocation3 + $0x22] sm:$0xff]
      %v2876 = vld [vmem:[#allocation3 + $0x32] sm:$0xff]
      %v2877 = vld [vmem:[#allocation3 + $0x3a] sm:$0xff]
      %v2878 = vld [vmem:[#allocation3 + $0x4a] sm:$0xff]
      %v2879 = vld [vmem:[#allocation3 + $0x52] sm:$0xff]
      %v2880 = vld [vmem:[#allocation3 + $0x62] sm:$0xff]
      %v2881 = vld [vmem:[#allocation3 + $0x6a] sm:$0xff]
      %v2882 = vld [vmem:[#allocation3 + $0x7a] sm:$0xff]
      %v2883 = vld [vmem:[#allocation3 + $0x82] sm:$0xff]
      %v2884 = vld [vmem:[#allocation3 + $0x92] sm:$0xff]
      %v2885 = vld [vmem:[#allocation3 + $0x9a] sm:$0xff]
      %v2886 = vld [vmem:[#allocation3 + $0xaa] sm:$0xff]
      %v2887 = vld [vmem:[#allocation3 + $0xb2] sm:$0xff]
      %v2888 = vld [vmem:[#allocation3 + $0xc2] sm:$0xff]
      %v2889 = vld [vmem:[#allocation3 + $0xca] sm:$0xff]
      %v2890 = vld [vmem:[#allocation3 + $0xda] sm:$0xff]
      %v2891 = vld [vmem:[#allocation3 + $0xe2] sm:$0xff]
      %v2892 = vld [vmem:[#allocation3 + $0xf2] sm:$0xff]
      %v2893 = vld [vmem:[#allocation3 + $0xfa] sm:$0xff]
      %v2894 = vld [vmem:[#allocation3 + $0x10a] sm:$0xff]
      %v2895 = vld [vmem:[#allocation3 + $0x112] sm:$0xff]
      %v2896 = vld [vmem:[#allocation3 + $0x122] sm:$0xff]
      %v2897 = vld [vmem:[#allocation3 + $0x12a] sm:$0xff]
      %v2898 = vld [vmem:[#allocation3 + $0x13a] sm:$0xff]
      %v2899 = vld [vmem:[#allocation3 + $0x142] sm:$0xff]
      %v2900 = vld [vmem:[#allocation3 + $0x152] sm:$0xff]
      %v2901 = vld [vmem:[#allocation3 + $0x15a] sm:$0xff]
      %v2902 = vld [vmem:[#allocation3 + $0x16a] sm:$0xff]
      %v2903 = vld [vmem:[#allocation3 + $0x172] sm:$0xff]
      %v2904 = vld [vmem:[%s538] sm:$0xff]
      %v2905 = vld [vmem:[%s538 + $0x8] sm:$0xff]
      %v2906 = vld [vmem:[%s538 + $0x18] sm:$0xff]
      %v2907 = vld [vmem:[%s538 + $0x20] sm:$0xff]
      %v2908 = vld [vmem:[%s538 + $0x30] sm:$0xff]
      %v2909 = vld [vmem:[%s538 + $0x38] sm:$0xff]
      %v2910 = vld [vmem:[%s538 + $0x48] sm:$0xff]
      %v2911 = vld [vmem:[%s538 + $0x50] sm:$0xff]
      %v2912 = vld [vmem:[%s538 + $0x60] sm:$0xff]
      %v2913 = vld [vmem:[%s538 + $0x68] sm:$0xff]
      %v2914 = vld [vmem:[%s538 + $0x78] sm:$0xff]
      %v2915 = vld [vmem:[%s538 + $0x80] sm:$0xff]
      %v2916 = vld [vmem:[%s538 + $0x90] sm:$0xff]
      %v2917 = vld [vmem:[%s538 + $0x98] sm:$0xff]
      %v2918 = vld [vmem:[%s538 + $0xa8] sm:$0xff]
      %v2919 = vld [vmem:[%s538 + $0xb0] sm:$0xff]
      %v2920 = vld [vmem:[%s538 + $0xc0] sm:$0xff]
      %v2921 = vld [vmem:[%s538 + $0xc8] sm:$0xff]
      %v2922 = vld [vmem:[%s538 + $0xd8] sm:$0xff]
      %v2923 = vld [vmem:[%s538 + $0xe0] sm:$0xff]
      %v2924 = vld [vmem:[%s538 + $0xf0] sm:$0xff]
      %v2925 = vld [vmem:[%s538 + $0xf8] sm:$0xff]
      %v2926 = vld [vmem:[%s538 + $0x108] sm:$0xff]
      %v2927 = vld [vmem:[%s538 + $0x110] sm:$0xff]
      %v2928 = vld [vmem:[%s538 + $0x120] sm:$0xff]
      %v2929 = vld [vmem:[%s538 + $0x128] sm:$0xff]
      %v2930 = vld [vmem:[%s538 + $0x138] sm:$0xff]
      %v2931 = vld [vmem:[%s538 + $0x140] sm:$0xff]
      %v2932 = vld [vmem:[%s538 + $0x150] sm:$0xff]
      %v2933 = vld [vmem:[%s538 + $0x158] sm:$0xff]
      %v2934 = vld [vmem:[%s538 + $0x168] sm:$0xff]
      %v2935 = vld [vmem:[%s538 + $0x170] sm:$0xff]
      %v2936 = vld [vmem:[%s538 + $0x1] sm:$0xff]
      %v2937 = vld [vmem:[%s538 + $0x9] sm:$0xff]
      %v2938 = vld [vmem:[%s538 + $0x19] sm:$0xff]
      %v2939 = vld [vmem:[%s538 + $0x21] sm:$0xff]
      %v2940 = vld [vmem:[%s538 + $0x31] sm:$0xff]
      %v2941 = vld [vmem:[%s538 + $0x39] sm:$0xff]
      %v2942 = vld [vmem:[%s538 + $0x49] sm:$0xff]
      %v2943 = vld [vmem:[%s538 + $0x51] sm:$0xff]
      %v2944 = vld [vmem:[%s538 + $0x61] sm:$0xff]
      %v2945 = vld [vmem:[%s538 + $0x69] sm:$0xff]
      %v2946 = vld [vmem:[%s538 + $0x79] sm:$0xff]
      %v2947 = vld [vmem:[%s538 + $0x81] sm:$0xff]
      %v2948 = vld [vmem:[%s538 + $0x91] sm:$0xff]
      %v2949 = vld [vmem:[%s538 + $0x99] sm:$0xff]
      %v2950 = vld [vmem:[%s538 + $0xa9] sm:$0xff]
      %v2951 = vld [vmem:[%s538 + $0xb1] sm:$0xff]
      %v2952 = vld [vmem:[%s538 + $0xc1] sm:$0xff]
      %v2953 = vld [vmem:[%s538 + $0xc9] sm:$0xff]
      %v2954 = vld [vmem:[%s538 + $0xd9] sm:$0xff]
      %v2955 = vld [vmem:[%s538 + $0xe1] sm:$0xff]
      %v2956 = vld [vmem:[%s538 + $0xf1] sm:$0xff]
      %v2957 = vld [vmem:[%s538 + $0xf9] sm:$0xff]
      %v2958 = vld [vmem:[%s538 + $0x109] sm:$0xff]
      %v2959 = vld [vmem:[%s538 + $0x111] sm:$0xff]
      %v2960 = vld [vmem:[%s538 + $0x121] sm:$0xff]
      %v2961 = vld [vmem:[%s538 + $0x129] sm:$0xff]
      %v2962 = vld [vmem:[%s538 + $0x139] sm:$0xff]
      %v2963 = vld [vmem:[%s538 + $0x141] sm:$0xff]
      %v2964 = vld [vmem:[%s538 + $0x151] sm:$0xff]
      %v2965 = vld [vmem:[%s538 + $0x159] sm:$0xff]
      %v2966 = vld [vmem:[%s538 + $0x169] sm:$0xff]
      %v2967 = vld [vmem:[%s538 + $0x171] sm:$0xff]
      %v2968 = vld [vmem:[%s538 + $0x2] sm:$0xff]
      %v2969 = vld [vmem:[%s538 + $0xa] sm:$0xff]
      %v2970 = vld [vmem:[%s538 + $0x1a] sm:$0xff]
      %v2971 = vld [vmem:[%s538 + $0x22] sm:$0xff]
      %v2972 = vld [vmem:[%s538 + $0x32] sm:$0xff]
      %v2973 = vld [vmem:[%s538 + $0x3a] sm:$0xff]
      %v2974 = vld [vmem:[%s538 + $0x4a] sm:$0xff]
      %v2975 = vld [vmem:[%s538 + $0x52] sm:$0xff]
      %v2976 = vld [vmem:[%s538 + $0x62] sm:$0xff]
      %v2977 = vld [vmem:[%s538 + $0x6a] sm:$0xff]
      %v2978 = vld [vmem:[%s538 + $0x7a] sm:$0xff]
      %v2979 = vld [vmem:[%s538 + $0x82] sm:$0xff]
      %v2980 = vld [vmem:[%s538 + $0x92] sm:$0xff]
      %v2981 = vld [vmem:[%s538 + $0x9a] sm:$0xff]
      %v2982 = vld [vmem:[%s538 + $0xaa] sm:$0xff]
      %v2983 = vld [vmem:[%s538 + $0xb2] sm:$0xff]
      %v2984 = vld [vmem:[%s538 + $0xc2] sm:$0xff]
      %v2985 = vld [vmem:[%s538 + $0xca] sm:$0xff]
      %v2986 = vld [vmem:[%s538 + $0xda] sm:$0xff]
      %v2987 = vld [vmem:[%s538 + $0xe2] sm:$0xff]
      %v2988 = vld [vmem:[%s538 + $0xf2] sm:$0xff]
      %v2989 = vld [vmem:[%s538 + $0xfa] sm:$0xff]
      %v2990 = vld [vmem:[%s538 + $0x10a] sm:$0xff]
      %v2991 = vld [vmem:[%s538 + $0x112] sm:$0xff]
      %v2992 = vld [vmem:[%s538 + $0x122] sm:$0xff]
      %v2993 = vld [vmem:[%s538 + $0x12a] sm:$0xff]
      %v2994 = vld [vmem:[%s538 + $0x13a] sm:$0xff]
      %v2995 = vld [vmem:[%s538 + $0x142] sm:$0xff]
      %v2996 = vld [vmem:[%s538 + $0x152] sm:$0xff]
      %v2997 = vld [vmem:[%s538 + $0x15a] sm:$0xff]
      %v2998 = vld [vmem:[%s538 + $0x16a] sm:$0xff]
      %v2999 = vld [vmem:[%s538 + $0x172] sm:$0xff]
      %v3000 = vld [vmem:[%s763] sm:$0xff]
      %v3001 = vld [vmem:[%s763 + $0x8] sm:$0xff]
      %v3002 = vld [vmem:[%s763 + $0x18] sm:$0xff]
      %v3003 = vld [vmem:[%s763 + $0x20] sm:$0xff]
      %v3004 = vld [vmem:[%s763 + $0x30] sm:$0xff]
      %v3005 = vld [vmem:[%s763 + $0x38] sm:$0xff]
      %v3006 = vld [vmem:[%s763 + $0x48] sm:$0xff]
      %v3007 = vld [vmem:[%s763 + $0x50] sm:$0xff]
      %v3008 = vld [vmem:[%s763 + $0x60] sm:$0xff]
      %v3009 = vld [vmem:[%s763 + $0x68] sm:$0xff]
      %v3010 = vld [vmem:[%s763 + $0x78] sm:$0xff]
      %v3011 = vld [vmem:[%s763 + $0x80] sm:$0xff]
      %v3012 = vld [vmem:[%s763 + $0x90] sm:$0xff]
      %v3013 = vld [vmem:[%s763 + $0x98] sm:$0xff]
      %v3014 = vld [vmem:[%s763 + $0xa8] sm:$0xff]
      %v3015 = vld [vmem:[%s763 + $0xb0] sm:$0xff]
      %v3016 = vld [vmem:[%s763 + $0xc0] sm:$0xff]
      %v3017 = vld [vmem:[%s763 + $0xc8] sm:$0xff]
      %v3018 = vld [vmem:[%s763 + $0xd8] sm:$0xff]
      %v3019 = vld [vmem:[%s763 + $0xe0] sm:$0xff]
      %v3020 = vld [vmem:[%s763 + $0xf0] sm:$0xff]
      %v3021 = vld [vmem:[%s763 + $0xf8] sm:$0xff]
      %v3022 = vld [vmem:[%s763 + $0x108] sm:$0xff]
      %v3023 = vld [vmem:[%s763 + $0x110] sm:$0xff]
      %v3024 = vld [vmem:[%s763 + $0x120] sm:$0xff]
      %v3025 = vld [vmem:[%s763 + $0x128] sm:$0xff]
      %v3026 = vld [vmem:[%s763 + $0x138] sm:$0xff]
      %v3027 = vld [vmem:[%s763 + $0x140] sm:$0xff]
      %v3028 = vld [vmem:[%s763 + $0x150] sm:$0xff]
      %v3029 = vld [vmem:[%s763 + $0x158] sm:$0xff]
      %v3030 = vld [vmem:[%s763 + $0x168] sm:$0xff]
      %v3031 = vld [vmem:[%s763 + $0x170] sm:$0xff]
      %v3032 = vld [vmem:[%s763 + $0x1] sm:$0xff]
      %v3033 = vld [vmem:[%s763 + $0x9] sm:$0xff]
      %v3034 = vld [vmem:[%s763 + $0x19] sm:$0xff]
      %v3035 = vld [vmem:[%s763 + $0x21] sm:$0xff]
      %v3036 = vld [vmem:[%s763 + $0x31] sm:$0xff]
      %v3037 = vld [vmem:[%s763 + $0x39] sm:$0xff]
      %v3038 = vld [vmem:[%s763 + $0x49] sm:$0xff]
      %v3039 = vld [vmem:[%s763 + $0x51] sm:$0xff]
      %v3040 = vld [vmem:[%s763 + $0x61] sm:$0xff]
      %v3041 = vld [vmem:[%s763 + $0x69] sm:$0xff]
      %v3042 = vld [vmem:[%s763 + $0x79] sm:$0xff]
      %v3043 = vld [vmem:[%s763 + $0x81] sm:$0xff]
      %v3044 = vld [vmem:[%s763 + $0x91] sm:$0xff]
      %v3045 = vld [vmem:[%s763 + $0x99] sm:$0xff]
      %v3046 = vld [vmem:[%s763 + $0xa9] sm:$0xff]
      %v3047 = vld [vmem:[%s763 + $0xb1] sm:$0xff]
      %v3048 = vld [vmem:[%s763 + $0xc1] sm:$0xff]
      %v3049 = vld [vmem:[%s763 + $0xc9] sm:$0xff]
      %v3050 = vld [vmem:[%s763 + $0xd9] sm:$0xff]
      %v3051 = vld [vmem:[%s763 + $0xe1] sm:$0xff]
      %v3052 = vld [vmem:[%s763 + $0xf1] sm:$0xff]
      %v3053 = vld [vmem:[%s763 + $0xf9] sm:$0xff]
      %v3054 = vld [vmem:[%s763 + $0x109] sm:$0xff]
      %v3055 = vld [vmem:[%s763 + $0x111] sm:$0xff]
      %v3056 = vld [vmem:[%s763 + $0x121] sm:$0xff]
      %v3057 = vld [vmem:[%s763 + $0x129] sm:$0xff]
      %v3058 = vld [vmem:[%s763 + $0x139] sm:$0xff]
      %v3059 = vld [vmem:[%s763 + $0x141] sm:$0xff]
      %v3060 = vld [vmem:[%s763 + $0x151] sm:$0xff]
      %v3061 = vld [vmem:[%s763 + $0x159] sm:$0xff]
      %v3062 = vld [vmem:[%s763 + $0x169] sm:$0xff]
      %v3063 = vld [vmem:[%s763 + $0x171] sm:$0xff]
      %v3064 = vld [vmem:[%s763 + $0x2] sm:$0xff]
      %v3065 = vld [vmem:[%s763 + $0xa] sm:$0xff]
      %v3066 = vld [vmem:[%s763 + $0x1a] sm:$0xff]
      %v3067 = vld [vmem:[%s763 + $0x22] sm:$0xff]
      %v3068 = vld [vmem:[%s763 + $0x32] sm:$0xff]
      %v3069 = vld [vmem:[%s763 + $0x3a] sm:$0xff]
      %v3070 = vld [vmem:[%s763 + $0x4a] sm:$0xff]
      %v3071 = vld [vmem:[%s763 + $0x52] sm:$0xff]
      %v3072 = vld [vmem:[%s763 + $0x62] sm:$0xff]
      %v3073 = vld [vmem:[%s763 + $0x6a] sm:$0xff]
      %v3074 = vld [vmem:[%s763 + $0x7a] sm:$0xff]
      %v3075 = vld [vmem:[%s763 + $0x82] sm:$0xff]
      %v3076 = vld [vmem:[%s763 + $0x92] sm:$0xff]
      %v3077 = vld [vmem:[%s763 + $0x9a] sm:$0xff]
      %v3078 = vld [vmem:[%s763 + $0xaa] sm:$0xff]
      %v3079 = vld [vmem:[%s763 + $0xb2] sm:$0xff]
      %v3080 = vld [vmem:[%s763 + $0xc2] sm:$0xff]
      %v3081 = vld [vmem:[%s763 + $0xca] sm:$0xff]
      %v3082 = vld [vmem:[%s763 + $0xda] sm:$0xff]
      %v3083 = vld [vmem:[%s763 + $0xe2] sm:$0xff]
      %v3084 = vld [vmem:[%s763 + $0xf2] sm:$0xff]
      %v3085 = vld [vmem:[%s763 + $0xfa] sm:$0xff]
      %v3086 = vld [vmem:[%s763 + $0x10a] sm:$0xff]
      %v3087 = vld [vmem:[%s763 + $0x112] sm:$0xff]
      %v3088 = vld [vmem:[%s763 + $0x122] sm:$0xff]
      %v3089 = vld [vmem:[%s763 + $0x12a] sm:$0xff]
      %v3090 = vld [vmem:[%s763 + $0x13a] sm:$0xff]
      %v3091 = vld [vmem:[%s763 + $0x142] sm:$0xff]
      %v3092 = vld [vmem:[%s763 + $0x152] sm:$0xff]
      %v3093 = vld [vmem:[%s763 + $0x15a] sm:$0xff]
      %v3094 = vld [vmem:[%s763 + $0x16a] sm:$0xff]
      %v3095 = vld [vmem:[%s763 + $0x172] sm:$0xff]
      %3128 = vrot.lane.b32.xlu0 %v2840, 12
      %v3129 = vpop.permute.xlu0 %3128
      %3130 = vrot.lane.b32.xlu0 %v2841, 12
      %v3131 = vpop.permute.xlu0 %3130
      %3132 = vrot.lane.b32.xlu0 %v2842, 12
      %v3133 = vpop.permute.xlu0 %3132
      %3134 = vrot.lane.b32.xlu0 %v2843, 12
      %v3135 = vpop.permute.xlu0 %3134
      %3136 = vrot.lane.b32.xlu0 %v2844, 12
      %v3137 = vpop.permute.xlu0 %3136
      %3138 = vrot.lane.b32.xlu0 %v2845, 12
      %v3139 = vpop.permute.xlu0 %3138
      %3140 = vrot.lane.b32.xlu0 %v2846, 12
      %v3141 = vpop.permute.xlu0 %3140
      %3142 = vrot.lane.b32.xlu0 %v2847, 12
      %v3143 = vpop.permute.xlu0 %3142
      %3144 = vrot.lane.b32.xlu0 %v2848, 12
      %v3145 = vpop.permute.xlu0 %3144
      %3146 = vrot.lane.b32.xlu0 %v2849, 12
      %v3147 = vpop.permute.xlu0 %3146
      %3148 = vrot.lane.b32.xlu0 %v2850, 12
      %v3149 = vpop.permute.xlu0 %3148
      %3150 = vrot.lane.b32.xlu0 %v2851, 12
      %v3151 = vpop.permute.xlu0 %3150
      %3152 = vrot.lane.b32.xlu0 %v2852, 12
      %v3153 = vpop.permute.xlu0 %3152
      %3154 = vrot.lane.b32.xlu0 %v2853, 12
      %v3155 = vpop.permute.xlu0 %3154
      %3156 = vrot.lane.b32.xlu0 %v2854, 12
      %v3157 = vpop.permute.xlu0 %3156
      %3158 = vrot.lane.b32.xlu0 %v2855, 12
      %v3159 = vpop.permute.xlu0 %3158
      %3160 = vrot.lane.b32.xlu0 %v2856, 12
      %v3161 = vpop.permute.xlu0 %3160
      %3162 = vrot.lane.b32.xlu0 %v2857, 12
      %v3163 = vpop.permute.xlu0 %3162
      %3164 = vrot.lane.b32.xlu0 %v2858, 12
      %v3165 = vpop.permute.xlu0 %3164
      %3166 = vrot.lane.b32.xlu0 %v2859, 12
      %v3167 = vpop.permute.xlu0 %3166
      %3168 = vrot.lane.b32.xlu0 %v2860, 12
      %v3169 = vpop.permute.xlu0 %3168
      %3170 = vrot.lane.b32.xlu0 %v2861, 12
      %v3171 = vpop.permute.xlu0 %3170
      %3172 = vrot.lane.b32.xlu0 %v2862, 12
      %v3173 = vpop.permute.xlu0 %3172
      %3174 = vrot.lane.b32.xlu0 %v2863, 12
      %v3175 = vpop.permute.xlu0 %3174
      %3176 = vrot.lane.b32.xlu0 %v2864, 12
      %v3177 = vpop.permute.xlu0 %3176
      %3178 = vrot.lane.b32.xlu0 %v2865, 12
      %v3179 = vpop.permute.xlu0 %3178
      %3180 = vrot.lane.b32.xlu0 %v2866, 12
      %v3181 = vpop.permute.xlu0 %3180
      %3182 = vrot.lane.b32.xlu0 %v2867, 12
      %v3183 = vpop.permute.xlu0 %3182
      %3184 = vrot.lane.b32.xlu0 %v2868, 12
      %v3185 = vpop.permute.xlu0 %3184
      %3186 = vrot.lane.b32.xlu0 %v2869, 12
      %v3187 = vpop.permute.xlu0 %3186
      %3188 = vrot.lane.b32.xlu0 %v2870, 12
      %v3189 = vpop.permute.xlu0 %3188
      %3190 = vrot.lane.b32.xlu0 %v2871, 12
      %v3191 = vpop.permute.xlu0 %3190
      %3256 = vrot.lane.b32.xlu0 %v2872, 24
      %v3257 = vpop.permute.xlu0 %3256
      %3258 = vrot.lane.b32.xlu0 %v2873, 24
      %v3259 = vpop.permute.xlu0 %3258
      %3260 = vrot.lane.b32.xlu0 %v2874, 24
      %v3261 = vpop.permute.xlu0 %3260
      %3262 = vrot.lane.b32.xlu0 %v2875, 24
      %v3263 = vpop.permute.xlu0 %3262
      %3264 = vrot.lane.b32.xlu0 %v2876, 24
      %v3265 = vpop.permute.xlu0 %3264
      %3266 = vrot.lane.b32.xlu0 %v2877, 24
      %v3267 = vpop.permute.xlu0 %3266
      %3268 = vrot.lane.b32.xlu0 %v2878, 24
      %v3269 = vpop.permute.xlu0 %3268
      %3270 = vrot.lane.b32.xlu0 %v2879, 24
      %v3271 = vpop.permute.xlu0 %3270
      %3272 = vrot.lane.b32.xlu0 %v2880, 24
      %v3273 = vpop.permute.xlu0 %3272
      %3274 = vrot.lane.b32.xlu0 %v2881, 24
      %v3275 = vpop.permute.xlu0 %3274
      %3276 = vrot.lane.b32.xlu0 %v2882, 24
      %v3277 = vpop.permute.xlu0 %3276
      %3278 = vrot.lane.b32.xlu0 %v2883, 24
      %v3279 = vpop.permute.xlu0 %3278
      %3280 = vrot.lane.b32.xlu0 %v2884, 24
      %v3281 = vpop.permute.xlu0 %3280
      %3282 = vrot.lane.b32.xlu0 %v2885, 24
      %v3283 = vpop.permute.xlu0 %3282
      %3284 = vrot.lane.b32.xlu0 %v2886, 24
      %v3285 = vpop.permute.xlu0 %3284
      %3286 = vrot.lane.b32.xlu0 %v2887, 24
      %v3287 = vpop.permute.xlu0 %3286
      %3288 = vrot.lane.b32.xlu0 %v2888, 24
      %v3289 = vpop.permute.xlu0 %3288
      %3290 = vrot.lane.b32.xlu0 %v2889, 24
      %v3291 = vpop.permute.xlu0 %3290
      %3292 = vrot.lane.b32.xlu0 %v2890, 24
      %v3293 = vpop.permute.xlu0 %3292
      %3294 = vrot.lane.b32.xlu0 %v2891, 24
      %v3295 = vpop.permute.xlu0 %3294
      %3296 = vrot.lane.b32.xlu0 %v2892, 24
      %v3297 = vpop.permute.xlu0 %3296
      %3298 = vrot.lane.b32.xlu0 %v2893, 24
      %v3299 = vpop.permute.xlu0 %3298
      %3300 = vrot.lane.b32.xlu0 %v2894, 24
      %v3301 = vpop.permute.xlu0 %3300
      %3302 = vrot.lane.b32.xlu0 %v2895, 24
      %v3303 = vpop.permute.xlu0 %3302
      %3304 = vrot.lane.b32.xlu0 %v2896, 24
      %v3305 = vpop.permute.xlu0 %3304
      %3306 = vrot.lane.b32.xlu0 %v2897, 24
      %v3307 = vpop.permute.xlu0 %3306
      %3308 = vrot.lane.b32.xlu0 %v2898, 24
      %v3309 = vpop.permute.xlu0 %3308
      %3310 = vrot.lane.b32.xlu0 %v2899, 24
      %v3311 = vpop.permute.xlu0 %3310
      %3312 = vrot.lane.b32.xlu0 %v2900, 24
      %v3313 = vpop.permute.xlu0 %3312
      %3314 = vrot.lane.b32.xlu0 %v2901, 24
      %v3315 = vpop.permute.xlu0 %3314
      %3316 = vrot.lane.b32.xlu0 %v2902, 24
      %v3317 = vpop.permute.xlu0 %3316
      %3318 = vrot.lane.b32.xlu0 %v2903, 24
      %v3319 = vpop.permute.xlu0 %3318
      %3384 = vrot.lane.b32.xlu0 %v2904, 36
      %v3385 = vpop.permute.xlu0 %3384
      %3386 = vrot.lane.b32.xlu0 %v2905, 36
      %v3387 = vpop.permute.xlu0 %3386
      %3388 = vrot.lane.b32.xlu0 %v2906, 36
      %v3389 = vpop.permute.xlu0 %3388
      %3390 = vrot.lane.b32.xlu0 %v2907, 36
      %v3391 = vpop.permute.xlu0 %3390
      %3392 = vrot.lane.b32.xlu0 %v2908, 36
      %v3393 = vpop.permute.xlu0 %3392
      %3394 = vrot.lane.b32.xlu0 %v2909, 36
      %v3395 = vpop.permute.xlu0 %3394
      %3396 = vrot.lane.b32.xlu0 %v2910, 36
      %v3397 = vpop.permute.xlu0 %3396
      %3398 = vrot.lane.b32.xlu0 %v2911, 36
      %v3399 = vpop.permute.xlu0 %3398
      %3400 = vrot.lane.b32.xlu0 %v2912, 36
      %v3401 = vpop.permute.xlu0 %3400
      %3402 = vrot.lane.b32.xlu0 %v2913, 36
      %v3403 = vpop.permute.xlu0 %3402
      %3404 = vrot.lane.b32.xlu0 %v2914, 36
      %v3405 = vpop.permute.xlu0 %3404
      %3406 = vrot.lane.b32.xlu0 %v2915, 36
      %v3407 = vpop.permute.xlu0 %3406
      %3408 = vrot.lane.b32.xlu0 %v2916, 36
      %v3409 = vpop.permute.xlu0 %3408
      %3410 = vrot.lane.b32.xlu0 %v2917, 36
      %v3411 = vpop.permute.xlu0 %3410
      %3412 = vrot.lane.b32.xlu0 %v2918, 36
      %v3413 = vpop.permute.xlu0 %3412
      %3414 = vrot.lane.b32.xlu0 %v2919, 36
      %v3415 = vpop.permute.xlu0 %3414
      %3416 = vrot.lane.b32.xlu0 %v2920, 36
      %v3417 = vpop.permute.xlu0 %3416
      %3418 = vrot.lane.b32.xlu0 %v2921, 36
      %v3419 = vpop.permute.xlu0 %3418
      %3420 = vrot.lane.b32.xlu0 %v2922, 36
      %v3421 = vpop.permute.xlu0 %3420
      %3422 = vrot.lane.b32.xlu0 %v2923, 36
      %v3423 = vpop.permute.xlu0 %3422
      %3424 = vrot.lane.b32.xlu0 %v2924, 36
      %v3425 = vpop.permute.xlu0 %3424
      %3426 = vrot.lane.b32.xlu0 %v2925, 36
      %v3427 = vpop.permute.xlu0 %3426
      %3428 = vrot.lane.b32.xlu0 %v2926, 36
      %v3429 = vpop.permute.xlu0 %3428
      %3430 = vrot.lane.b32.xlu0 %v2927, 36
      %v3431 = vpop.permute.xlu0 %3430
      %3432 = vrot.lane.b32.xlu0 %v2928, 36
      %v3433 = vpop.permute.xlu0 %3432
      %3434 = vrot.lane.b32.xlu0 %v2929, 36
      %v3435 = vpop.permute.xlu0 %3434
      %3436 = vrot.lane.b32.xlu0 %v2930, 36
      %v3437 = vpop.permute.xlu0 %3436
      %3438 = vrot.lane.b32.xlu0 %v2931, 36
      %v3439 = vpop.permute.xlu0 %3438
      %3440 = vrot.lane.b32.xlu0 %v2932, 36
      %v3441 = vpop.permute.xlu0 %3440
      %3442 = vrot.lane.b32.xlu0 %v2933, 36
      %v3443 = vpop.permute.xlu0 %3442
      %3444 = vrot.lane.b32.xlu0 %v2934, 36
      %v3445 = vpop.permute.xlu0 %3444
      %3446 = vrot.lane.b32.xlu0 %v2935, 36
      %v3447 = vpop.permute.xlu0 %3446
      %3512 = vrot.lane.b32.xlu0 %v2936, 48
      %v3513 = vpop.permute.xlu0 %3512
      %3514 = vrot.lane.b32.xlu0 %v2937, 48
      %v3515 = vpop.permute.xlu0 %3514
      %3516 = vrot.lane.b32.xlu0 %v2938, 48
      %v3517 = vpop.permute.xlu0 %3516
      %3518 = vrot.lane.b32.xlu0 %v2939, 48
      %v3519 = vpop.permute.xlu0 %3518
      %3520 = vrot.lane.b32.xlu0 %v2940, 48
      %v3521 = vpop.permute.xlu0 %3520
      %3522 = vrot.lane.b32.xlu0 %v2941, 48
      %v3523 = vpop.permute.xlu0 %3522
      %3524 = vrot.lane.b32.xlu0 %v2942, 48
      %v3525 = vpop.permute.xlu0 %3524
      %3526 = vrot.lane.b32.xlu0 %v2943, 48
      %v3527 = vpop.permute.xlu0 %3526
      %3528 = vrot.lane.b32.xlu0 %v2944, 48
      %v3529 = vpop.permute.xlu0 %3528
      %3530 = vrot.lane.b32.xlu0 %v2945, 48
      %v3531 = vpop.permute.xlu0 %3530
      %3532 = vrot.lane.b32.xlu0 %v2946, 48
      %v3533 = vpop.permute.xlu0 %3532
      %3534 = vrot.lane.b32.xlu0 %v2947, 48
      %v3535 = vpop.permute.xlu0 %3534
      %3536 = vrot.lane.b32.xlu0 %v2948, 48
      %v3537 = vpop.permute.xlu0 %3536
      %3538 = vrot.lane.b32.xlu0 %v2949, 48
      %v3539 = vpop.permute.xlu0 %3538
      %3540 = vrot.lane.b32.xlu0 %v2950, 48
      %v3541 = vpop.permute.xlu0 %3540
      %3542 = vrot.lane.b32.xlu0 %v2951, 48
      %v3543 = vpop.permute.xlu0 %3542
      %3544 = vrot.lane.b32.xlu0 %v2952, 48
      %v3545 = vpop.permute.xlu0 %3544
      %3546 = vrot.lane.b32.xlu0 %v2953, 48
      %v3547 = vpop.permute.xlu0 %3546
      %3548 = vrot.lane.b32.xlu0 %v2954, 48
      %v3549 = vpop.permute.xlu0 %3548
      %3550 = vrot.lane.b32.xlu0 %v2955, 48
      %v3551 = vpop.permute.xlu0 %3550
      %3552 = vrot.lane.b32.xlu0 %v2956, 48
      %v3553 = vpop.permute.xlu0 %3552
      %3554 = vrot.lane.b32.xlu0 %v2957, 48
      %v3555 = vpop.permute.xlu0 %3554
      %3556 = vrot.lane.b32.xlu0 %v2958, 48
      %v3557 = vpop.permute.xlu0 %3556
      %3558 = vrot.lane.b32.xlu0 %v2959, 48
      %v3559 = vpop.permute.xlu0 %3558
      %3560 = vrot.lane.b32.xlu0 %v2960, 48
      %v3561 = vpop.permute.xlu0 %3560
      %3562 = vrot.lane.b32.xlu0 %v2961, 48
      %v3563 = vpop.permute.xlu0 %3562
      %3564 = vrot.lane.b32.xlu0 %v2962, 48
      %v3565 = vpop.permute.xlu0 %3564
      %3566 = vrot.lane.b32.xlu0 %v2963, 48
      %v3567 = vpop.permute.xlu0 %3566
      %3568 = vrot.lane.b32.xlu0 %v2964, 48
      %v3569 = vpop.permute.xlu0 %3568
      %3570 = vrot.lane.b32.xlu0 %v2965, 48
      %v3571 = vpop.permute.xlu0 %3570
      %3572 = vrot.lane.b32.xlu0 %v2966, 48
      %v3573 = vpop.permute.xlu0 %3572
      %3574 = vrot.lane.b32.xlu0 %v2967, 48
      %v3575 = vpop.permute.xlu0 %3574
      %3640 = vrot.lane.b32.xlu0 %v2968, 60
      %v3641 = vpop.permute.xlu0 %3640
      %3642 = vrot.lane.b32.xlu0 %v2969, 60
      %v3643 = vpop.permute.xlu0 %3642
      %3644 = vrot.lane.b32.xlu0 %v2970, 60
      %v3645 = vpop.permute.xlu0 %3644
      %3646 = vrot.lane.b32.xlu0 %v2971, 60
      %v3647 = vpop.permute.xlu0 %3646
      %3648 = vrot.lane.b32.xlu0 %v2972, 60
      %v3649 = vpop.permute.xlu0 %3648
      %3650 = vrot.lane.b32.xlu0 %v2973, 60
      %v3651 = vpop.permute.xlu0 %3650
      %3652 = vrot.lane.b32.xlu0 %v2974, 60
      %v3653 = vpop.permute.xlu0 %3652
      %3654 = vrot.lane.b32.xlu0 %v2975, 60
      %v3655 = vpop.permute.xlu0 %3654
      %3656 = vrot.lane.b32.xlu0 %v2976, 60
      %v3657 = vpop.permute.xlu0 %3656
      %3658 = vrot.lane.b32.xlu0 %v2977, 60
      %v3659 = vpop.permute.xlu0 %3658
      %3660 = vrot.lane.b32.xlu0 %v2978, 60
      %v3661 = vpop.permute.xlu0 %3660
      %3662 = vrot.lane.b32.xlu0 %v2979, 60
      %v3663 = vpop.permute.xlu0 %3662
      %3664 = vrot.lane.b32.xlu0 %v2980, 60
      %v3665 = vpop.permute.xlu0 %3664
      %3666 = vrot.lane.b32.xlu0 %v2981, 60
      %v3667 = vpop.permute.xlu0 %3666
      %3668 = vrot.lane.b32.xlu0 %v2982, 60
      %v3669 = vpop.permute.xlu0 %3668
      %3670 = vrot.lane.b32.xlu0 %v2983, 60
      %v3671 = vpop.permute.xlu0 %3670
      %3672 = vrot.lane.b32.xlu0 %v2984, 60
      %v3673 = vpop.permute.xlu0 %3672
      %3674 = vrot.lane.b32.xlu0 %v2985, 60
      %v3675 = vpop.permute.xlu0 %3674
      %3676 = vrot.lane.b32.xlu0 %v2986, 60
      %v3677 = vpop.permute.xlu0 %3676
      %3678 = vrot.lane.b32.xlu0 %v2987, 60
      %v3679 = vpop.permute.xlu0 %3678
      %3680 = vrot.lane.b32.xlu0 %v2988, 60
      %v3681 = vpop.permute.xlu0 %3680
      %3682 = vrot.lane.b32.xlu0 %v2989, 60
      %v3683 = vpop.permute.xlu0 %3682
      %3684 = vrot.lane.b32.xlu0 %v2990, 60
      %v3685 = vpop.permute.xlu0 %3684
      %3686 = vrot.lane.b32.xlu0 %v2991, 60
      %v3687 = vpop.permute.xlu0 %3686
      %3688 = vrot.lane.b32.xlu0 %v2992, 60
      %v3689 = vpop.permute.xlu0 %3688
      %3690 = vrot.lane.b32.xlu0 %v2993, 60
      %v3691 = vpop.permute.xlu0 %3690
      %3692 = vrot.lane.b32.xlu0 %v2994, 60
      %v3693 = vpop.permute.xlu0 %3692
      %3694 = vrot.lane.b32.xlu0 %v2995, 60
      %v3695 = vpop.permute.xlu0 %3694
      %3696 = vrot.lane.b32.xlu0 %v2996, 60
      %v3697 = vpop.permute.xlu0 %3696
      %3698 = vrot.lane.b32.xlu0 %v2997, 60
      %v3699 = vpop.permute.xlu0 %3698
      %3700 = vrot.lane.b32.xlu0 %v2998, 60
      %v3701 = vpop.permute.xlu0 %3700
      %3702 = vrot.lane.b32.xlu0 %v2999, 60
      %v3703 = vpop.permute.xlu0 %3702
      %3768 = vrot.lane.b32.xlu0 %v3000, 72
      %v3769 = vpop.permute.xlu0 %3768
      %3770 = vrot.lane.b32.xlu0 %v3001, 72
      %v3771 = vpop.permute.xlu0 %3770
      %3772 = vrot.lane.b32.xlu0 %v3002, 72
      %v3773 = vpop.permute.xlu0 %3772
      %3774 = vrot.lane.b32.xlu0 %v3003, 72
      %v3775 = vpop.permute.xlu0 %3774
      %3776 = vrot.lane.b32.xlu0 %v3004, 72
      %v3777 = vpop.permute.xlu0 %3776
      %3778 = vrot.lane.b32.xlu0 %v3005, 72
      %v3779 = vpop.permute.xlu0 %3778
      %3780 = vrot.lane.b32.xlu0 %v3006, 72
      %v3781 = vpop.permute.xlu0 %3780
      %3782 = vrot.lane.b32.xlu0 %v3007, 72
      %v3783 = vpop.permute.xlu0 %3782
      %3784 = vrot.lane.b32.xlu0 %v3008, 72
      %v3785 = vpop.permute.xlu0 %3784
      %3786 = vrot.lane.b32.xlu0 %v3009, 72
      %v3787 = vpop.permute.xlu0 %3786
      %3788 = vrot.lane.b32.xlu0 %v3010, 72
      %v3789 = vpop.permute.xlu0 %3788
      %3790 = vrot.lane.b32.xlu0 %v3011, 72
      %v3791 = vpop.permute.xlu0 %3790
      %3792 = vrot.lane.b32.xlu0 %v3012, 72
      %v3793 = vpop.permute.xlu0 %3792
      %3794 = vrot.lane.b32.xlu0 %v3013, 72
      %v3795 = vpop.permute.xlu0 %3794
      %3796 = vrot.lane.b32.xlu0 %v3014, 72
      %v3797 = vpop.permute.xlu0 %3796
      %3798 = vrot.lane.b32.xlu0 %v3015, 72
      %v3799 = vpop.permute.xlu0 %3798
      %3800 = vrot.lane.b32.xlu0 %v3016, 72
      %v3801 = vpop.permute.xlu0 %3800
      %3802 = vrot.lane.b32.xlu0 %v3017, 72
      %v3803 = vpop.permute.xlu0 %3802
      %3804 = vrot.lane.b32.xlu0 %v3018, 72
      %v3805 = vpop.permute.xlu0 %3804
      %3806 = vrot.lane.b32.xlu0 %v3019, 72
      %v3807 = vpop.permute.xlu0 %3806
      %3808 = vrot.lane.b32.xlu0 %v3020, 72
      %v3809 = vpop.permute.xlu0 %3808
      %3810 = vrot.lane.b32.xlu0 %v3021, 72
      %v3811 = vpop.permute.xlu0 %3810
      %3812 = vrot.lane.b32.xlu0 %v3022, 72
      %v3813 = vpop.permute.xlu0 %3812
      %3814 = vrot.lane.b32.xlu0 %v3023, 72
      %v3815 = vpop.permute.xlu0 %3814
      %3816 = vrot.lane.b32.xlu0 %v3024, 72
      %v3817 = vpop.permute.xlu0 %3816
      %3818 = vrot.lane.b32.xlu0 %v3025, 72
      %v3819 = vpop.permute.xlu0 %3818
      %3820 = vrot.lane.b32.xlu0 %v3026, 72
      %v3821 = vpop.permute.xlu0 %3820
      %3822 = vrot.lane.b32.xlu0 %v3027, 72
      %v3823 = vpop.permute.xlu0 %3822
      %3824 = vrot.lane.b32.xlu0 %v3028, 72
      %v3825 = vpop.permute.xlu0 %3824
      %3826 = vrot.lane.b32.xlu0 %v3029, 72
      %v3827 = vpop.permute.xlu0 %3826
      %3828 = vrot.lane.b32.xlu0 %v3030, 72
      %v3829 = vpop.permute.xlu0 %3828
      %3830 = vrot.lane.b32.xlu0 %v3031, 72
      %v3831 = vpop.permute.xlu0 %3830
      %3896 = vrot.lane.b32.xlu0 %v3032, 84
      %v3897 = vpop.permute.xlu0 %3896
      %3898 = vrot.lane.b32.xlu0 %v3033, 84
      %v3899 = vpop.permute.xlu0 %3898
      %3900 = vrot.lane.b32.xlu0 %v3034, 84
      %v3901 = vpop.permute.xlu0 %3900
      %3902 = vrot.lane.b32.xlu0 %v3035, 84
      %v3903 = vpop.permute.xlu0 %3902
      %3904 = vrot.lane.b32.xlu0 %v3036, 84
      %v3905 = vpop.permute.xlu0 %3904
      %3906 = vrot.lane.b32.xlu0 %v3037, 84
      %v3907 = vpop.permute.xlu0 %3906
      %3908 = vrot.lane.b32.xlu0 %v3038, 84
      %v3909 = vpop.permute.xlu0 %3908
      %3910 = vrot.lane.b32.xlu0 %v3039, 84
      %v3911 = vpop.permute.xlu0 %3910
      %3912 = vrot.lane.b32.xlu0 %v3040, 84
      %v3913 = vpop.permute.xlu0 %3912
      %3914 = vrot.lane.b32.xlu0 %v3041, 84
      %v3915 = vpop.permute.xlu0 %3914
      %3916 = vrot.lane.b32.xlu0 %v3042, 84
      %v3917 = vpop.permute.xlu0 %3916
      %3918 = vrot.lane.b32.xlu0 %v3043, 84
      %v3919 = vpop.permute.xlu0 %3918
      %3920 = vrot.lane.b32.xlu0 %v3044, 84
      %v3921 = vpop.permute.xlu0 %3920
      %3922 = vrot.lane.b32.xlu0 %v3045, 84
      %v3923 = vpop.permute.xlu0 %3922
      %3924 = vrot.lane.b32.xlu0 %v3046, 84
      %v3925 = vpop.permute.xlu0 %3924
      %3926 = vrot.lane.b32.xlu0 %v3047, 84
      %v3927 = vpop.permute.xlu0 %3926
      %3928 = vrot.lane.b32.xlu0 %v3048, 84
      %v3929 = vpop.permute.xlu0 %3928
      %3930 = vrot.lane.b32.xlu0 %v3049, 84
      %v3931 = vpop.permute.xlu0 %3930
      %3932 = vrot.lane.b32.xlu0 %v3050, 84
      %v3933 = vpop.permute.xlu0 %3932
      %3934 = vrot.lane.b32.xlu0 %v3051, 84
      %v3935 = vpop.permute.xlu0 %3934
      %3936 = vrot.lane.b32.xlu0 %v3052, 84
      %v3937 = vpop.permute.xlu0 %3936
      %3938 = vrot.lane.b32.xlu0 %v3053, 84
      %v3939 = vpop.permute.xlu0 %3938
      %3940 = vrot.lane.b32.xlu0 %v3054, 84
      %v3941 = vpop.permute.xlu0 %3940
      %3942 = vrot.lane.b32.xlu0 %v3055, 84
      %v3943 = vpop.permute.xlu0 %3942
      %3944 = vrot.lane.b32.xlu0 %v3056, 84
      %v3945 = vpop.permute.xlu0 %3944
      %3946 = vrot.lane.b32.xlu0 %v3057, 84
      %v3947 = vpop.permute.xlu0 %3946
      %3948 = vrot.lane.b32.xlu0 %v3058, 84
      %v3949 = vpop.permute.xlu0 %3948
      %3950 = vrot.lane.b32.xlu0 %v3059, 84
      %v3951 = vpop.permute.xlu0 %3950
      %3952 = vrot.lane.b32.xlu0 %v3060, 84
      %v3953 = vpop.permute.xlu0 %3952
      %3954 = vrot.lane.b32.xlu0 %v3061, 84
      %v3955 = vpop.permute.xlu0 %3954
      %3956 = vrot.lane.b32.xlu0 %v3062, 84
      %v3957 = vpop.permute.xlu0 %3956
      %3958 = vrot.lane.b32.xlu0 %v3063, 84
      %v3959 = vpop.permute.xlu0 %3958
      %4024 = vrot.lane.b32.xlu0 %v3064, 96
      %v4025 = vpop.permute.xlu0 %4024
      %4026 = vrot.lane.b32.xlu0 %v3065, 96
      %v4027 = vpop.permute.xlu0 %4026
      %4028 = vrot.lane.b32.xlu0 %v3066, 96
      %v4029 = vpop.permute.xlu0 %4028
      %4030 = vrot.lane.b32.xlu0 %v3067, 96
      %v4031 = vpop.permute.xlu0 %4030
      %4032 = vrot.lane.b32.xlu0 %v3068, 96
      %v4033 = vpop.permute.xlu0 %4032
      %4034 = vrot.lane.b32.xlu0 %v3069, 96
      %v4035 = vpop.permute.xlu0 %4034
      %4036 = vrot.lane.b32.xlu0 %v3070, 96
      %v4037 = vpop.permute.xlu0 %4036
      %4038 = vrot.lane.b32.xlu0 %v3071, 96
      %v4039 = vpop.permute.xlu0 %4038
      %4040 = vrot.lane.b32.xlu0 %v3072, 96
      %v4041 = vpop.permute.xlu0 %4040
      %4042 = vrot.lane.b32.xlu0 %v3073, 96
      %v4043 = vpop.permute.xlu0 %4042
      %4044 = vrot.lane.b32.xlu0 %v3074, 96
      %v4045 = vpop.permute.xlu0 %4044
      %4046 = vrot.lane.b32.xlu0 %v3075, 96
      %v4047 = vpop.permute.xlu0 %4046
      %4048 = vrot.lane.b32.xlu0 %v3076, 96
      %v4049 = vpop.permute.xlu0 %4048
      %4050 = vrot.lane.b32.xlu0 %v3077, 96
      %v4051 = vpop.permute.xlu0 %4050
      %4052 = vrot.lane.b32.xlu0 %v3078, 96
      %v4053 = vpop.permute.xlu0 %4052
      %4054 = vrot.lane.b32.xlu0 %v3079, 96
      %v4055 = vpop.permute.xlu0 %4054
      %4056 = vrot.lane.b32.xlu0 %v3080, 96
      %v4057 = vpop.permute.xlu0 %4056
      %4058 = vrot.lane.b32.xlu0 %v3081, 96
      %v4059 = vpop.permute.xlu0 %4058
      %4060 = vrot.lane.b32.xlu0 %v3082, 96
      %v4061 = vpop.permute.xlu0 %4060
      %4062 = vrot.lane.b32.xlu0 %v3083, 96
      %v4063 = vpop.permute.xlu0 %4062
      %4064 = vrot.lane.b32.xlu0 %v3084, 96
      %v4065 = vpop.permute.xlu0 %4064
      %4066 = vrot.lane.b32.xlu0 %v3085, 96
      %v4067 = vpop.permute.xlu0 %4066
      %4068 = vrot.lane.b32.xlu0 %v3086, 96
      %v4069 = vpop.permute.xlu0 %4068
      %4070 = vrot.lane.b32.xlu0 %v3087, 96
      %v4071 = vpop.permute.xlu0 %4070
      %4072 = vrot.lane.b32.xlu0 %v3088, 96
      %v4073 = vpop.permute.xlu0 %4072
      %4074 = vrot.lane.b32.xlu0 %v3089, 96
      %v4075 = vpop.permute.xlu0 %4074
      %4076 = vrot.lane.b32.xlu0 %v3090, 96
      %v4077 = vpop.permute.xlu0 %4076
      %4078 = vrot.lane.b32.xlu0 %v3091, 96
      %v4079 = vpop.permute.xlu0 %4078
      %4080 = vrot.lane.b32.xlu0 %v3092, 96
      %v4081 = vpop.permute.xlu0 %4080
      %4082 = vrot.lane.b32.xlu0 %v3093, 96
      %v4083 = vpop.permute.xlu0 %4082
      %4084 = vrot.lane.b32.xlu0 %v3094, 96
      %v4085 = vpop.permute.xlu0 %4084
      %4086 = vrot.lane.b32.xlu0 %v3095, 96
      %v4087 = vpop.permute.xlu0 %4086
      %v4120 = vsel %vm1949, %v2808, %v3129
      %v4121 = vsel %vm1949, %v2809, %v3131
      %v4122 = vsel %vm1949, %v2810, %v3133
      %v4123 = vsel %vm1949, %v2811, %v3135
      %v4124 = vsel %vm1949, %v2812, %v3137
      %v4125 = vsel %vm1949, %v2813, %v3139
      %v4126 = vsel %vm1949, %v2814, %v3141
      %v4127 = vsel %vm1949, %v2815, %v3143
      %v4128 = vsel %vm1949, %v2816, %v3145
      %v4129 = vsel %vm1949, %v2817, %v3147
      %v4130 = vsel %vm1949, %v2818, %v3149
      %v4131 = vsel %vm1949, %v2819, %v3151
      %v4132 = vsel %vm1949, %v2820, %v3153
      %v4133 = vsel %vm1949, %v2821, %v3155
      %v4134 = vsel %vm1949, %v2822, %v3157
      %v4135 = vsel %vm1949, %v2823, %v3159
      %v4136 = vsel %vm1949, %v2824, %v3161
      %v4137 = vsel %vm1949, %v2825, %v3163
      %v4138 = vsel %vm1949, %v2826, %v3165
      %v4139 = vsel %vm1949, %v2827, %v3167
      %v4140 = vsel %vm1949, %v2828, %v3169
      %v4141 = vsel %vm1949, %v2829, %v3171
      %v4142 = vsel %vm1949, %v2830, %v3173
      %v4143 = vsel %vm1949, %v2831, %v3175
      %v4144 = vsel %vm1949, %v2832, %v3177
      %v4145 = vsel %vm1949, %v2833, %v3179
      %v4146 = vsel %vm1949, %v2834, %v3181
      %v4147 = vsel %vm1949, %v2835, %v3183
      %v4148 = vsel %vm1949, %v2836, %v3185
      %v4149 = vsel %vm1949, %v2837, %v3187
      %v4150 = vsel %vm1949, %v2838, %v3189
      %v4151 = vsel %vm1949, %v2839, %v3191
      %v4152 = vsel %vm2047, %v4120, %v3257
      %v4153 = vsel %vm2047, %v4121, %v3259
      %v4154 = vsel %vm2047, %v4122, %v3261
      %v4155 = vsel %vm2047, %v4123, %v3263
      %v4156 = vsel %vm2047, %v4124, %v3265
      %v4157 = vsel %vm2047, %v4125, %v3267
      %v4158 = vsel %vm2047, %v4126, %v3269
      %v4159 = vsel %vm2047, %v4127, %v3271
      %v4160 = vsel %vm2047, %v4128, %v3273
      %v4161 = vsel %vm2047, %v4129, %v3275
      %v4162 = vsel %vm2047, %v4130, %v3277
      %v4163 = vsel %vm2047, %v4131, %v3279
      %v4164 = vsel %vm2047, %v4132, %v3281
      %v4165 = vsel %vm2047, %v4133, %v3283
      %v4166 = vsel %vm2047, %v4134, %v3285
      %v4167 = vsel %vm2047, %v4135, %v3287
      %v4168 = vsel %vm2047, %v4136, %v3289
      %v4169 = vsel %vm2047, %v4137, %v3291
      %v4170 = vsel %vm2047, %v4138, %v3293
      %v4171 = vsel %vm2047, %v4139, %v3295
      %v4172 = vsel %vm2047, %v4140, %v3297
      %v4173 = vsel %vm2047, %v4141, %v3299
      %v4174 = vsel %vm2047, %v4142, %v3301
      %v4175 = vsel %vm2047, %v4143, %v3303
      %v4176 = vsel %vm2047, %v4144, %v3305
      %v4177 = vsel %vm2047, %v4145, %v3307
      %v4178 = vsel %vm2047, %v4146, %v3309
      %v4179 = vsel %vm2047, %v4147, %v3311
      %v4180 = vsel %vm2047, %v4148, %v3313
      %v4181 = vsel %vm2047, %v4149, %v3315
      %v4182 = vsel %vm2047, %v4150, %v3317
      %v4183 = vsel %vm2047, %v4151, %v3319
      %v4184 = vsel %vm2151, %v4152, %v3385
      %v4185 = vsel %vm2151, %v4153, %v3387
      %v4186 = vsel %vm2151, %v4154, %v3389
      %v4187 = vsel %vm2151, %v4155, %v3391
      %v4188 = vsel %vm2151, %v4156, %v3393
      %v4189 = vsel %vm2151, %v4157, %v3395
      %v4190 = vsel %vm2151, %v4158, %v3397
      %v4191 = vsel %vm2151, %v4159, %v3399
      %v4192 = vsel %vm2151, %v4160, %v3401
      %v4193 = vsel %vm2151, %v4161, %v3403
      %v4194 = vsel %vm2151, %v4162, %v3405
      %v4195 = vsel %vm2151, %v4163, %v3407
      %v4196 = vsel %vm2151, %v4164, %v3409
      %v4197 = vsel %vm2151, %v4165, %v3411
      %v4198 = vsel %vm2151, %v4166, %v3413
      %v4199 = vsel %vm2151, %v4167, %v3415
      %v4200 = vsel %vm2151, %v4168, %v3417
      %v4201 = vsel %vm2151, %v4169, %v3419
      %v4202 = vsel %vm2151, %v4170, %v3421
      %v4203 = vsel %vm2151, %v4171, %v3423
      %v4204 = vsel %vm2151, %v4172, %v3425
      %v4205 = vsel %vm2151, %v4173, %v3427
      %v4206 = vsel %vm2151, %v4174, %v3429
      %v4207 = vsel %vm2151, %v4175, %v3431
      %v4208 = vsel %vm2151, %v4176, %v3433
      %v4209 = vsel %vm2151, %v4177, %v3435
      %v4210 = vsel %vm2151, %v4178, %v3437
      %v4211 = vsel %vm2151, %v4179, %v3439
      %v4212 = vsel %vm2151, %v4180, %v3441
      %v4213 = vsel %vm2151, %v4181, %v3443
      %v4214 = vsel %vm2151, %v4182, %v3445
      %v4215 = vsel %vm2151, %v4183, %v3447
      %vm4216 = vcmask 392192
      %v4217 = vsel %vm4216, %v4184, %v3513
      %v4218 = vsel %vm4216, %v4185, %v3515
      %v4219 = vsel %vm4216, %v4186, %v3517
      %v4220 = vsel %vm4216, %v4187, %v3519
      %v4221 = vsel %vm4216, %v4188, %v3521
      %v4222 = vsel %vm4216, %v4189, %v3523
      %v4223 = vsel %vm4216, %v4190, %v3525
      %v4224 = vsel %vm4216, %v4191, %v3527
      %v4225 = vsel %vm4216, %v4192, %v3529
      %v4226 = vsel %vm4216, %v4193, %v3531
      %v4227 = vsel %vm4216, %v4194, %v3533
      %v4228 = vsel %vm4216, %v4195, %v3535
      %v4229 = vsel %vm4216, %v4196, %v3537
      %v4230 = vsel %vm4216, %v4197, %v3539
      %v4231 = vsel %vm4216, %v4198, %v3541
      %v4232 = vsel %vm4216, %v4199, %v3543
      %v4233 = vsel %vm4216, %v4200, %v3545
      %v4234 = vsel %vm4216, %v4201, %v3547
      %v4235 = vsel %vm4216, %v4202, %v3549
      %v4236 = vsel %vm4216, %v4203, %v3551
      %v4237 = vsel %vm4216, %v4204, %v3553
      %v4238 = vsel %vm4216, %v4205, %v3555
      %v4239 = vsel %vm4216, %v4206, %v3557
      %v4240 = vsel %vm4216, %v4207, %v3559
      %v4241 = vsel %vm4216, %v4208, %v3561
      %v4242 = vsel %vm4216, %v4209, %v3563
      %v4243 = vsel %vm4216, %v4210, %v3565
      %v4244 = vsel %vm4216, %v4211, %v3567
      %v4245 = vsel %vm4216, %v4212, %v3569
      %v4246 = vsel %vm4216, %v4213, %v3571
      %v4247 = vsel %vm4216, %v4214, %v3573
      %v4248 = vsel %vm4216, %v4215, %v3575
      %vm4249 = vcmask 490496
      %v4250 = vsel %vm4249, %v4217, %v3641
      %v4251 = vsel %vm4249, %v4218, %v3643
      %v4252 = vsel %vm4249, %v4219, %v3645
      %v4253 = vsel %vm4249, %v4220, %v3647
      %v4254 = vsel %vm4249, %v4221, %v3649
      %v4255 = vsel %vm4249, %v4222, %v3651
      %v4256 = vsel %vm4249, %v4223, %v3653
      %v4257 = vsel %vm4249, %v4224, %v3655
      %v4258 = vsel %vm4249, %v4225, %v3657
      %v4259 = vsel %vm4249, %v4226, %v3659
      %v4260 = vsel %vm4249, %v4227, %v3661
      %v4261 = vsel %vm4249, %v4228, %v3663
      %v4262 = vsel %vm4249, %v4229, %v3665
      %v4263 = vsel %vm4249, %v4230, %v3667
      %v4264 = vsel %vm4249, %v4231, %v3669
      %v4265 = vsel %vm4249, %v4232, %v3671
      %v4266 = vsel %vm4249, %v4233, %v3673
      %v4267 = vsel %vm4249, %v4234, %v3675
      %v4268 = vsel %vm4249, %v4235, %v3677
      %v4269 = vsel %vm4249, %v4236, %v3679
      %v4270 = vsel %vm4249, %v4237, %v3681
      %v4271 = vsel %vm4249, %v4238, %v3683
      %v4272 = vsel %vm4249, %v4239, %v3685
      %v4273 = vsel %vm4249, %v4240, %v3687
      %v4274 = vsel %vm4249, %v4241, %v3689
      %v4275 = vsel %vm4249, %v4242, %v3691
      %v4276 = vsel %vm4249, %v4243, %v3693
      %v4277 = vsel %vm4249, %v4244, %v3695
      %v4278 = vsel %vm4249, %v4245, %v3697
      %v4279 = vsel %vm4249, %v4246, %v3699
      %v4280 = vsel %vm4249, %v4247, %v3701
      %v4281 = vsel %vm4249, %v4248, %v3703
      %vm4282 = vcmask 588800
      %v4283 = vsel %vm4282, %v4250, %v3769
      %v4284 = vsel %vm4282, %v4251, %v3771
      %v4285 = vsel %vm4282, %v4252, %v3773
      %v4286 = vsel %vm4282, %v4253, %v3775
      %v4287 = vsel %vm4282, %v4254, %v3777
      %v4288 = vsel %vm4282, %v4255, %v3779
      %v4289 = vsel %vm4282, %v4256, %v3781
      %v4290 = vsel %vm4282, %v4257, %v3783
      %v4291 = vsel %vm4282, %v4258, %v3785
      %v4292 = vsel %vm4282, %v4259, %v3787
      %v4293 = vsel %vm4282, %v4260, %v3789
      %v4294 = vsel %vm4282, %v4261, %v3791
      %v4295 = vsel %vm4282, %v4262, %v3793
      %v4296 = vsel %vm4282, %v4263, %v3795
      %v4297 = vsel %vm4282, %v4264, %v3797
      %v4298 = vsel %vm4282, %v4265, %v3799
      %v4299 = vsel %vm4282, %v4266, %v3801
      %v4300 = vsel %vm4282, %v4267, %v3803
      %v4301 = vsel %vm4282, %v4268, %v3805
      %v4302 = vsel %vm4282, %v4269, %v3807
      %v4303 = vsel %vm4282, %v4270, %v3809
      %v4304 = vsel %vm4282, %v4271, %v3811
      %v4305 = vsel %vm4282, %v4272, %v3813
      %v4306 = vsel %vm4282, %v4273, %v3815
      %v4307 = vsel %vm4282, %v4274, %v3817
      %v4308 = vsel %vm4282, %v4275, %v3819
      %v4309 = vsel %vm4282, %v4276, %v3821
      %v4310 = vsel %vm4282, %v4277, %v3823
      %v4311 = vsel %vm4282, %v4278, %v3825
      %v4312 = vsel %vm4282, %v4279, %v3827
      %v4313 = vsel %vm4282, %v4280, %v3829
      %v4314 = vsel %vm4282, %v4281, %v3831
      %vm4315 = vcmask 687104
      %v4316 = vsel %vm4315, %v4283, %v3897
      %v4317 = vsel %vm4315, %v4284, %v3899
      %v4318 = vsel %vm4315, %v4285, %v3901
      %v4319 = vsel %vm4315, %v4286, %v3903
      %v4320 = vsel %vm4315, %v4287, %v3905
      %v4321 = vsel %vm4315, %v4288, %v3907
      %v4322 = vsel %vm4315, %v4289, %v3909
      %v4323 = vsel %vm4315, %v4290, %v3911
      %v4324 = vsel %vm4315, %v4291, %v3913
      %v4325 = vsel %vm4315, %v4292, %v3915
      %v4326 = vsel %vm4315, %v4293, %v3917
      %v4327 = vsel %vm4315, %v4294, %v3919
      %v4328 = vsel %vm4315, %v4295, %v3921
      %v4329 = vsel %vm4315, %v4296, %v3923
      %v4330 = vsel %vm4315, %v4297, %v3925
      %v4331 = vsel %vm4315, %v4298, %v3927
      %v4332 = vsel %vm4315, %v4299, %v3929
      %v4333 = vsel %vm4315, %v4300, %v3931
      %v4334 = vsel %vm4315, %v4301, %v3933
      %v4335 = vsel %vm4315, %v4302, %v3935
      %v4336 = vsel %vm4315, %v4303, %v3937
      %v4337 = vsel %vm4315, %v4304, %v3939
      %v4338 = vsel %vm4315, %v4305, %v3941
      %v4339 = vsel %vm4315, %v4306, %v3943
      %v4340 = vsel %vm4315, %v4307, %v3945
      %v4341 = vsel %vm4315, %v4308, %v3947
      %v4342 = vsel %vm4315, %v4309, %v3949
      %v4343 = vsel %vm4315, %v4310, %v3951
      %v4344 = vsel %vm4315, %v4311, %v3953
      %v4345 = vsel %vm4315, %v4312, %v3955
      %v4346 = vsel %vm4315, %v4313, %v3957
      %v4347 = vsel %vm4315, %v4314, %v3959
      %vm4348 = vcmask 785408
      %v4349 = vsel %vm4348, %v4316, %v4025
      %v4350 = vsel %vm4348, %v4317, %v4027
      %v4351 = vsel %vm4348, %v4318, %v4029
      %v4352 = vsel %vm4348, %v4319, %v4031
      %v4353 = vsel %vm4348, %v4320, %v4033
      %v4354 = vsel %vm4348, %v4321, %v4035
      %v4355 = vsel %vm4348, %v4322, %v4037
      %v4356 = vsel %vm4348, %v4323, %v4039
      %v4357 = vsel %vm4348, %v4324, %v4041
      %v4358 = vsel %vm4348, %v4325, %v4043
      %v4359 = vsel %vm4348, %v4326, %v4045
      %v4360 = vsel %vm4348, %v4327, %v4047
      %v4361 = vsel %vm4348, %v4328, %v4049
      %v4362 = vsel %vm4348, %v4329, %v4051
      %v4363 = vsel %vm4348, %v4330, %v4053
      %v4364 = vsel %vm4348, %v4331, %v4055
      %v4365 = vsel %vm4348, %v4332, %v4057
      %v4366 = vsel %vm4348, %v4333, %v4059
      %v4367 = vsel %vm4348, %v4334, %v4061
      %v4368 = vsel %vm4348, %v4335, %v4063
      %v4369 = vsel %vm4348, %v4336, %v4065
      %v4370 = vsel %vm4348, %v4337, %v4067
      %v4371 = vsel %vm4348, %v4338, %v4069
      %v4372 = vsel %vm4348, %v4339, %v4071
      %v4373 = vsel %vm4348, %v4340, %v4073
      %v4374 = vsel %vm4348, %v4341, %v4075
      %v4375 = vsel %vm4348, %v4342, %v4077
      %v4376 = vsel %vm4348, %v4343, %v4079
      %v4377 = vsel %vm4348, %v4344, %v4081
      %v4378 = vsel %vm4348, %v4345, %v4083
      %v4379 = vsel %vm4348, %v4346, %v4085
      %v4380 = vsel %vm4348, %v4347, %v4087
      %v4381 = vld [vmem:[%s4] sm:$0xff]
      %v4382 = vld [vmem:[%s4 + $0x8] sm:$0xff]
      %v4383 = vld [vmem:[%s4 + $0x10] sm:$0xff]
      %v4384 = vld [vmem:[%s4 + $0x18] sm:$0xff]
      %v4385 = vld [vmem:[%s4 + $0x20] sm:$0xff]
      %v4386 = vld [vmem:[%s4 + $0x28] sm:$0xff]
      %v4387 = vld [vmem:[%s4 + $0x30] sm:$0xff]
      %v4388 = vld [vmem:[%s4 + $0x38] sm:$0xff]
      %v4389 = vld [vmem:[%s4 + $0x40] sm:$0xff]
      %v4390 = vld [vmem:[%s4 + $0x48] sm:$0xff]
      %v4391 = vld [vmem:[%s4 + $0x50] sm:$0xff]
      %v4392 = vld [vmem:[%s4 + $0x58] sm:$0xff]
      %v4393 = vld [vmem:[%s4 + $0x60] sm:$0xff]
      %v4394 = vld [vmem:[%s4 + $0x68] sm:$0xf]
      %vm4395 = vcmask 883712
      %v4397 = vsel %vm4395, %v4349, 0
      %v4400 = vsel %vm4395, %v4350, 0
      %v4403 = vsel %vm4395, %v4351, 0
      %v4406 = vsel %vm4395, %v4352, 0
      %v4409 = vsel %vm4395, %v4353, 0
      %v4412 = vsel %vm4395, %v4354, 0
      %v4415 = vsel %vm4395, %v4355, 0
      %v4418 = vsel %vm4395, %v4356, 0
      %v4421 = vsel %vm4395, %v4357, 0
      %v4424 = vsel %vm4395, %v4358, 0
      %v4427 = vsel %vm4395, %v4359, 0
      %v4430 = vsel %vm4395, %v4360, 0
      %v4433 = vsel %vm4395, %v4361, 0
      %v4436 = vsel %vm4395, %v4362, 0
      %v4439 = vsel %vm4395, %v4363, 0
      %v4442 = vsel %vm4395, %v4364, 0
      %v4445 = vsel %vm4395, %v4365, 0
      %v4448 = vsel %vm4395, %v4366, 0
      %v4451 = vsel %vm4395, %v4367, 0
      %v4454 = vsel %vm4395, %v4368, 0
      %v4457 = vsel %vm4395, %v4369, 0
      %v4460 = vsel %vm4395, %v4370, 0
      %v4463 = vsel %vm4395, %v4371, 0
      %v4466 = vsel %vm4395, %v4372, 0
      %v4469 = vsel %vm4395, %v4373, 0
      %v4472 = vsel %vm4395, %v4374, 0
      %v4475 = vsel %vm4395, %v4375, 0
      %v4478 = vsel %vm4395, %v4376, 0
      %v4481 = vsel %vm4395, %v4377, 0
      %v4484 = vsel %vm4395, %v4378, 0
      %v4487 = vsel %vm4395, %v4379, 0
      %v4490 = vsel %vm4395, %v4380, 0
      %v4493 = vsel %vm2248, %v4394, 0
      %4495 = vmatprep.subr.mxu0 0.0
      %4496 = vmatpush1.msra.mxu0 0.0
      %4497 = vmatprep.subr.mxu0 0.0
      %4498 = vmatpush1.msra.mxu0 0.0
      %4499 = vmatprep.subr.mxu0 0.0
      %4500 = vmatpush1.msra.mxu0 %v4493
      %4501 = vmatprep.subr.mxu0 0.0
      %4502 = vmatpush1.msra.mxu0 %v4393
      %4503 = vmatprep.subr.mxu0 0.0
      %4504 = vmatpush1.msra.mxu0 %v4392
      %4505 = vmatprep.subr.mxu0 0.0
      %4506 = vmatpush1.msra.mxu0 %v4391
      %4507 = vmatprep.subr.mxu0 0.0
      %4508 = vmatpush1.msra.mxu0 %v4390
      %4509 = vmatprep.subr.mxu0 0.0
      %4510 = vmatpush1.msra.mxu0 %v4389
      %4511 = vmatprep.subr.mxu0 0.0
      %4512 = vmatpush1.msra.mxu0 %v4388
      %4513 = vmatprep.subr.mxu0 0.0
      %4514 = vmatpush1.msra.mxu0 %v4387
      %4515 = vmatprep.subr.mxu0 0.0
      %4516 = vmatpush1.msra.mxu0 %v4386
      %4517 = vmatprep.subr.mxu0 0.0
      %4518 = vmatpush1.msra.mxu0 %v4385
      %4519 = vmatprep.subr.mxu0 0.0
      %4520 = vmatpush1.msra.mxu0 %v4384
      %4521 = vmatprep.subr.mxu0 0.0
      %4522 = vmatpush1.msra.mxu0 %v4383
      %4523 = vmatprep.subr.mxu0 0.0
      %4524 = vmatpush1.msra.mxu0 %v4382
      %4525 = vmatprep.subr.mxu0 0.0
      %4526 = vmatpush1.msra.mxu0 %v4381
      %4527 = vmatprep.subr.mxu0 0.0
      %4528 = vmatpush2.msra.mxu0 0.0
      %4529 = vmatprep.subr.mxu0 0.0
      %4530 = vmatpush2.msra.mxu0 0.0
      %4531 = vmatprep.subr.mxu0 0.0
      %4532 = vmatpush2.msra.mxu0 0.0
      %4533 = vmatprep.subr.mxu0 0.0
      %4534 = vmatpush2.msra.mxu0 0.0
      %4535 = vmatprep.subr.mxu0 0.0
      %4536 = vmatpush2.msra.mxu0 0.0
      %4537 = vmatprep.subr.mxu0 0.0
      %4538 = vmatpush2.msra.mxu0 0.0
      %4539 = vmatprep.subr.mxu0 0.0
      %4540 = vmatpush2.msra.mxu0 0.0
      %4541 = vmatprep.subr.mxu0 0.0
      %4542 = vmatpush2.msra.mxu0 0.0
      %4543 = vmatprep.subr.mxu0 0.0
      %4544 = vmatpush2.msra.mxu0 0.0
      %4545 = vmatprep.subr.mxu0 0.0
      %4546 = vmatpush2.msra.mxu0 0.0
      %4547 = vmatprep.subr.mxu0 0.0
      %4548 = vmatpush2.msra.mxu0 0.0
      %4549 = vmatprep.subr.mxu0 0.0
      %4550 = vmatpush2.msra.mxu0 0.0
      %4551 = vmatprep.subr.mxu0 0.0
      %4552 = vmatpush2.msra.mxu0 0.0
      %4553 = vmatprep.subr.mxu0 0.0
      %4554 = vmatpush2.msra.mxu0 0.0
      %4555 = vmatprep.subr.mxu0 0.0
      %4556 = vmatpush2.msra.mxu0 0.0
      %4557 = vmatprep.subr.mxu0 0.0
      %4558 = vmatpush2.msra.mxu0 0.0
      %4559 = vmatprep.mubr.f32.mxu0 0.0
      %4560 = vmatmul.mubr.f32.gmra.mxu0 %v4397
      %v4561 = vpop.f32.mrf.mxu0
      %v4562 = vadd.f32 0.0, %v4561
      %v4563 = vpop.f32.mrf.mxu0
      %4564 = vmatprep.mubr.f32.mxu0 0.0
      %4565 = vmatmul.mubr.f32.gmra.mxu0 %v4400
      %v4566 = vpop.f32.mrf.mxu0
      %v4567 = vadd.f32 0.0, %v4566
      %v4568 = vpop.f32.mrf.mxu0
      %4569 = vmatprep.mubr.f32.mxu0 0.0
      %4570 = vmatmul.mubr.f32.gmra.mxu0 %v4403
      %v4571 = vpop.f32.mrf.mxu0
      %v4572 = vadd.f32 0.0, %v4571
      %v4573 = vpop.f32.mrf.mxu0
      %4574 = vmatprep.mubr.f32.mxu0 0.0
      %4575 = vmatmul.mubr.f32.gmra.mxu0 %v4406
      %v4576 = vpop.f32.mrf.mxu0
      %v4577 = vadd.f32 0.0, %v4576
      %v4578 = vpop.f32.mrf.mxu0
      %4579 = vmatprep.mubr.f32.mxu0 0.0
      %4580 = vmatmul.mubr.f32.gmra.mxu0 %v4409
      %v4581 = vpop.f32.mrf.mxu0
      %v4582 = vadd.f32 0.0, %v4581
      %v4583 = vpop.f32.mrf.mxu0
      %4584 = vmatprep.mubr.f32.mxu0 0.0
      %4585 = vmatmul.mubr.f32.gmra.mxu0 %v4412
      %v4586 = vpop.f32.mrf.mxu0
      %v4587 = vadd.f32 0.0, %v4586
      %v4588 = vpop.f32.mrf.mxu0
      %4589 = vmatprep.mubr.f32.mxu0 0.0
      %4590 = vmatmul.mubr.f32.gmra.mxu0 %v4415
      %v4591 = vpop.f32.mrf.mxu0
      %v4592 = vadd.f32 0.0, %v4591
      %v4593 = vpop.f32.mrf.mxu0
      %4594 = vmatprep.mubr.f32.mxu0 0.0
      %4595 = vmatmul.mubr.f32.gmra.mxu0 %v4418
      %v4596 = vpop.f32.mrf.mxu0
      %v4597 = vadd.f32 0.0, %v4596
      %v4598 = vpop.f32.mrf.mxu0
      %4599 = vmatprep.mubr.f32.mxu0 0.0
      %4600 = vmatmul.mubr.f32.gmra.mxu0 %v4421
      %v4601 = vpop.f32.mrf.mxu0
      %v4602 = vadd.f32 0.0, %v4601
      %v4603 = vpop.f32.mrf.mxu0
      %4604 = vmatprep.mubr.f32.mxu0 0.0
      %4605 = vmatmul.mubr.f32.gmra.mxu0 %v4424
      %v4606 = vpop.f32.mrf.mxu0
      %v4607 = vadd.f32 0.0, %v4606
      %v4608 = vpop.f32.mrf.mxu0
      %4609 = vmatprep.mubr.f32.mxu0 0.0
      %4610 = vmatmul.mubr.f32.gmra.mxu0 %v4427
      %v4611 = vpop.f32.mrf.mxu0
      %v4612 = vadd.f32 0.0, %v4611
      %v4613 = vpop.f32.mrf.mxu0
      %4614 = vmatprep.mubr.f32.mxu0 0.0
      %4615 = vmatmul.mubr.f32.gmra.mxu0 %v4430
      %v4616 = vpop.f32.mrf.mxu0
      %v4617 = vadd.f32 0.0, %v4616
      %v4618 = vpop.f32.mrf.mxu0
      %4619 = vmatprep.mubr.f32.mxu0 0.0
      %4620 = vmatmul.mubr.f32.gmra.mxu0 %v4433
      %v4621 = vpop.f32.mrf.mxu0
      %v4622 = vadd.f32 0.0, %v4621
      %v4623 = vpop.f32.mrf.mxu0
      %4624 = vmatprep.mubr.f32.mxu0 0.0
      %4625 = vmatmul.mubr.f32.gmra.mxu0 %v4436
      %v4626 = vpop.f32.mrf.mxu0
      %v4627 = vadd.f32 0.0, %v4626
      %v4628 = vpop.f32.mrf.mxu0
      %4629 = vmatprep.mubr.f32.mxu0 0.0
      %4630 = vmatmul.mubr.f32.gmra.mxu0 %v4439
      %v4631 = vpop.f32.mrf.mxu0
      %v4632 = vadd.f32 0.0, %v4631
      %v4633 = vpop.f32.mrf.mxu0
      %4634 = vmatprep.mubr.f32.mxu0 0.0
      %4635 = vmatmul.mubr.f32.gmra.mxu0 %v4442
      %v4636 = vpop.f32.mrf.mxu0
      %v4637 = vadd.f32 0.0, %v4636
      %v4638 = vpop.f32.mrf.mxu0
      %4639 = vmatprep.mubr.f32.mxu0 0.0
      %4640 = vmatmul.mubr.f32.gmra.mxu0 %v4445
      %v4641 = vpop.f32.mrf.mxu0
      %v4642 = vadd.f32 0.0, %v4641
      %v4643 = vpop.f32.mrf.mxu0
      %4644 = vmatprep.mubr.f32.mxu0 0.0
      %4645 = vmatmul.mubr.f32.gmra.mxu0 %v4448
      %v4646 = vpop.f32.mrf.mxu0
      %v4647 = vadd.f32 0.0, %v4646
      %v4648 = vpop.f32.mrf.mxu0
      %4649 = vmatprep.mubr.f32.mxu0 0.0
      %4650 = vmatmul.mubr.f32.gmra.mxu0 %v4451
      %v4651 = vpop.f32.mrf.mxu0
      %v4652 = vadd.f32 0.0, %v4651
      %v4653 = vpop.f32.mrf.mxu0
      %4654 = vmatprep.mubr.f32.mxu0 0.0
      %4655 = vmatmul.mubr.f32.gmra.mxu0 %v4454
      %v4656 = vpop.f32.mrf.mxu0
      %v4657 = vadd.f32 0.0, %v4656
      %v4658 = vpop.f32.mrf.mxu0
      %4659 = vmatprep.mubr.f32.mxu0 0.0
      %4660 = vmatmul.mubr.f32.gmra.mxu0 %v4457
      %v4661 = vpop.f32.mrf.mxu0
      %v4662 = vadd.f32 0.0, %v4661
      %v4663 = vpop.f32.mrf.mxu0
      %4664 = vmatprep.mubr.f32.mxu0 0.0
      %4665 = vmatmul.mubr.f32.gmra.mxu0 %v4460
      %v4666 = vpop.f32.mrf.mxu0
      %v4667 = vadd.f32 0.0, %v4666
      %v4668 = vpop.f32.mrf.mxu0
      %4669 = vmatprep.mubr.f32.mxu0 0.0
      %4670 = vmatmul.mubr.f32.gmra.mxu0 %v4463
      %v4671 = vpop.f32.mrf.mxu0
      %v4672 = vadd.f32 0.0, %v4671
      %v4673 = vpop.f32.mrf.mxu0
      %4674 = vmatprep.mubr.f32.mxu0 0.0
      %4675 = vmatmul.mubr.f32.gmra.mxu0 %v4466
      %v4676 = vpop.f32.mrf.mxu0
      %v4677 = vadd.f32 0.0, %v4676
      %v4678 = vpop.f32.mrf.mxu0
      %4679 = vmatprep.mubr.f32.mxu0 0.0
      %4680 = vmatmul.mubr.f32.gmra.mxu0 %v4469
      %v4681 = vpop.f32.mrf.mxu0
      %v4682 = vadd.f32 0.0, %v4681
      %v4683 = vpop.f32.mrf.mxu0
      %4684 = vmatprep.mubr.f32.mxu0 0.0
      %4685 = vmatmul.mubr.f32.gmra.mxu0 %v4472
      %v4686 = vpop.f32.mrf.mxu0
      %v4687 = vadd.f32 0.0, %v4686
      %v4688 = vpop.f32.mrf.mxu0
      %4689 = vmatprep.mubr.f32.mxu0 0.0
      %4690 = vmatmul.mubr.f32.gmra.mxu0 %v4475
      %v4691 = vpop.f32.mrf.mxu0
      %v4692 = vadd.f32 0.0, %v4691
      %v4693 = vpop.f32.mrf.mxu0
      %4694 = vmatprep.mubr.f32.mxu0 0.0
      %4695 = vmatmul.mubr.f32.gmra.mxu0 %v4478
      %v4696 = vpop.f32.mrf.mxu0
      %v4697 = vadd.f32 0.0, %v4696
      %v4698 = vpop.f32.mrf.mxu0
      %4699 = vmatprep.mubr.f32.mxu0 0.0
      %4700 = vmatmul.mubr.f32.gmra.mxu0 %v4481
      %v4701 = vpop.f32.mrf.mxu0
      %v4702 = vadd.f32 0.0, %v4701
      %v4703 = vpop.f32.mrf.mxu0
      %4704 = vmatprep.mubr.f32.mxu0 0.0
      %4705 = vmatmul.mubr.f32.gmra.mxu0 %v4484
      %v4706 = vpop.f32.mrf.mxu0
      %v4707 = vadd.f32 0.0, %v4706
      %v4708 = vpop.f32.mrf.mxu0
      %4709 = vmatprep.mubr.f32.mxu0 0.0
      %4710 = vmatmul.mubr.f32.gmra.mxu0 %v4487
      %v4711 = vpop.f32.mrf.mxu0
      %v4712 = vadd.f32 0.0, %v4711
      %v4713 = vpop.f32.mrf.mxu0
      %4714 = vmatprep.mubr.f32.mxu0 0.0
      %4715 = vmatmul.mubr.f32.gmra.mxu0 %v4490
      %v4716 = vpop.f32.mrf.mxu0
      %v4717 = vadd.f32 0.0, %v4716
      %v4718 = vpop.f32.mrf.mxu0
      %4719 = vdwg.mxu0
      %4752 = vrot.lane.b32.xlu0 %v4562, 12
      %v4753 = vpop.permute.xlu0 %4752
      %4754 = vrot.lane.b32.xlu0 %v4567, 12
      %v4755 = vpop.permute.xlu0 %4754
      %4756 = vrot.lane.b32.xlu0 %v4572, 12
      %v4757 = vpop.permute.xlu0 %4756
      %4758 = vrot.lane.b32.xlu0 %v4577, 12
      %v4759 = vpop.permute.xlu0 %4758
      %4760 = vrot.lane.b32.xlu0 %v4582, 12
      %v4761 = vpop.permute.xlu0 %4760
      %4762 = vrot.lane.b32.xlu0 %v4587, 12
      %v4763 = vpop.permute.xlu0 %4762
      %4764 = vrot.lane.b32.xlu0 %v4592, 12
      %v4765 = vpop.permute.xlu0 %4764
      %4766 = vrot.lane.b32.xlu0 %v4597, 12
      %v4767 = vpop.permute.xlu0 %4766
      %4768 = vrot.lane.b32.xlu0 %v4602, 12
      %v4769 = vpop.permute.xlu0 %4768
      %4770 = vrot.lane.b32.xlu0 %v4607, 12
      %v4771 = vpop.permute.xlu0 %4770
      %4772 = vrot.lane.b32.xlu0 %v4612, 12
      %v4773 = vpop.permute.xlu0 %4772
      %4774 = vrot.lane.b32.xlu0 %v4617, 12
      %v4775 = vpop.permute.xlu0 %4774
      %4776 = vrot.lane.b32.xlu0 %v4622, 12
      %v4777 = vpop.permute.xlu0 %4776
      %4778 = vrot.lane.b32.xlu0 %v4627, 12
      %v4779 = vpop.permute.xlu0 %4778
      %4780 = vrot.lane.b32.xlu0 %v4632, 12
      %v4781 = vpop.permute.xlu0 %4780
      %4782 = vrot.lane.b32.xlu0 %v4637, 12
      %v4783 = vpop.permute.xlu0 %4782
      %4784 = vrot.lane.b32.xlu0 %v4642, 12
      %v4785 = vpop.permute.xlu0 %4784
      %4786 = vrot.lane.b32.xlu0 %v4647, 12
      %v4787 = vpop.permute.xlu0 %4786
      %4788 = vrot.lane.b32.xlu0 %v4652, 12
      %v4789 = vpop.permute.xlu0 %4788
      %4790 = vrot.lane.b32.xlu0 %v4657, 12
      %v4791 = vpop.permute.xlu0 %4790
      %4792 = vrot.lane.b32.xlu0 %v4662, 12
      %v4793 = vpop.permute.xlu0 %4792
      %4794 = vrot.lane.b32.xlu0 %v4667, 12
      %v4795 = vpop.permute.xlu0 %4794
      %4796 = vrot.lane.b32.xlu0 %v4672, 12
      %v4797 = vpop.permute.xlu0 %4796
      %4798 = vrot.lane.b32.xlu0 %v4677, 12
      %v4799 = vpop.permute.xlu0 %4798
      %4800 = vrot.lane.b32.xlu0 %v4682, 12
      %v4801 = vpop.permute.xlu0 %4800
      %4802 = vrot.lane.b32.xlu0 %v4687, 12
      %v4803 = vpop.permute.xlu0 %4802
      %4804 = vrot.lane.b32.xlu0 %v4692, 12
      %v4805 = vpop.permute.xlu0 %4804
      %4806 = vrot.lane.b32.xlu0 %v4697, 12
      %v4807 = vpop.permute.xlu0 %4806
      %4808 = vrot.lane.b32.xlu0 %v4702, 12
      %v4809 = vpop.permute.xlu0 %4808
      %4810 = vrot.lane.b32.xlu0 %v4707, 12
      %v4811 = vpop.permute.xlu0 %4810
      %4812 = vrot.lane.b32.xlu0 %v4712, 12
      %v4813 = vpop.permute.xlu0 %4812
      %4814 = vrot.lane.b32.xlu0 %v4717, 12
      %v4815 = vpop.permute.xlu0 %4814
      %vm4848 = vcmask 162912
      %4849 = vst.msk [vmem:[#allocation2] sm:$0xff] %vm4848, %v4753
      %4850 = vst.msk [vmem:[#allocation2 + $0x8] sm:$0xff] %vm4848, %v4755
      %4851 = vst.msk [vmem:[#allocation2 + $0x10] sm:$0xff] %vm4848, %v4757
      %4852 = vst.msk [vmem:[#allocation2 + $0x18] sm:$0xff] %vm4848, %v4759
      %4853 = vst.msk [vmem:[#allocation2 + $0x20] sm:$0xff] %vm4848, %v4761
      %4854 = vst.msk [vmem:[#allocation2 + $0x28] sm:$0xff] %vm4848, %v4763
      %4855 = vst.msk [vmem:[#allocation2 + $0x30] sm:$0xff] %vm4848, %v4765
      %4856 = vst.msk [vmem:[#allocation2 + $0x38] sm:$0xff] %vm4848, %v4767
      %4857 = vst.msk [vmem:[#allocation2 + $0x40] sm:$0xff] %vm4848, %v4769
      %4858 = vst.msk [vmem:[#allocation2 + $0x48] sm:$0xff] %vm4848, %v4771
      %4859 = vst.msk [vmem:[#allocation2 + $0x50] sm:$0xff] %vm4848, %v4773
      %4860 = vst.msk [vmem:[#allocation2 + $0x58] sm:$0xff] %vm4848, %v4775
      %4861 = vst.msk [vmem:[#allocation2 + $0x60] sm:$0xff] %vm4848, %v4777
      %4862 = vst.msk [vmem:[#allocation2 + $0x68] sm:$0xff] %vm4848, %v4779
      %4863 = vst.msk [vmem:[#allocation2 + $0x70] sm:$0xff] %vm4848, %v4781
      %4864 = vst.msk [vmem:[#allocation2 + $0x78] sm:$0xff] %vm4848, %v4783
      %4865 = vst.msk [vmem:[#allocation2 + $0x80] sm:$0xff] %vm4848, %v4785
      %4866 = vst.msk [vmem:[#allocation2 + $0x88] sm:$0xff] %vm4848, %v4787
      %4867 = vst.msk [vmem:[#allocation2 + $0x90] sm:$0xff] %vm4848, %v4789
      %4868 = vst.msk [vmem:[#allocation2 + $0x98] sm:$0xff] %vm4848, %v4791
      %4869 = vst.msk [vmem:[#allocation2 + $0xa0] sm:$0xff] %vm4848, %v4793
      %4870 = vst.msk [vmem:[#allocation2 + $0xa8] sm:$0xff] %vm4848, %v4795
      %4871 = vst.msk [vmem:[#allocation2 + $0xb0] sm:$0xff] %vm4848, %v4797
      %4872 = vst.msk [vmem:[#allocation2 + $0xb8] sm:$0xff] %vm4848, %v4799
      %4873 = vst.msk [vmem:[#allocation2 + $0xc0] sm:$0xff] %vm4848, %v4801
      %4874 = vst.msk [vmem:[#allocation2 + $0xc8] sm:$0xff] %vm4848, %v4803
      %4875 = vst.msk [vmem:[#allocation2 + $0xd0] sm:$0xff] %vm4848, %v4805
      %4876 = vst.msk [vmem:[#allocation2 + $0xd8] sm:$0xff] %vm4848, %v4807
      %4877 = vst.msk [vmem:[#allocation2 + $0xe0] sm:$0xff] %vm4848, %v4809
      %4878 = vst.msk [vmem:[#allocation2 + $0xe8] sm:$0xff] %vm4848, %v4811
      %4879 = vst.msk [vmem:[#allocation2 + $0xf0] sm:$0xff] %vm4848, %v4813
      %4880 = vst.msk [vmem:[#allocation2 + $0xf8] sm:$0xff] %vm4848, %v4815
      %v4881 = vld [vmem:[#allocation2] sm:$0xff]
      %v4882 = vld [vmem:[#allocation2 + $0x8] sm:$0xff]
      %v4883 = vld [vmem:[#allocation2 + $0x10] sm:$0xff]
      %v4884 = vld [vmem:[#allocation2 + $0x18] sm:$0xff]
      %v4885 = vld [vmem:[#allocation2 + $0x20] sm:$0xff]
      %v4886 = vld [vmem:[#allocation2 + $0x28] sm:$0xff]
      %v4887 = vld [vmem:[#allocation2 + $0x30] sm:$0xff]
      %v4888 = vld [vmem:[#allocation2 + $0x38] sm:$0xff]
      %v4889 = vld [vmem:[#allocation2 + $0x40] sm:$0xff]
      %v4890 = vld [vmem:[#allocation2 + $0x48] sm:$0xff]
      %v4891 = vld [vmem:[#allocation2 + $0x50] sm:$0xff]
      %v4892 = vld [vmem:[#allocation2 + $0x58] sm:$0xff]
      %v4893 = vld [vmem:[#allocation2 + $0x60] sm:$0xff]
      %v4894 = vld [vmem:[#allocation2 + $0x68] sm:$0xff]
      %v4895 = vld [vmem:[#allocation2 + $0x70] sm:$0xff]
      %v4896 = vld [vmem:[#allocation2 + $0x78] sm:$0xff]
      %v4897 = vld [vmem:[#allocation2 + $0x80] sm:$0xff]
      %v4898 = vld [vmem:[#allocation2 + $0x88] sm:$0xff]
      %v4899 = vld [vmem:[#allocation2 + $0x90] sm:$0xff]
      %v4900 = vld [vmem:[#allocation2 + $0x98] sm:$0xff]
      %v4901 = vld [vmem:[#allocation2 + $0xa0] sm:$0xff]
      %v4902 = vld [vmem:[#allocation2 + $0xa8] sm:$0xff]
      %v4903 = vld [vmem:[#allocation2 + $0xb0] sm:$0xff]
      %v4904 = vld [vmem:[#allocation2 + $0xb8] sm:$0xff]
      %v4905 = vld [vmem:[#allocation2 + $0xc0] sm:$0xff]
      %v4906 = vld [vmem:[#allocation2 + $0xc8] sm:$0xff]
      %v4907 = vld [vmem:[#allocation2 + $0xd0] sm:$0xff]
      %v4908 = vld [vmem:[#allocation2 + $0xd8] sm:$0xff]
      %v4909 = vld [vmem:[#allocation2 + $0xe0] sm:$0xff]
      %v4910 = vld [vmem:[#allocation2 + $0xe8] sm:$0xff]
      %v4911 = vld [vmem:[#allocation2 + $0xf0] sm:$0xff]
      %v4912 = vld [vmem:[#allocation2 + $0xf8] sm:$0xff]
      %v4913 = vld [vmem:[%s5] sm:$0x1]
      %v4914 = vlaneseq
      %v4915 = vshrl.u32 %v4914, 7
      %v4916 = vsub.s32 0, %v4915
      %v4917 = vrot.slane %v4913, %v4916
      %v4918 = vmul.f32 %v4881, %v4917
      %v4919 = vmul.f32 %v4882, %v4917
      %v4920 = vmul.f32 %v4883, %v4917
      %v4921 = vmul.f32 %v4884, %v4917
      %v4922 = vmul.f32 %v4885, %v4917
      %v4923 = vmul.f32 %v4886, %v4917
      %v4924 = vmul.f32 %v4887, %v4917
      %v4925 = vmul.f32 %v4888, %v4917
      %v4926 = vmul.f32 %v4889, %v4917
      %v4927 = vmul.f32 %v4890, %v4917
      %v4928 = vmul.f32 %v4891, %v4917
      %v4929 = vmul.f32 %v4892, %v4917
      %v4930 = vmul.f32 %v4893, %v4917
      %v4931 = vmul.f32 %v4894, %v4917
      %v4932 = vmul.f32 %v4895, %v4917
      %v4933 = vmul.f32 %v4896, %v4917
      %v4934 = vmul.f32 %v4897, %v4917
      %v4935 = vmul.f32 %v4898, %v4917
      %v4936 = vmul.f32 %v4899, %v4917
      %v4937 = vmul.f32 %v4900, %v4917
      %v4938 = vmul.f32 %v4901, %v4917
      %v4939 = vmul.f32 %v4902, %v4917
      %v4940 = vmul.f32 %v4903, %v4917
      %v4941 = vmul.f32 %v4904, %v4917
      %v4942 = vmul.f32 %v4905, %v4917
      %v4943 = vmul.f32 %v4906, %v4917
      %v4944 = vmul.f32 %v4907, %v4917
      %v4945 = vmul.f32 %v4908, %v4917
      %v4946 = vmul.f32 %v4909, %v4917
      %v4947 = vmul.f32 %v4910, %v4917
      %v4948 = vmul.f32 %v4911, %v4917
      %v4949 = vmul.f32 %v4912, %v4917
      %v4950 = vld [vmem:[%s5 + $0x1] sm:$0x1]
      %v4951 = vlaneseq
      %v4952 = vshrl.u32 %v4951, 7
      %v4953 = vsub.s32 0, %v4952
      %v4954 = vrot.slane %v4950, %v4953
      %v4955 = vadd.f32 %v4918, %v4954
      %v4956 = vadd.f32 %v4919, %v4954
      %v4957 = vadd.f32 %v4920, %v4954
      %v4958 = vadd.f32 %v4921, %v4954
      %v4959 = vadd.f32 %v4922, %v4954
      %v4960 = vadd.f32 %v4923, %v4954
      %v4961 = vadd.f32 %v4924, %v4954
      %v4962 = vadd.f32 %v4925, %v4954
      %v4963 = vadd.f32 %v4926, %v4954
      %v4964 = vadd.f32 %v4927, %v4954
      %v4965 = vadd.f32 %v4928, %v4954
      %v4966 = vadd.f32 %v4929, %v4954
      %v4967 = vadd.f32 %v4930, %v4954
      %v4968 = vadd.f32 %v4931, %v4954
      %v4969 = vadd.f32 %v4932, %v4954
      %v4970 = vadd.f32 %v4933, %v4954
      %v4971 = vadd.f32 %v4934, %v4954
      %v4972 = vadd.f32 %v4935, %v4954
      %v4973 = vadd.f32 %v4936, %v4954
      %v4974 = vadd.f32 %v4937, %v4954
      %v4975 = vadd.f32 %v4938, %v4954
      %v4976 = vadd.f32 %v4939, %v4954
      %v4977 = vadd.f32 %v4940, %v4954
      %v4978 = vadd.f32 %v4941, %v4954
      %v4979 = vadd.f32 %v4942, %v4954
      %v4980 = vadd.f32 %v4943, %v4954
      %v4981 = vadd.f32 %v4944, %v4954
      %v4982 = vadd.f32 %v4945, %v4954
      %v4983 = vadd.f32 %v4946, %v4954
      %v4984 = vadd.f32 %v4947, %v4954
      %v4985 = vadd.f32 %v4948, %v4954
      %v4986 = vadd.f32 %v4949, %v4954
      %v4987 = vmax.f32 %v4955, 0.0
      %v4988 = vmax.f32 %v4956, 0.0
      %v4989 = vmax.f32 %v4957, 0.0
      %v4990 = vmax.f32 %v4958, 0.0
      %v4991 = vmax.f32 %v4959, 0.0
      %v4992 = vmax.f32 %v4960, 0.0
      %v4993 = vmax.f32 %v4961, 0.0
      %v4994 = vmax.f32 %v4962, 0.0
      %v4995 = vmax.f32 %v4963, 0.0
      %v4996 = vmax.f32 %v4964, 0.0
      %v4997 = vmax.f32 %v4965, 0.0
      %v4998 = vmax.f32 %v4966, 0.0
      %v4999 = vmax.f32 %v4967, 0.0
      %v5000 = vmax.f32 %v4968, 0.0
      %v5001 = vmax.f32 %v4969, 0.0
      %v5002 = vmax.f32 %v4970, 0.0
      %v5003 = vmax.f32 %v4971, 0.0
      %v5004 = vmax.f32 %v4972, 0.0
      %v5005 = vmax.f32 %v4973, 0.0
      %v5006 = vmax.f32 %v4974, 0.0
      %v5007 = vmax.f32 %v4975, 0.0
      %v5008 = vmax.f32 %v4976, 0.0
      %v5009 = vmax.f32 %v4977, 0.0
      %v5010 = vmax.f32 %v4978, 0.0
      %v5011 = vmax.f32 %v4979, 0.0
      %v5012 = vmax.f32 %v4980, 0.0
      %v5013 = vmax.f32 %v4981, 0.0
      %v5014 = vmax.f32 %v4982, 0.0
      %v5015 = vmax.f32 %v4983, 0.0
      %v5016 = vmax.f32 %v4984, 0.0
      %v5017 = vmax.f32 %v4985, 0.0
      %v5018 = vmax.f32 %v4986, 0.0
      %5019 = vst.msk [vmem:[%s538 + $0x1] sm:$0xff] %vm279, %v4987
      %5020 = vst.msk [vmem:[%s538 + $0x9] sm:$0xff] %vm279, %v4988
      %5021 = vst.msk [vmem:[%s538 + $0x19] sm:$0xff] %vm279, %v4989
      %5022 = vst.msk [vmem:[%s538 + $0x21] sm:$0xff] %vm279, %v4990
      %5023 = vst.msk [vmem:[%s538 + $0x31] sm:$0xff] %vm279, %v4991
      %5024 = vst.msk [vmem:[%s538 + $0x39] sm:$0xff] %vm279, %v4992
      %5025 = vst.msk [vmem:[%s538 + $0x49] sm:$0xff] %vm279, %v4993
      %5026 = vst.msk [vmem:[%s538 + $0x51] sm:$0xff] %vm279, %v4994
      %5027 = vst.msk [vmem:[%s538 + $0x61] sm:$0xff] %vm279, %v4995
      %5028 = vst.msk [vmem:[%s538 + $0x69] sm:$0xff] %vm279, %v4996
      %5029 = vst.msk [vmem:[%s538 + $0x79] sm:$0xff] %vm279, %v4997
      %5030 = vst.msk [vmem:[%s538 + $0x81] sm:$0xff] %vm279, %v4998
      %5031 = vst.msk [vmem:[%s538 + $0x91] sm:$0xff] %vm279, %v4999
      %5032 = vst.msk [vmem:[%s538 + $0x99] sm:$0xff] %vm279, %v5000
      %5033 = vst.msk [vmem:[%s538 + $0xa9] sm:$0xff] %vm279, %v5001
      %5034 = vst.msk [vmem:[%s538 + $0xb1] sm:$0xff] %vm279, %v5002
      %5035 = vst.msk [vmem:[%s538 + $0xc1] sm:$0xff] %vm279, %v5003
      %5036 = vst.msk [vmem:[%s538 + $0xc9] sm:$0xff] %vm279, %v5004
      %5037 = vst.msk [vmem:[%s538 + $0xd9] sm:$0xff] %vm279, %v5005
      %5038 = vst.msk [vmem:[%s538 + $0xe1] sm:$0xff] %vm279, %v5006
      %5039 = vst.msk [vmem:[%s538 + $0xf1] sm:$0xff] %vm279, %v5007
      %5040 = vst.msk [vmem:[%s538 + $0xf9] sm:$0xff] %vm279, %v5008
      %5041 = vst.msk [vmem:[%s538 + $0x109] sm:$0xff] %vm279, %v5009
      %5042 = vst.msk [vmem:[%s538 + $0x111] sm:$0xff] %vm279, %v5010
      %5043 = vst.msk [vmem:[%s538 + $0x121] sm:$0xff] %vm279, %v5011
      %5044 = vst.msk [vmem:[%s538 + $0x129] sm:$0xff] %vm279, %v5012
      %5045 = vst.msk [vmem:[%s538 + $0x139] sm:$0xff] %vm279, %v5013
      %5046 = vst.msk [vmem:[%s538 + $0x141] sm:$0xff] %vm279, %v5014
      %5047 = vst.msk [vmem:[%s538 + $0x151] sm:$0xff] %vm279, %v5015
      %5048 = vst.msk [vmem:[%s538 + $0x159] sm:$0xff] %vm279, %v5016
      %5049 = vst.msk [vmem:[%s538 + $0x169] sm:$0xff] %vm279, %v5017
      %5050 = vst.msk [vmem:[%s538 + $0x171] sm:$0xff] %vm279, %v5018
      %v5051 = vld [vmem:[#allocation3] sm:$0xff]
      %v5052 = vld [vmem:[#allocation3 + $0x8] sm:$0xff]
      %v5053 = vld [vmem:[#allocation3 + $0x18] sm:$0xff]
      %v5054 = vld [vmem:[#allocation3 + $0x20] sm:$0xff]
      %v5055 = vld [vmem:[#allocation3 + $0x30] sm:$0xff]
      %v5056 = vld [vmem:[#allocation3 + $0x38] sm:$0xff]
      %v5057 = vld [vmem:[#allocation3 + $0x48] sm:$0xff]
      %v5058 = vld [vmem:[#allocation3 + $0x50] sm:$0xff]
      %v5059 = vld [vmem:[#allocation3 + $0x60] sm:$0xff]
      %v5060 = vld [vmem:[#allocation3 + $0x68] sm:$0xff]
      %v5061 = vld [vmem:[#allocation3 + $0x78] sm:$0xff]
      %v5062 = vld [vmem:[#allocation3 + $0x80] sm:$0xff]
      %v5063 = vld [vmem:[#allocation3 + $0x90] sm:$0xff]
      %v5064 = vld [vmem:[#allocation3 + $0x98] sm:$0xff]
      %v5065 = vld [vmem:[#allocation3 + $0xa8] sm:$0xff]
      %v5066 = vld [vmem:[#allocation3 + $0xb0] sm:$0xff]
      %v5067 = vld [vmem:[#allocation3 + $0xc0] sm:$0xff]
      %v5068 = vld [vmem:[#allocation3 + $0xc8] sm:$0xff]
      %v5069 = vld [vmem:[#allocation3 + $0xd8] sm:$0xff]
      %v5070 = vld [vmem:[#allocation3 + $0xe0] sm:$0xff]
      %v5071 = vld [vmem:[#allocation3 + $0xf0] sm:$0xff]
      %v5072 = vld [vmem:[#allocation3 + $0xf8] sm:$0xff]
      %v5073 = vld [vmem:[#allocation3 + $0x108] sm:$0xff]
      %v5074 = vld [vmem:[#allocation3 + $0x110] sm:$0xff]
      %v5075 = vld [vmem:[#allocation3 + $0x120] sm:$0xff]
      %v5076 = vld [vmem:[#allocation3 + $0x128] sm:$0xff]
      %v5077 = vld [vmem:[#allocation3 + $0x138] sm:$0xff]
      %v5078 = vld [vmem:[#allocation3 + $0x140] sm:$0xff]
      %v5079 = vld [vmem:[#allocation3 + $0x150] sm:$0xff]
      %v5080 = vld [vmem:[#allocation3 + $0x158] sm:$0xff]
      %v5081 = vld [vmem:[#allocation3 + $0x168] sm:$0xff]
      %v5082 = vld [vmem:[#allocation3 + $0x170] sm:$0xff]
      %v5083 = vld [vmem:[#allocation3 + $0x1] sm:$0xff]
      %v5084 = vld [vmem:[#allocation3 + $0x9] sm:$0xff]
      %v5085 = vld [vmem:[#allocation3 + $0x19] sm:$0xff]
      %v5086 = vld [vmem:[#allocation3 + $0x21] sm:$0xff]
      %v5087 = vld [vmem:[#allocation3 + $0x31] sm:$0xff]
      %v5088 = vld [vmem:[#allocation3 + $0x39] sm:$0xff]
      %v5089 = vld [vmem:[#allocation3 + $0x49] sm:$0xff]
      %v5090 = vld [vmem:[#allocation3 + $0x51] sm:$0xff]
      %v5091 = vld [vmem:[#allocation3 + $0x61] sm:$0xff]
      %v5092 = vld [vmem:[#allocation3 + $0x69] sm:$0xff]
      %v5093 = vld [vmem:[#allocation3 + $0x79] sm:$0xff]
      %v5094 = vld [vmem:[#allocation3 + $0x81] sm:$0xff]
      %v5095 = vld [vmem:[#allocation3 + $0x91] sm:$0xff]
      %v5096 = vld [vmem:[#allocation3 + $0x99] sm:$0xff]
      %v5097 = vld [vmem:[#allocation3 + $0xa9] sm:$0xff]
      %v5098 = vld [vmem:[#allocation3 + $0xb1] sm:$0xff]
      %v5099 = vld [vmem:[#allocation3 + $0xc1] sm:$0xff]
      %v5100 = vld [vmem:[#allocation3 + $0xc9] sm:$0xff]
      %v5101 = vld [vmem:[#allocation3 + $0xd9] sm:$0xff]
      %v5102 = vld [vmem:[#allocation3 + $0xe1] sm:$0xff]
      %v5103 = vld [vmem:[#allocation3 + $0xf1] sm:$0xff]
      %v5104 = vld [vmem:[#allocation3 + $0xf9] sm:$0xff]
      %v5105 = vld [vmem:[#allocation3 + $0x109] sm:$0xff]
      %v5106 = vld [vmem:[#allocation3 + $0x111] sm:$0xff]
      %v5107 = vld [vmem:[#allocation3 + $0x121] sm:$0xff]
      %v5108 = vld [vmem:[#allocation3 + $0x129] sm:$0xff]
      %v5109 = vld [vmem:[#allocation3 + $0x139] sm:$0xff]
      %v5110 = vld [vmem:[#allocation3 + $0x141] sm:$0xff]
      %v5111 = vld [vmem:[#allocation3 + $0x151] sm:$0xff]
      %v5112 = vld [vmem:[#allocation3 + $0x159] sm:$0xff]
      %v5113 = vld [vmem:[#allocation3 + $0x169] sm:$0xff]
      %v5114 = vld [vmem:[#allocation3 + $0x171] sm:$0xff]
      %v5115 = vld [vmem:[#allocation3 + $0x2] sm:$0xff]
      %v5116 = vld [vmem:[#allocation3 + $0xa] sm:$0xff]
      %v5117 = vld [vmem:[#allocation3 + $0x1a] sm:$0xff]
      %v5118 = vld [vmem:[#allocation3 + $0x22] sm:$0xff]
      %v5119 = vld [vmem:[#allocation3 + $0x32] sm:$0xff]
      %v5120 = vld [vmem:[#allocation3 + $0x3a] sm:$0xff]
      %v5121 = vld [vmem:[#allocation3 + $0x4a] sm:$0xff]
      %v5122 = vld [vmem:[#allocation3 + $0x52] sm:$0xff]
      %v5123 = vld [vmem:[#allocation3 + $0x62] sm:$0xff]
      %v5124 = vld [vmem:[#allocation3 + $0x6a] sm:$0xff]
      %v5125 = vld [vmem:[#allocation3 + $0x7a] sm:$0xff]
      %v5126 = vld [vmem:[#allocation3 + $0x82] sm:$0xff]
      %v5127 = vld [vmem:[#allocation3 + $0x92] sm:$0xff]
      %v5128 = vld [vmem:[#allocation3 + $0x9a] sm:$0xff]
      %v5129 = vld [vmem:[#allocation3 + $0xaa] sm:$0xff]
      %v5130 = vld [vmem:[#allocation3 + $0xb2] sm:$0xff]
      %v5131 = vld [vmem:[#allocation3 + $0xc2] sm:$0xff]
      %v5132 = vld [vmem:[#allocation3 + $0xca] sm:$0xff]
      %v5133 = vld [vmem:[#allocation3 + $0xda] sm:$0xff]
      %v5134 = vld [vmem:[#allocation3 + $0xe2] sm:$0xff]
      %v5135 = vld [vmem:[#allocation3 + $0xf2] sm:$0xff]
      %v5136 = vld [vmem:[#allocation3 + $0xfa] sm:$0xff]
      %v5137 = vld [vmem:[#allocation3 + $0x10a] sm:$0xff]
      %v5138 = vld [vmem:[#allocation3 + $0x112] sm:$0xff]
      %v5139 = vld [vmem:[#allocation3 + $0x122] sm:$0xff]
      %v5140 = vld [vmem:[#allocation3 + $0x12a] sm:$0xff]
      %v5141 = vld [vmem:[#allocation3 + $0x13a] sm:$0xff]
      %v5142 = vld [vmem:[#allocation3 + $0x142] sm:$0xff]
      %v5143 = vld [vmem:[#allocation3 + $0x152] sm:$0xff]
      %v5144 = vld [vmem:[#allocation3 + $0x15a] sm:$0xff]
      %v5145 = vld [vmem:[#allocation3 + $0x16a] sm:$0xff]
      %v5146 = vld [vmem:[#allocation3 + $0x172] sm:$0xff]
      %v5147 = vld [vmem:[%s538] sm:$0xff]
      %v5148 = vld [vmem:[%s538 + $0x8] sm:$0xff]
      %v5149 = vld [vmem:[%s538 + $0x18] sm:$0xff]
      %v5150 = vld [vmem:[%s538 + $0x20] sm:$0xff]
      %v5151 = vld [vmem:[%s538 + $0x30] sm:$0xff]
      %v5152 = vld [vmem:[%s538 + $0x38] sm:$0xff]
      %v5153 = vld [vmem:[%s538 + $0x48] sm:$0xff]
      %v5154 = vld [vmem:[%s538 + $0x50] sm:$0xff]
      %v5155 = vld [vmem:[%s538 + $0x60] sm:$0xff]
      %v5156 = vld [vmem:[%s538 + $0x68] sm:$0xff]
      %v5157 = vld [vmem:[%s538 + $0x78] sm:$0xff]
      %v5158 = vld [vmem:[%s538 + $0x80] sm:$0xff]
      %v5159 = vld [vmem:[%s538 + $0x90] sm:$0xff]
      %v5160 = vld [vmem:[%s538 + $0x98] sm:$0xff]
      %v5161 = vld [vmem:[%s538 + $0xa8] sm:$0xff]
      %v5162 = vld [vmem:[%s538 + $0xb0] sm:$0xff]
      %v5163 = vld [vmem:[%s538 + $0xc0] sm:$0xff]
      %v5164 = vld [vmem:[%s538 + $0xc8] sm:$0xff]
      %v5165 = vld [vmem:[%s538 + $0xd8] sm:$0xff]
      %v5166 = vld [vmem:[%s538 + $0xe0] sm:$0xff]
      %v5167 = vld [vmem:[%s538 + $0xf0] sm:$0xff]
      %v5168 = vld [vmem:[%s538 + $0xf8] sm:$0xff]
      %v5169 = vld [vmem:[%s538 + $0x108] sm:$0xff]
      %v5170 = vld [vmem:[%s538 + $0x110] sm:$0xff]
      %v5171 = vld [vmem:[%s538 + $0x120] sm:$0xff]
      %v5172 = vld [vmem:[%s538 + $0x128] sm:$0xff]
      %v5173 = vld [vmem:[%s538 + $0x138] sm:$0xff]
      %v5174 = vld [vmem:[%s538 + $0x140] sm:$0xff]
      %v5175 = vld [vmem:[%s538 + $0x150] sm:$0xff]
      %v5176 = vld [vmem:[%s538 + $0x158] sm:$0xff]
      %v5177 = vld [vmem:[%s538 + $0x168] sm:$0xff]
      %v5178 = vld [vmem:[%s538 + $0x170] sm:$0xff]
      %v5179 = vld [vmem:[%s538 + $0x1] sm:$0xff]
      %v5180 = vld [vmem:[%s538 + $0x9] sm:$0xff]
      %v5181 = vld [vmem:[%s538 + $0x19] sm:$0xff]
      %v5182 = vld [vmem:[%s538 + $0x21] sm:$0xff]
      %v5183 = vld [vmem:[%s538 + $0x31] sm:$0xff]
      %v5184 = vld [vmem:[%s538 + $0x39] sm:$0xff]
      %v5185 = vld [vmem:[%s538 + $0x49] sm:$0xff]
      %v5186 = vld [vmem:[%s538 + $0x51] sm:$0xff]
      %v5187 = vld [vmem:[%s538 + $0x61] sm:$0xff]
      %v5188 = vld [vmem:[%s538 + $0x69] sm:$0xff]
      %v5189 = vld [vmem:[%s538 + $0x79] sm:$0xff]
      %v5190 = vld [vmem:[%s538 + $0x81] sm:$0xff]
      %v5191 = vld [vmem:[%s538 + $0x91] sm:$0xff]
      %v5192 = vld [vmem:[%s538 + $0x99] sm:$0xff]
      %v5193 = vld [vmem:[%s538 + $0xa9] sm:$0xff]
      %v5194 = vld [vmem:[%s538 + $0xb1] sm:$0xff]
      %v5195 = vld [vmem:[%s538 + $0xc1] sm:$0xff]
      %v5196 = vld [vmem:[%s538 + $0xc9] sm:$0xff]
      %v5197 = vld [vmem:[%s538 + $0xd9] sm:$0xff]
      %v5198 = vld [vmem:[%s538 + $0xe1] sm:$0xff]
      %v5199 = vld [vmem:[%s538 + $0xf1] sm:$0xff]
      %v5200 = vld [vmem:[%s538 + $0xf9] sm:$0xff]
      %v5201 = vld [vmem:[%s538 + $0x109] sm:$0xff]
      %v5202 = vld [vmem:[%s538 + $0x111] sm:$0xff]
      %v5203 = vld [vmem:[%s538 + $0x121] sm:$0xff]
      %v5204 = vld [vmem:[%s538 + $0x129] sm:$0xff]
      %v5205 = vld [vmem:[%s538 + $0x139] sm:$0xff]
      %v5206 = vld [vmem:[%s538 + $0x141] sm:$0xff]
      %v5207 = vld [vmem:[%s538 + $0x151] sm:$0xff]
      %v5208 = vld [vmem:[%s538 + $0x159] sm:$0xff]
      %v5209 = vld [vmem:[%s538 + $0x169] sm:$0xff]
      %v5210 = vld [vmem:[%s538 + $0x171] sm:$0xff]
      %v5211 = vld [vmem:[%s538 + $0x2] sm:$0xff]
      %v5212 = vld [vmem:[%s538 + $0xa] sm:$0xff]
      %v5213 = vld [vmem:[%s538 + $0x1a] sm:$0xff]
      %v5214 = vld [vmem:[%s538 + $0x22] sm:$0xff]
      %v5215 = vld [vmem:[%s538 + $0x32] sm:$0xff]
      %v5216 = vld [vmem:[%s538 + $0x3a] sm:$0xff]
      %v5217 = vld [vmem:[%s538 + $0x4a] sm:$0xff]
      %v5218 = vld [vmem:[%s538 + $0x52] sm:$0xff]
      %v5219 = vld [vmem:[%s538 + $0x62] sm:$0xff]
      %v5220 = vld [vmem:[%s538 + $0x6a] sm:$0xff]
      %v5221 = vld [vmem:[%s538 + $0x7a] sm:$0xff]
      %v5222 = vld [vmem:[%s538 + $0x82] sm:$0xff]
      %v5223 = vld [vmem:[%s538 + $0x92] sm:$0xff]
      %v5224 = vld [vmem:[%s538 + $0x9a] sm:$0xff]
      %v5225 = vld [vmem:[%s538 + $0xaa] sm:$0xff]
      %v5226 = vld [vmem:[%s538 + $0xb2] sm:$0xff]
      %v5227 = vld [vmem:[%s538 + $0xc2] sm:$0xff]
      %v5228 = vld [vmem:[%s538 + $0xca] sm:$0xff]
      %v5229 = vld [vmem:[%s538 + $0xda] sm:$0xff]
      %v5230 = vld [vmem:[%s538 + $0xe2] sm:$0xff]
      %v5231 = vld [vmem:[%s538 + $0xf2] sm:$0xff]
      %v5232 = vld [vmem:[%s538 + $0xfa] sm:$0xff]
      %v5233 = vld [vmem:[%s538 + $0x10a] sm:$0xff]
      %v5234 = vld [vmem:[%s538 + $0x112] sm:$0xff]
      %v5235 = vld [vmem:[%s538 + $0x122] sm:$0xff]
      %v5236 = vld [vmem:[%s538 + $0x12a] sm:$0xff]
      %v5237 = vld [vmem:[%s538 + $0x13a] sm:$0xff]
      %v5238 = vld [vmem:[%s538 + $0x142] sm:$0xff]
      %v5239 = vld [vmem:[%s538 + $0x152] sm:$0xff]
      %v5240 = vld [vmem:[%s538 + $0x15a] sm:$0xff]
      %v5241 = vld [vmem:[%s538 + $0x16a] sm:$0xff]
      %v5242 = vld [vmem:[%s538 + $0x172] sm:$0xff]
      %v5243 = vld [vmem:[%s763] sm:$0xff]
      %v5244 = vld [vmem:[%s763 + $0x8] sm:$0xff]
      %v5245 = vld [vmem:[%s763 + $0x18] sm:$0xff]
      %v5246 = vld [vmem:[%s763 + $0x20] sm:$0xff]
      %v5247 = vld [vmem:[%s763 + $0x30] sm:$0xff]
      %v5248 = vld [vmem:[%s763 + $0x38] sm:$0xff]
      %v5249 = vld [vmem:[%s763 + $0x48] sm:$0xff]
      %v5250 = vld [vmem:[%s763 + $0x50] sm:$0xff]
      %v5251 = vld [vmem:[%s763 + $0x60] sm:$0xff]
      %v5252 = vld [vmem:[%s763 + $0x68] sm:$0xff]
      %v5253 = vld [vmem:[%s763 + $0x78] sm:$0xff]
      %v5254 = vld [vmem:[%s763 + $0x80] sm:$0xff]
      %v5255 = vld [vmem:[%s763 + $0x90] sm:$0xff]
      %v5256 = vld [vmem:[%s763 + $0x98] sm:$0xff]
      %v5257 = vld [vmem:[%s763 + $0xa8] sm:$0xff]
      %v5258 = vld [vmem:[%s763 + $0xb0] sm:$0xff]
      %v5259 = vld [vmem:[%s763 + $0xc0] sm:$0xff]
      %v5260 = vld [vmem:[%s763 + $0xc8] sm:$0xff]
      %v5261 = vld [vmem:[%s763 + $0xd8] sm:$0xff]
      %v5262 = vld [vmem:[%s763 + $0xe0] sm:$0xff]
      %v5263 = vld [vmem:[%s763 + $0xf0] sm:$0xff]
      %v5264 = vld [vmem:[%s763 + $0xf8] sm:$0xff]
      %v5265 = vld [vmem:[%s763 + $0x108] sm:$0xff]
      %v5266 = vld [vmem:[%s763 + $0x110] sm:$0xff]
      %v5267 = vld [vmem:[%s763 + $0x120] sm:$0xff]
      %v5268 = vld [vmem:[%s763 + $0x128] sm:$0xff]
      %v5269 = vld [vmem:[%s763 + $0x138] sm:$0xff]
      %v5270 = vld [vmem:[%s763 + $0x140] sm:$0xff]
      %v5271 = vld [vmem:[%s763 + $0x150] sm:$0xff]
      %v5272 = vld [vmem:[%s763 + $0x158] sm:$0xff]
      %v5273 = vld [vmem:[%s763 + $0x168] sm:$0xff]
      %v5274 = vld [vmem:[%s763 + $0x170] sm:$0xff]
      %v5275 = vld [vmem:[%s763 + $0x1] sm:$0xff]
      %v5276 = vld [vmem:[%s763 + $0x9] sm:$0xff]
      %v5277 = vld [vmem:[%s763 + $0x19] sm:$0xff]
      %v5278 = vld [vmem:[%s763 + $0x21] sm:$0xff]
      %v5279 = vld [vmem:[%s763 + $0x31] sm:$0xff]
      %v5280 = vld [vmem:[%s763 + $0x39] sm:$0xff]
      %v5281 = vld [vmem:[%s763 + $0x49] sm:$0xff]
      %v5282 = vld [vmem:[%s763 + $0x51] sm:$0xff]
      %v5283 = vld [vmem:[%s763 + $0x61] sm:$0xff]
      %v5284 = vld [vmem:[%s763 + $0x69] sm:$0xff]
      %v5285 = vld [vmem:[%s763 + $0x79] sm:$0xff]
      %v5286 = vld [vmem:[%s763 + $0x81] sm:$0xff]
      %v5287 = vld [vmem:[%s763 + $0x91] sm:$0xff]
      %v5288 = vld [vmem:[%s763 + $0x99] sm:$0xff]
      %v5289 = vld [vmem:[%s763 + $0xa9] sm:$0xff]
      %v5290 = vld [vmem:[%s763 + $0xb1] sm:$0xff]
      %v5291 = vld [vmem:[%s763 + $0xc1] sm:$0xff]
      %v5292 = vld [vmem:[%s763 + $0xc9] sm:$0xff]
      %v5293 = vld [vmem:[%s763 + $0xd9] sm:$0xff]
      %v5294 = vld [vmem:[%s763 + $0xe1] sm:$0xff]
      %v5295 = vld [vmem:[%s763 + $0xf1] sm:$0xff]
      %v5296 = vld [vmem:[%s763 + $0xf9] sm:$0xff]
      %v5297 = vld [vmem:[%s763 + $0x109] sm:$0xff]
      %v5298 = vld [vmem:[%s763 + $0x111] sm:$0xff]
      %v5299 = vld [vmem:[%s763 + $0x121] sm:$0xff]
      %v5300 = vld [vmem:[%s763 + $0x129] sm:$0xff]
      %v5301 = vld [vmem:[%s763 + $0x139] sm:$0xff]
      %v5302 = vld [vmem:[%s763 + $0x141] sm:$0xff]
      %v5303 = vld [vmem:[%s763 + $0x151] sm:$0xff]
      %v5304 = vld [vmem:[%s763 + $0x159] sm:$0xff]
      %v5305 = vld [vmem:[%s763 + $0x169] sm:$0xff]
      %v5306 = vld [vmem:[%s763 + $0x171] sm:$0xff]
      %v5307 = vld [vmem:[%s763 + $0x2] sm:$0xff]
      %v5308 = vld [vmem:[%s763 + $0xa] sm:$0xff]
      %v5309 = vld [vmem:[%s763 + $0x1a] sm:$0xff]
      %v5310 = vld [vmem:[%s763 + $0x22] sm:$0xff]
      %v5311 = vld [vmem:[%s763 + $0x32] sm:$0xff]
      %v5312 = vld [vmem:[%s763 + $0x3a] sm:$0xff]
      %v5313 = vld [vmem:[%s763 + $0x4a] sm:$0xff]
      %v5314 = vld [vmem:[%s763 + $0x52] sm:$0xff]
      %v5315 = vld [vmem:[%s763 + $0x62] sm:$0xff]
      %v5316 = vld [vmem:[%s763 + $0x6a] sm:$0xff]
      %v5317 = vld [vmem:[%s763 + $0x7a] sm:$0xff]
      %v5318 = vld [vmem:[%s763 + $0x82] sm:$0xff]
      %v5319 = vld [vmem:[%s763 + $0x92] sm:$0xff]
      %v5320 = vld [vmem:[%s763 + $0x9a] sm:$0xff]
      %v5321 = vld [vmem:[%s763 + $0xaa] sm:$0xff]
      %v5322 = vld [vmem:[%s763 + $0xb2] sm:$0xff]
      %v5323 = vld [vmem:[%s763 + $0xc2] sm:$0xff]
      %v5324 = vld [vmem:[%s763 + $0xca] sm:$0xff]
      %v5325 = vld [vmem:[%s763 + $0xda] sm:$0xff]
      %v5326 = vld [vmem:[%s763 + $0xe2] sm:$0xff]
      %v5327 = vld [vmem:[%s763 + $0xf2] sm:$0xff]
      %v5328 = vld [vmem:[%s763 + $0xfa] sm:$0xff]
      %v5329 = vld [vmem:[%s763 + $0x10a] sm:$0xff]
      %v5330 = vld [vmem:[%s763 + $0x112] sm:$0xff]
      %v5331 = vld [vmem:[%s763 + $0x122] sm:$0xff]
      %v5332 = vld [vmem:[%s763 + $0x12a] sm:$0xff]
      %v5333 = vld [vmem:[%s763 + $0x13a] sm:$0xff]
      %v5334 = vld [vmem:[%s763 + $0x142] sm:$0xff]
      %v5335 = vld [vmem:[%s763 + $0x152] sm:$0xff]
      %v5336 = vld [vmem:[%s763 + $0x15a] sm:$0xff]
      %v5337 = vld [vmem:[%s763 + $0x16a] sm:$0xff]
      %v5338 = vld [vmem:[%s763 + $0x172] sm:$0xff]
      %5371 = vrot.lane.b32.xlu0 %v5083, 20
      %v5372 = vpop.permute.xlu0 %5371
      %5373 = vrot.lane.b32.xlu0 %v5084, 20
      %v5374 = vpop.permute.xlu0 %5373
      %5375 = vrot.lane.b32.xlu0 %v5085, 20
      %v5376 = vpop.permute.xlu0 %5375
      %5377 = vrot.lane.b32.xlu0 %v5086, 20
      %v5378 = vpop.permute.xlu0 %5377
      %5379 = vrot.lane.b32.xlu0 %v5087, 20
      %v5380 = vpop.permute.xlu0 %5379
      %5381 = vrot.lane.b32.xlu0 %v5088, 20
      %v5382 = vpop.permute.xlu0 %5381
      %5383 = vrot.lane.b32.xlu0 %v5089, 20
      %v5384 = vpop.permute.xlu0 %5383
      %5385 = vrot.lane.b32.xlu0 %v5090, 20
      %v5386 = vpop.permute.xlu0 %5385
      %5387 = vrot.lane.b32.xlu0 %v5091, 20
      %v5388 = vpop.permute.xlu0 %5387
      %5389 = vrot.lane.b32.xlu0 %v5092, 20
      %v5390 = vpop.permute.xlu0 %5389
      %5391 = vrot.lane.b32.xlu0 %v5093, 20
      %v5392 = vpop.permute.xlu0 %5391
      %5393 = vrot.lane.b32.xlu0 %v5094, 20
      %v5394 = vpop.permute.xlu0 %5393
      %5395 = vrot.lane.b32.xlu0 %v5095, 20
      %v5396 = vpop.permute.xlu0 %5395
      %5397 = vrot.lane.b32.xlu0 %v5096, 20
      %v5398 = vpop.permute.xlu0 %5397
      %5399 = vrot.lane.b32.xlu0 %v5097, 20
      %v5400 = vpop.permute.xlu0 %5399
      %5401 = vrot.lane.b32.xlu0 %v5098, 20
      %v5402 = vpop.permute.xlu0 %5401
      %5403 = vrot.lane.b32.xlu0 %v5099, 20
      %v5404 = vpop.permute.xlu0 %5403
      %5405 = vrot.lane.b32.xlu0 %v5100, 20
      %v5406 = vpop.permute.xlu0 %5405
      %5407 = vrot.lane.b32.xlu0 %v5101, 20
      %v5408 = vpop.permute.xlu0 %5407
      %5409 = vrot.lane.b32.xlu0 %v5102, 20
      %v5410 = vpop.permute.xlu0 %5409
      %5411 = vrot.lane.b32.xlu0 %v5103, 20
      %v5412 = vpop.permute.xlu0 %5411
      %5413 = vrot.lane.b32.xlu0 %v5104, 20
      %v5414 = vpop.permute.xlu0 %5413
      %5415 = vrot.lane.b32.xlu0 %v5105, 20
      %v5416 = vpop.permute.xlu0 %5415
      %5417 = vrot.lane.b32.xlu0 %v5106, 20
      %v5418 = vpop.permute.xlu0 %5417
      %5419 = vrot.lane.b32.xlu0 %v5107, 20
      %v5420 = vpop.permute.xlu0 %5419
      %5421 = vrot.lane.b32.xlu0 %v5108, 20
      %v5422 = vpop.permute.xlu0 %5421
      %5423 = vrot.lane.b32.xlu0 %v5109, 20
      %v5424 = vpop.permute.xlu0 %5423
      %5425 = vrot.lane.b32.xlu0 %v5110, 20
      %v5426 = vpop.permute.xlu0 %5425
      %5427 = vrot.lane.b32.xlu0 %v5111, 20
      %v5428 = vpop.permute.xlu0 %5427
      %5429 = vrot.lane.b32.xlu0 %v5112, 20
      %v5430 = vpop.permute.xlu0 %5429
      %5431 = vrot.lane.b32.xlu0 %v5113, 20
      %v5432 = vpop.permute.xlu0 %5431
      %5433 = vrot.lane.b32.xlu0 %v5114, 20
      %v5434 = vpop.permute.xlu0 %5433
      %5499 = vrot.lane.b32.xlu0 %v5115, 40
      %v5500 = vpop.permute.xlu0 %5499
      %5501 = vrot.lane.b32.xlu0 %v5116, 40
      %v5502 = vpop.permute.xlu0 %5501
      %5503 = vrot.lane.b32.xlu0 %v5117, 40
      %v5504 = vpop.permute.xlu0 %5503
      %5505 = vrot.lane.b32.xlu0 %v5118, 40
      %v5506 = vpop.permute.xlu0 %5505
      %5507 = vrot.lane.b32.xlu0 %v5119, 40
      %v5508 = vpop.permute.xlu0 %5507
      %5509 = vrot.lane.b32.xlu0 %v5120, 40
      %v5510 = vpop.permute.xlu0 %5509
      %5511 = vrot.lane.b32.xlu0 %v5121, 40
      %v5512 = vpop.permute.xlu0 %5511
      %5513 = vrot.lane.b32.xlu0 %v5122, 40
      %v5514 = vpop.permute.xlu0 %5513
      %5515 = vrot.lane.b32.xlu0 %v5123, 40
      %v5516 = vpop.permute.xlu0 %5515
      %5517 = vrot.lane.b32.xlu0 %v5124, 40
      %v5518 = vpop.permute.xlu0 %5517
      %5519 = vrot.lane.b32.xlu0 %v5125, 40
      %v5520 = vpop.permute.xlu0 %5519
      %5521 = vrot.lane.b32.xlu0 %v5126, 40
      %v5522 = vpop.permute.xlu0 %5521
      %5523 = vrot.lane.b32.xlu0 %v5127, 40
      %v5524 = vpop.permute.xlu0 %5523
      %5525 = vrot.lane.b32.xlu0 %v5128, 40
      %v5526 = vpop.permute.xlu0 %5525
      %5527 = vrot.lane.b32.xlu0 %v5129, 40
      %v5528 = vpop.permute.xlu0 %5527
      %5529 = vrot.lane.b32.xlu0 %v5130, 40
      %v5530 = vpop.permute.xlu0 %5529
      %5531 = vrot.lane.b32.xlu0 %v5131, 40
      %v5532 = vpop.permute.xlu0 %5531
      %5533 = vrot.lane.b32.xlu0 %v5132, 40
      %v5534 = vpop.permute.xlu0 %5533
      %5535 = vrot.lane.b32.xlu0 %v5133, 40
      %v5536 = vpop.permute.xlu0 %5535
      %5537 = vrot.lane.b32.xlu0 %v5134, 40
      %v5538 = vpop.permute.xlu0 %5537
      %5539 = vrot.lane.b32.xlu0 %v5135, 40
      %v5540 = vpop.permute.xlu0 %5539
      %5541 = vrot.lane.b32.xlu0 %v5136, 40
      %v5542 = vpop.permute.xlu0 %5541
      %5543 = vrot.lane.b32.xlu0 %v5137, 40
      %v5544 = vpop.permute.xlu0 %5543
      %5545 = vrot.lane.b32.xlu0 %v5138, 40
      %v5546 = vpop.permute.xlu0 %5545
      %5547 = vrot.lane.b32.xlu0 %v5139, 40
      %v5548 = vpop.permute.xlu0 %5547
      %5549 = vrot.lane.b32.xlu0 %v5140, 40
      %v5550 = vpop.permute.xlu0 %5549
      %5551 = vrot.lane.b32.xlu0 %v5141, 40
      %v5552 = vpop.permute.xlu0 %5551
      %5553 = vrot.lane.b32.xlu0 %v5142, 40
      %v5554 = vpop.permute.xlu0 %5553
      %5555 = vrot.lane.b32.xlu0 %v5143, 40
      %v5556 = vpop.permute.xlu0 %5555
      %5557 = vrot.lane.b32.xlu0 %v5144, 40
      %v5558 = vpop.permute.xlu0 %5557
      %5559 = vrot.lane.b32.xlu0 %v5145, 40
      %v5560 = vpop.permute.xlu0 %5559
      %5561 = vrot.lane.b32.xlu0 %v5146, 40
      %v5562 = vpop.permute.xlu0 %5561
      %5627 = vrot.lane.b32.xlu0 %v5147, 60
      %v5628 = vpop.permute.xlu0 %5627
      %5629 = vrot.lane.b32.xlu0 %v5148, 60
      %v5630 = vpop.permute.xlu0 %5629
      %5631 = vrot.lane.b32.xlu0 %v5149, 60
      %v5632 = vpop.permute.xlu0 %5631
      %5633 = vrot.lane.b32.xlu0 %v5150, 60
      %v5634 = vpop.permute.xlu0 %5633
      %5635 = vrot.lane.b32.xlu0 %v5151, 60
      %v5636 = vpop.permute.xlu0 %5635
      %5637 = vrot.lane.b32.xlu0 %v5152, 60
      %v5638 = vpop.permute.xlu0 %5637
      %5639 = vrot.lane.b32.xlu0 %v5153, 60
      %v5640 = vpop.permute.xlu0 %5639
      %5641 = vrot.lane.b32.xlu0 %v5154, 60
      %v5642 = vpop.permute.xlu0 %5641
      %5643 = vrot.lane.b32.xlu0 %v5155, 60
      %v5644 = vpop.permute.xlu0 %5643
      %5645 = vrot.lane.b32.xlu0 %v5156, 60
      %v5646 = vpop.permute.xlu0 %5645
      %5647 = vrot.lane.b32.xlu0 %v5157, 60
      %v5648 = vpop.permute.xlu0 %5647
      %5649 = vrot.lane.b32.xlu0 %v5158, 60
      %v5650 = vpop.permute.xlu0 %5649
      %5651 = vrot.lane.b32.xlu0 %v5159, 60
      %v5652 = vpop.permute.xlu0 %5651
      %5653 = vrot.lane.b32.xlu0 %v5160, 60
      %v5654 = vpop.permute.xlu0 %5653
      %5655 = vrot.lane.b32.xlu0 %v5161, 60
      %v5656 = vpop.permute.xlu0 %5655
      %5657 = vrot.lane.b32.xlu0 %v5162, 60
      %v5658 = vpop.permute.xlu0 %5657
      %5659 = vrot.lane.b32.xlu0 %v5163, 60
      %v5660 = vpop.permute.xlu0 %5659
      %5661 = vrot.lane.b32.xlu0 %v5164, 60
      %v5662 = vpop.permute.xlu0 %5661
      %5663 = vrot.lane.b32.xlu0 %v5165, 60
      %v5664 = vpop.permute.xlu0 %5663
      %5665 = vrot.lane.b32.xlu0 %v5166, 60
      %v5666 = vpop.permute.xlu0 %5665
      %5667 = vrot.lane.b32.xlu0 %v5167, 60
      %v5668 = vpop.permute.xlu0 %5667
      %5669 = vrot.lane.b32.xlu0 %v5168, 60
      %v5670 = vpop.permute.xlu0 %5669
      %5671 = vrot.lane.b32.xlu0 %v5169, 60
      %v5672 = vpop.permute.xlu0 %5671
      %5673 = vrot.lane.b32.xlu0 %v5170, 60
      %v5674 = vpop.permute.xlu0 %5673
      %5675 = vrot.lane.b32.xlu0 %v5171, 60
      %v5676 = vpop.permute.xlu0 %5675
      %5677 = vrot.lane.b32.xlu0 %v5172, 60
      %v5678 = vpop.permute.xlu0 %5677
      %5679 = vrot.lane.b32.xlu0 %v5173, 60
      %v5680 = vpop.permute.xlu0 %5679
      %5681 = vrot.lane.b32.xlu0 %v5174, 60
      %v5682 = vpop.permute.xlu0 %5681
      %5683 = vrot.lane.b32.xlu0 %v5175, 60
      %v5684 = vpop.permute.xlu0 %5683
      %5685 = vrot.lane.b32.xlu0 %v5176, 60
      %v5686 = vpop.permute.xlu0 %5685
      %5687 = vrot.lane.b32.xlu0 %v5177, 60
      %v5688 = vpop.permute.xlu0 %5687
      %5689 = vrot.lane.b32.xlu0 %v5178, 60
      %v5690 = vpop.permute.xlu0 %5689
      %5755 = vrot.lane.b32.xlu0 %v5179, 80
      %v5756 = vpop.permute.xlu0 %5755
      %5757 = vrot.lane.b32.xlu0 %v5180, 80
      %v5758 = vpop.permute.xlu0 %5757
      %5759 = vrot.lane.b32.xlu0 %v5181, 80
      %v5760 = vpop.permute.xlu0 %5759
      %5761 = vrot.lane.b32.xlu0 %v5182, 80
      %v5762 = vpop.permute.xlu0 %5761
      %5763 = vrot.lane.b32.xlu0 %v5183, 80
      %v5764 = vpop.permute.xlu0 %5763
      %5765 = vrot.lane.b32.xlu0 %v5184, 80
      %v5766 = vpop.permute.xlu0 %5765
      %5767 = vrot.lane.b32.xlu0 %v5185, 80
      %v5768 = vpop.permute.xlu0 %5767
      %5769 = vrot.lane.b32.xlu0 %v5186, 80
      %v5770 = vpop.permute.xlu0 %5769
      %5771 = vrot.lane.b32.xlu0 %v5187, 80
      %v5772 = vpop.permute.xlu0 %5771
      %5773 = vrot.lane.b32.xlu0 %v5188, 80
      %v5774 = vpop.permute.xlu0 %5773
      %5775 = vrot.lane.b32.xlu0 %v5189, 80
      %v5776 = vpop.permute.xlu0 %5775
      %5777 = vrot.lane.b32.xlu0 %v5190, 80
      %v5778 = vpop.permute.xlu0 %5777
      %5779 = vrot.lane.b32.xlu0 %v5191, 80
      %v5780 = vpop.permute.xlu0 %5779
      %5781 = vrot.lane.b32.xlu0 %v5192, 80
      %v5782 = vpop.permute.xlu0 %5781
      %5783 = vrot.lane.b32.xlu0 %v5193, 80
      %v5784 = vpop.permute.xlu0 %5783
      %5785 = vrot.lane.b32.xlu0 %v5194, 80
      %v5786 = vpop.permute.xlu0 %5785
      %5787 = vrot.lane.b32.xlu0 %v5195, 80
      %v5788 = vpop.permute.xlu0 %5787
      %5789 = vrot.lane.b32.xlu0 %v5196, 80
      %v5790 = vpop.permute.xlu0 %5789
      %5791 = vrot.lane.b32.xlu0 %v5197, 80
      %v5792 = vpop.permute.xlu0 %5791
      %5793 = vrot.lane.b32.xlu0 %v5198, 80
      %v5794 = vpop.permute.xlu0 %5793
      %5795 = vrot.lane.b32.xlu0 %v5199, 80
      %v5796 = vpop.permute.xlu0 %5795
      %5797 = vrot.lane.b32.xlu0 %v5200, 80
      %v5798 = vpop.permute.xlu0 %5797
      %5799 = vrot.lane.b32.xlu0 %v5201, 80
      %v5800 = vpop.permute.xlu0 %5799
      %5801 = vrot.lane.b32.xlu0 %v5202, 80
      %v5802 = vpop.permute.xlu0 %5801
      %5803 = vrot.lane.b32.xlu0 %v5203, 80
      %v5804 = vpop.permute.xlu0 %5803
      %5805 = vrot.lane.b32.xlu0 %v5204, 80
      %v5806 = vpop.permute.xlu0 %5805
      %5807 = vrot.lane.b32.xlu0 %v5205, 80
      %v5808 = vpop.permute.xlu0 %5807
      %5809 = vrot.lane.b32.xlu0 %v5206, 80
      %v5810 = vpop.permute.xlu0 %5809
      %5811 = vrot.lane.b32.xlu0 %v5207, 80
      %v5812 = vpop.permute.xlu0 %5811
      %5813 = vrot.lane.b32.xlu0 %v5208, 80
      %v5814 = vpop.permute.xlu0 %5813
      %5815 = vrot.lane.b32.xlu0 %v5209, 80
      %v5816 = vpop.permute.xlu0 %5815
      %5817 = vrot.lane.b32.xlu0 %v5210, 80
      %v5818 = vpop.permute.xlu0 %5817
      %5883 = vrot.lane.b32.xlu0 %v5211, 100
      %v5884 = vpop.permute.xlu0 %5883
      %5885 = vrot.lane.b32.xlu0 %v5212, 100
      %v5886 = vpop.permute.xlu0 %5885
      %5887 = vrot.lane.b32.xlu0 %v5213, 100
      %v5888 = vpop.permute.xlu0 %5887
      %5889 = vrot.lane.b32.xlu0 %v5214, 100
      %v5890 = vpop.permute.xlu0 %5889
      %5891 = vrot.lane.b32.xlu0 %v5215, 100
      %v5892 = vpop.permute.xlu0 %5891
      %5893 = vrot.lane.b32.xlu0 %v5216, 100
      %v5894 = vpop.permute.xlu0 %5893
      %5895 = vrot.lane.b32.xlu0 %v5217, 100
      %v5896 = vpop.permute.xlu0 %5895
      %5897 = vrot.lane.b32.xlu0 %v5218, 100
      %v5898 = vpop.permute.xlu0 %5897
      %5899 = vrot.lane.b32.xlu0 %v5219, 100
      %v5900 = vpop.permute.xlu0 %5899
      %5901 = vrot.lane.b32.xlu0 %v5220, 100
      %v5902 = vpop.permute.xlu0 %5901
      %5903 = vrot.lane.b32.xlu0 %v5221, 100
      %v5904 = vpop.permute.xlu0 %5903
      %5905 = vrot.lane.b32.xlu0 %v5222, 100
      %v5906 = vpop.permute.xlu0 %5905
      %5907 = vrot.lane.b32.xlu0 %v5223, 100
      %v5908 = vpop.permute.xlu0 %5907
      %5909 = vrot.lane.b32.xlu0 %v5224, 100
      %v5910 = vpop.permute.xlu0 %5909
      %5911 = vrot.lane.b32.xlu0 %v5225, 100
      %v5912 = vpop.permute.xlu0 %5911
      %5913 = vrot.lane.b32.xlu0 %v5226, 100
      %v5914 = vpop.permute.xlu0 %5913
      %5915 = vrot.lane.b32.xlu0 %v5227, 100
      %v5916 = vpop.permute.xlu0 %5915
      %5917 = vrot.lane.b32.xlu0 %v5228, 100
      %v5918 = vpop.permute.xlu0 %5917
      %5919 = vrot.lane.b32.xlu0 %v5229, 100
      %v5920 = vpop.permute.xlu0 %5919
      %5921 = vrot.lane.b32.xlu0 %v5230, 100
      %v5922 = vpop.permute.xlu0 %5921
      %5923 = vrot.lane.b32.xlu0 %v5231, 100
      %v5924 = vpop.permute.xlu0 %5923
      %5925 = vrot.lane.b32.xlu0 %v5232, 100
      %v5926 = vpop.permute.xlu0 %5925
      %5927 = vrot.lane.b32.xlu0 %v5233, 100
      %v5928 = vpop.permute.xlu0 %5927
      %5929 = vrot.lane.b32.xlu0 %v5234, 100
      %v5930 = vpop.permute.xlu0 %5929
      %5931 = vrot.lane.b32.xlu0 %v5235, 100
      %v5932 = vpop.permute.xlu0 %5931
      %5933 = vrot.lane.b32.xlu0 %v5236, 100
      %v5934 = vpop.permute.xlu0 %5933
      %5935 = vrot.lane.b32.xlu0 %v5237, 100
      %v5936 = vpop.permute.xlu0 %5935
      %5937 = vrot.lane.b32.xlu0 %v5238, 100
      %v5938 = vpop.permute.xlu0 %5937
      %5939 = vrot.lane.b32.xlu0 %v5239, 100
      %v5940 = vpop.permute.xlu0 %5939
      %5941 = vrot.lane.b32.xlu0 %v5240, 100
      %v5942 = vpop.permute.xlu0 %5941
      %5943 = vrot.lane.b32.xlu0 %v5241, 100
      %v5944 = vpop.permute.xlu0 %5943
      %5945 = vrot.lane.b32.xlu0 %v5242, 100
      %v5946 = vpop.permute.xlu0 %5945
      %6011 = vrot.lane.b32.xlu0 %v5243, 120
      %v6012 = vpop.permute.xlu0 %6011
      %6013 = vrot.lane.b32.xlu0 %v5244, 120
      %v6014 = vpop.permute.xlu0 %6013
      %6015 = vrot.lane.b32.xlu0 %v5245, 120
      %v6016 = vpop.permute.xlu0 %6015
      %6017 = vrot.lane.b32.xlu0 %v5246, 120
      %v6018 = vpop.permute.xlu0 %6017
      %6019 = vrot.lane.b32.xlu0 %v5247, 120
      %v6020 = vpop.permute.xlu0 %6019
      %6021 = vrot.lane.b32.xlu0 %v5248, 120
      %v6022 = vpop.permute.xlu0 %6021
      %6023 = vrot.lane.b32.xlu0 %v5249, 120
      %v6024 = vpop.permute.xlu0 %6023
      %6025 = vrot.lane.b32.xlu0 %v5250, 120
      %v6026 = vpop.permute.xlu0 %6025
      %6027 = vrot.lane.b32.xlu0 %v5251, 120
      %v6028 = vpop.permute.xlu0 %6027
      %6029 = vrot.lane.b32.xlu0 %v5252, 120
      %v6030 = vpop.permute.xlu0 %6029
      %6031 = vrot.lane.b32.xlu0 %v5253, 120
      %v6032 = vpop.permute.xlu0 %6031
      %6033 = vrot.lane.b32.xlu0 %v5254, 120
      %v6034 = vpop.permute.xlu0 %6033
      %6035 = vrot.lane.b32.xlu0 %v5255, 120
      %v6036 = vpop.permute.xlu0 %6035
      %6037 = vrot.lane.b32.xlu0 %v5256, 120
      %v6038 = vpop.permute.xlu0 %6037
      %6039 = vrot.lane.b32.xlu0 %v5257, 120
      %v6040 = vpop.permute.xlu0 %6039
      %6041 = vrot.lane.b32.xlu0 %v5258, 120
      %v6042 = vpop.permute.xlu0 %6041
      %6043 = vrot.lane.b32.xlu0 %v5259, 120
      %v6044 = vpop.permute.xlu0 %6043
      %6045 = vrot.lane.b32.xlu0 %v5260, 120
      %v6046 = vpop.permute.xlu0 %6045
      %6047 = vrot.lane.b32.xlu0 %v5261, 120
      %v6048 = vpop.permute.xlu0 %6047
      %6049 = vrot.lane.b32.xlu0 %v5262, 120
      %v6050 = vpop.permute.xlu0 %6049
      %6051 = vrot.lane.b32.xlu0 %v5263, 120
      %v6052 = vpop.permute.xlu0 %6051
      %6053 = vrot.lane.b32.xlu0 %v5264, 120
      %v6054 = vpop.permute.xlu0 %6053
      %6055 = vrot.lane.b32.xlu0 %v5265, 120
      %v6056 = vpop.permute.xlu0 %6055
      %6057 = vrot.lane.b32.xlu0 %v5266, 120
      %v6058 = vpop.permute.xlu0 %6057
      %6059 = vrot.lane.b32.xlu0 %v5267, 120
      %v6060 = vpop.permute.xlu0 %6059
      %6061 = vrot.lane.b32.xlu0 %v5268, 120
      %v6062 = vpop.permute.xlu0 %6061
      %6063 = vrot.lane.b32.xlu0 %v5269, 120
      %v6064 = vpop.permute.xlu0 %6063
      %6065 = vrot.lane.b32.xlu0 %v5270, 120
      %v6066 = vpop.permute.xlu0 %6065
      %6067 = vrot.lane.b32.xlu0 %v5271, 120
      %v6068 = vpop.permute.xlu0 %6067
      %6069 = vrot.lane.b32.xlu0 %v5272, 120
      %v6070 = vpop.permute.xlu0 %6069
      %6071 = vrot.lane.b32.xlu0 %v5273, 120
      %v6072 = vpop.permute.xlu0 %6071
      %6073 = vrot.lane.b32.xlu0 %v5274, 120
      %v6074 = vpop.permute.xlu0 %6073
      %6139 = vrot.lane.b32.xlu0 %v5275, 12
      %v6140 = vpop.permute.xlu0 %6139
      %6141 = vrot.lane.b32.xlu0 %v5276, 12
      %v6142 = vpop.permute.xlu0 %6141
      %6143 = vrot.lane.b32.xlu0 %v5277, 12
      %v6144 = vpop.permute.xlu0 %6143
      %6145 = vrot.lane.b32.xlu0 %v5278, 12
      %v6146 = vpop.permute.xlu0 %6145
      %6147 = vrot.lane.b32.xlu0 %v5279, 12
      %v6148 = vpop.permute.xlu0 %6147
      %6149 = vrot.lane.b32.xlu0 %v5280, 12
      %v6150 = vpop.permute.xlu0 %6149
      %6151 = vrot.lane.b32.xlu0 %v5281, 12
      %v6152 = vpop.permute.xlu0 %6151
      %6153 = vrot.lane.b32.xlu0 %v5282, 12
      %v6154 = vpop.permute.xlu0 %6153
      %6155 = vrot.lane.b32.xlu0 %v5283, 12
      %v6156 = vpop.permute.xlu0 %6155
      %6157 = vrot.lane.b32.xlu0 %v5284, 12
      %v6158 = vpop.permute.xlu0 %6157
      %6159 = vrot.lane.b32.xlu0 %v5285, 12
      %v6160 = vpop.permute.xlu0 %6159
      %6161 = vrot.lane.b32.xlu0 %v5286, 12
      %v6162 = vpop.permute.xlu0 %6161
      %6163 = vrot.lane.b32.xlu0 %v5287, 12
      %v6164 = vpop.permute.xlu0 %6163
      %6165 = vrot.lane.b32.xlu0 %v5288, 12
      %v6166 = vpop.permute.xlu0 %6165
      %6167 = vrot.lane.b32.xlu0 %v5289, 12
      %v6168 = vpop.permute.xlu0 %6167
      %6169 = vrot.lane.b32.xlu0 %v5290, 12
      %v6170 = vpop.permute.xlu0 %6169
      %6171 = vrot.lane.b32.xlu0 %v5291, 12
      %v6172 = vpop.permute.xlu0 %6171
      %6173 = vrot.lane.b32.xlu0 %v5292, 12
      %v6174 = vpop.permute.xlu0 %6173
      %6175 = vrot.lane.b32.xlu0 %v5293, 12
      %v6176 = vpop.permute.xlu0 %6175
      %6177 = vrot.lane.b32.xlu0 %v5294, 12
      %v6178 = vpop.permute.xlu0 %6177
      %6179 = vrot.lane.b32.xlu0 %v5295, 12
      %v6180 = vpop.permute.xlu0 %6179
      %6181 = vrot.lane.b32.xlu0 %v5296, 12
      %v6182 = vpop.permute.xlu0 %6181
      %6183 = vrot.lane.b32.xlu0 %v5297, 12
      %v6184 = vpop.permute.xlu0 %6183
      %6185 = vrot.lane.b32.xlu0 %v5298, 12
      %v6186 = vpop.permute.xlu0 %6185
      %6187 = vrot.lane.b32.xlu0 %v5299, 12
      %v6188 = vpop.permute.xlu0 %6187
      %6189 = vrot.lane.b32.xlu0 %v5300, 12
      %v6190 = vpop.permute.xlu0 %6189
      %6191 = vrot.lane.b32.xlu0 %v5301, 12
      %v6192 = vpop.permute.xlu0 %6191
      %6193 = vrot.lane.b32.xlu0 %v5302, 12
      %v6194 = vpop.permute.xlu0 %6193
      %6195 = vrot.lane.b32.xlu0 %v5303, 12
      %v6196 = vpop.permute.xlu0 %6195
      %6197 = vrot.lane.b32.xlu0 %v5304, 12
      %v6198 = vpop.permute.xlu0 %6197
      %6199 = vrot.lane.b32.xlu0 %v5305, 12
      %v6200 = vpop.permute.xlu0 %6199
      %6201 = vrot.lane.b32.xlu0 %v5306, 12
      %v6202 = vpop.permute.xlu0 %6201
      %6267 = vrot.lane.b32.xlu0 %v5307, 32
      %v6268 = vpop.permute.xlu0 %6267
      %6269 = vrot.lane.b32.xlu0 %v5308, 32
      %v6270 = vpop.permute.xlu0 %6269
      %6271 = vrot.lane.b32.xlu0 %v5309, 32
      %v6272 = vpop.permute.xlu0 %6271
      %6273 = vrot.lane.b32.xlu0 %v5310, 32
      %v6274 = vpop.permute.xlu0 %6273
      %6275 = vrot.lane.b32.xlu0 %v5311, 32
      %v6276 = vpop.permute.xlu0 %6275
      %6277 = vrot.lane.b32.xlu0 %v5312, 32
      %v6278 = vpop.permute.xlu0 %6277
      %6279 = vrot.lane.b32.xlu0 %v5313, 32
      %v6280 = vpop.permute.xlu0 %6279
      %6281 = vrot.lane.b32.xlu0 %v5314, 32
      %v6282 = vpop.permute.xlu0 %6281
      %6283 = vrot.lane.b32.xlu0 %v5315, 32
      %v6284 = vpop.permute.xlu0 %6283
      %6285 = vrot.lane.b32.xlu0 %v5316, 32
      %v6286 = vpop.permute.xlu0 %6285
      %6287 = vrot.lane.b32.xlu0 %v5317, 32
      %v6288 = vpop.permute.xlu0 %6287
      %6289 = vrot.lane.b32.xlu0 %v5318, 32
      %v6290 = vpop.permute.xlu0 %6289
      %6291 = vrot.lane.b32.xlu0 %v5319, 32
      %v6292 = vpop.permute.xlu0 %6291
      %6293 = vrot.lane.b32.xlu0 %v5320, 32
      %v6294 = vpop.permute.xlu0 %6293
      %6295 = vrot.lane.b32.xlu0 %v5321, 32
      %v6296 = vpop.permute.xlu0 %6295
      %6297 = vrot.lane.b32.xlu0 %v5322, 32
      %v6298 = vpop.permute.xlu0 %6297
      %6299 = vrot.lane.b32.xlu0 %v5323, 32
      %v6300 = vpop.permute.xlu0 %6299
      %6301 = vrot.lane.b32.xlu0 %v5324, 32
      %v6302 = vpop.permute.xlu0 %6301
      %6303 = vrot.lane.b32.xlu0 %v5325, 32
      %v6304 = vpop.permute.xlu0 %6303
      %6305 = vrot.lane.b32.xlu0 %v5326, 32
      %v6306 = vpop.permute.xlu0 %6305
      %6307 = vrot.lane.b32.xlu0 %v5327, 32
      %v6308 = vpop.permute.xlu0 %6307
      %6309 = vrot.lane.b32.xlu0 %v5328, 32
      %v6310 = vpop.permute.xlu0 %6309
      %6311 = vrot.lane.b32.xlu0 %v5329, 32
      %v6312 = vpop.permute.xlu0 %6311
      %6313 = vrot.lane.b32.xlu0 %v5330, 32
      %v6314 = vpop.permute.xlu0 %6313
      %6315 = vrot.lane.b32.xlu0 %v5331, 32
      %v6316 = vpop.permute.xlu0 %6315
      %6317 = vrot.lane.b32.xlu0 %v5332, 32
      %v6318 = vpop.permute.xlu0 %6317
      %6319 = vrot.lane.b32.xlu0 %v5333, 32
      %v6320 = vpop.permute.xlu0 %6319
      %6321 = vrot.lane.b32.xlu0 %v5334, 32
      %v6322 = vpop.permute.xlu0 %6321
      %6323 = vrot.lane.b32.xlu0 %v5335, 32
      %v6324 = vpop.permute.xlu0 %6323
      %6325 = vrot.lane.b32.xlu0 %v5336, 32
      %v6326 = vpop.permute.xlu0 %6325
      %6327 = vrot.lane.b32.xlu0 %v5337, 32
      %v6328 = vpop.permute.xlu0 %6327
      %6329 = vrot.lane.b32.xlu0 %v5338, 32
      %v6330 = vpop.permute.xlu0 %6329
      %v6363 = vsel %vm279, %v5051, %v5372
      %v6364 = vsel %vm279, %v5052, %v5374
      %v6365 = vsel %vm279, %v5053, %v5376
      %v6366 = vsel %vm279, %v5054, %v5378
      %v6367 = vsel %vm279, %v5055, %v5380
      %v6368 = vsel %vm279, %v5056, %v5382
      %v6369 = vsel %vm279, %v5057, %v5384
      %v6370 = vsel %vm279, %v5058, %v5386
      %v6371 = vsel %vm279, %v5059, %v5388
      %v6372 = vsel %vm279, %v5060, %v5390
      %v6373 = vsel %vm279, %v5061, %v5392
      %v6374 = vsel %vm279, %v5062, %v5394
      %v6375 = vsel %vm279, %v5063, %v5396
      %v6376 = vsel %vm279, %v5064, %v5398
      %v6377 = vsel %vm279, %v5065, %v5400
      %v6378 = vsel %vm279, %v5066, %v5402
      %v6379 = vsel %vm279, %v5067, %v5404
      %v6380 = vsel %vm279, %v5068, %v5406
      %v6381 = vsel %vm279, %v5069, %v5408
      %v6382 = vsel %vm279, %v5070, %v5410
      %v6383 = vsel %vm279, %v5071, %v5412
      %v6384 = vsel %vm279, %v5072, %v5414
      %v6385 = vsel %vm279, %v5073, %v5416
      %v6386 = vsel %vm279, %v5074, %v5418
      %v6387 = vsel %vm279, %v5075, %v5420
      %v6388 = vsel %vm279, %v5076, %v5422
      %v6389 = vsel %vm279, %v5077, %v5424
      %v6390 = vsel %vm279, %v5078, %v5426
      %v6391 = vsel %vm279, %v5079, %v5428
      %v6392 = vsel %vm279, %v5080, %v5430
      %v6393 = vsel %vm279, %v5081, %v5432
      %v6394 = vsel %vm279, %v5082, %v5434
      %vm6395 = vcmask 326656
      %v6396 = vsel %vm6395, %v6363, %v5500
      %v6397 = vsel %vm6395, %v6364, %v5502
      %v6398 = vsel %vm6395, %v6365, %v5504
      %v6399 = vsel %vm6395, %v6366, %v5506
      %v6400 = vsel %vm6395, %v6367, %v5508
      %v6401 = vsel %vm6395, %v6368, %v5510
      %v6402 = vsel %vm6395, %v6369, %v5512
      %v6403 = vsel %vm6395, %v6370, %v5514
      %v6404 = vsel %vm6395, %v6371, %v5516
      %v6405 = vsel %vm6395, %v6372, %v5518
      %v6406 = vsel %vm6395, %v6373, %v5520
      %v6407 = vsel %vm6395, %v6374, %v5522
      %v6408 = vsel %vm6395, %v6375, %v5524
      %v6409 = vsel %vm6395, %v6376, %v5526
      %v6410 = vsel %vm6395, %v6377, %v5528
      %v6411 = vsel %vm6395, %v6378, %v5530
      %v6412 = vsel %vm6395, %v6379, %v5532
      %v6413 = vsel %vm6395, %v6380, %v5534
      %v6414 = vsel %vm6395, %v6381, %v5536
      %v6415 = vsel %vm6395, %v6382, %v5538
      %v6416 = vsel %vm6395, %v6383, %v5540
      %v6417 = vsel %vm6395, %v6384, %v5542
      %v6418 = vsel %vm6395, %v6385, %v5544
      %v6419 = vsel %vm6395, %v6386, %v5546
      %v6420 = vsel %vm6395, %v6387, %v5548
      %v6421 = vsel %vm6395, %v6388, %v5550
      %v6422 = vsel %vm6395, %v6389, %v5552
      %v6423 = vsel %vm6395, %v6390, %v5554
      %v6424 = vsel %vm6395, %v6391, %v5556
      %v6425 = vsel %vm6395, %v6392, %v5558
      %v6426 = vsel %vm6395, %v6393, %v5560
      %v6427 = vsel %vm6395, %v6394, %v5562
      %v6428 = vsel %vm4249, %v6396, %v5628
      %v6429 = vsel %vm4249, %v6397, %v5630
      %v6430 = vsel %vm4249, %v6398, %v5632
      %v6431 = vsel %vm4249, %v6399, %v5634
      %v6432 = vsel %vm4249, %v6400, %v5636
      %v6433 = vsel %vm4249, %v6401, %v5638
      %v6434 = vsel %vm4249, %v6402, %v5640
      %v6435 = vsel %vm4249, %v6403, %v5642
      %v6436 = vsel %vm4249, %v6404, %v5644
      %v6437 = vsel %vm4249, %v6405, %v5646
      %v6438 = vsel %vm4249, %v6406, %v5648
      %v6439 = vsel %vm4249, %v6407, %v5650
      %v6440 = vsel %vm4249, %v6408, %v5652
      %v6441 = vsel %vm4249, %v6409, %v5654
      %v6442 = vsel %vm4249, %v6410, %v5656
      %v6443 = vsel %vm4249, %v6411, %v5658
      %v6444 = vsel %vm4249, %v6412, %v5660
      %v6445 = vsel %vm4249, %v6413, %v5662
      %v6446 = vsel %vm4249, %v6414, %v5664
      %v6447 = vsel %vm4249, %v6415, %v5666
      %v6448 = vsel %vm4249, %v6416, %v5668
      %v6449 = vsel %vm4249, %v6417, %v5670
      %v6450 = vsel %vm4249, %v6418, %v5672
      %v6451 = vsel %vm4249, %v6419, %v5674
      %v6452 = vsel %vm4249, %v6420, %v5676
      %v6453 = vsel %vm4249, %v6421, %v5678
      %v6454 = vsel %vm4249, %v6422, %v5680
      %v6455 = vsel %vm4249, %v6423, %v5682
      %v6456 = vsel %vm4249, %v6424, %v5684
      %v6457 = vsel %vm4249, %v6425, %v5686
      %v6458 = vsel %vm4249, %v6426, %v5688
      %v6459 = vsel %vm4249, %v6427, %v5690
      %vm6460 = vcmask 654336
      %v6461 = vsel %vm6460, %v6428, %v5756
      %v6462 = vsel %vm6460, %v6429, %v5758
      %v6463 = vsel %vm6460, %v6430, %v5760
      %v6464 = vsel %vm6460, %v6431, %v5762
      %v6465 = vsel %vm6460, %v6432, %v5764
      %v6466 = vsel %vm6460, %v6433, %v5766
      %v6467 = vsel %vm6460, %v6434, %v5768
      %v6468 = vsel %vm6460, %v6435, %v5770
      %v6469 = vsel %vm6460, %v6436, %v5772
      %v6470 = vsel %vm6460, %v6437, %v5774
      %v6471 = vsel %vm6460, %v6438, %v5776
      %v6472 = vsel %vm6460, %v6439, %v5778
      %v6473 = vsel %vm6460, %v6440, %v5780
      %v6474 = vsel %vm6460, %v6441, %v5782
      %v6475 = vsel %vm6460, %v6442, %v5784
      %v6476 = vsel %vm6460, %v6443, %v5786
      %v6477 = vsel %vm6460, %v6444, %v5788
      %v6478 = vsel %vm6460, %v6445, %v5790
      %v6479 = vsel %vm6460, %v6446, %v5792
      %v6480 = vsel %vm6460, %v6447, %v5794
      %v6481 = vsel %vm6460, %v6448, %v5796
      %v6482 = vsel %vm6460, %v6449, %v5798
      %v6483 = vsel %vm6460, %v6450, %v5800
      %v6484 = vsel %vm6460, %v6451, %v5802
      %v6485 = vsel %vm6460, %v6452, %v5804
      %v6486 = vsel %vm6460, %v6453, %v5806
      %v6487 = vsel %vm6460, %v6454, %v5808
      %v6488 = vsel %vm6460, %v6455, %v5810
      %v6489 = vsel %vm6460, %v6456, %v5812
      %v6490 = vsel %vm6460, %v6457, %v5814
      %v6491 = vsel %vm6460, %v6458, %v5816
      %v6492 = vsel %vm6460, %v6459, %v5818
      %vm6493 = vcmask 818176
      %v6494 = vsel %vm6493, %v6461, %v5884
      %v6495 = vsel %vm6493, %v6462, %v5886
      %v6496 = vsel %vm6493, %v6463, %v5888
      %v6497 = vsel %vm6493, %v6464, %v5890
      %v6498 = vsel %vm6493, %v6465, %v5892
      %v6499 = vsel %vm6493, %v6466, %v5894
      %v6500 = vsel %vm6493, %v6467, %v5896
      %v6501 = vsel %vm6493, %v6468, %v5898
      %v6502 = vsel %vm6493, %v6469, %v5900
      %v6503 = vsel %vm6493, %v6470, %v5902
      %v6504 = vsel %vm6493, %v6471, %v5904
      %v6505 = vsel %vm6493, %v6472, %v5906
      %v6506 = vsel %vm6493, %v6473, %v5908
      %v6507 = vsel %vm6493, %v6474, %v5910
      %v6508 = vsel %vm6493, %v6475, %v5912
      %v6509 = vsel %vm6493, %v6476, %v5914
      %v6510 = vsel %vm6493, %v6477, %v5916
      %v6511 = vsel %vm6493, %v6478, %v5918
      %v6512 = vsel %vm6493, %v6479, %v5920
      %v6513 = vsel %vm6493, %v6480, %v5922
      %v6514 = vsel %vm6493, %v6481, %v5924
      %v6515 = vsel %vm6493, %v6482, %v5926
      %v6516 = vsel %vm6493, %v6483, %v5928
      %v6517 = vsel %vm6493, %v6484, %v5930
      %v6518 = vsel %vm6493, %v6485, %v5932
      %v6519 = vsel %vm6493, %v6486, %v5934
      %v6520 = vsel %vm6493, %v6487, %v5936
      %v6521 = vsel %vm6493, %v6488, %v5938
      %v6522 = vsel %vm6493, %v6489, %v5940
      %v6523 = vsel %vm6493, %v6490, %v5942
      %v6524 = vsel %vm6493, %v6491, %v5944
      %v6525 = vsel %vm6493, %v6492, %v5946
      %vm6526 = vcmask 982016
      %v6527 = vsel %vm6526, %v6494, %v6012
      %v6528 = vsel %vm6526, %v6495, %v6014
      %v6529 = vsel %vm6526, %v6496, %v6016
      %v6530 = vsel %vm6526, %v6497, %v6018
      %v6531 = vsel %vm6526, %v6498, %v6020
      %v6532 = vsel %vm6526, %v6499, %v6022
      %v6533 = vsel %vm6526, %v6500, %v6024
      %v6534 = vsel %vm6526, %v6501, %v6026
      %v6535 = vsel %vm6526, %v6502, %v6028
      %v6536 = vsel %vm6526, %v6503, %v6030
      %v6537 = vsel %vm6526, %v6504, %v6032
      %v6538 = vsel %vm6526, %v6505, %v6034
      %v6539 = vsel %vm6526, %v6506, %v6036
      %v6540 = vsel %vm6526, %v6507, %v6038
      %v6541 = vsel %vm6526, %v6508, %v6040
      %v6542 = vsel %vm6526, %v6509, %v6042
      %v6543 = vsel %vm6526, %v6510, %v6044
      %v6544 = vsel %vm6526, %v6511, %v6046
      %v6545 = vsel %vm6526, %v6512, %v6048
      %v6546 = vsel %vm6526, %v6513, %v6050
      %v6547 = vsel %vm6526, %v6514, %v6052
      %v6548 = vsel %vm6526, %v6515, %v6054
      %v6549 = vsel %vm6526, %v6516, %v6056
      %v6550 = vsel %vm6526, %v6517, %v6058
      %v6551 = vsel %vm6526, %v6518, %v6060
      %v6552 = vsel %vm6526, %v6519, %v6062
      %v6553 = vsel %vm6526, %v6520, %v6064
      %v6554 = vsel %vm6526, %v6521, %v6066
      %v6555 = vsel %vm6526, %v6522, %v6068
      %v6556 = vsel %vm6526, %v6523, %v6070
      %v6557 = vsel %vm6526, %v6524, %v6072
      %v6558 = vsel %vm6526, %v6525, %v6074
      %v6559 = vsel %vm1949, %v6012, %v6140
      %v6560 = vsel %vm1949, %v6014, %v6142
      %v6561 = vsel %vm1949, %v6016, %v6144
      %v6562 = vsel %vm1949, %v6018, %v6146
      %v6563 = vsel %vm1949, %v6020, %v6148
      %v6564 = vsel %vm1949, %v6022, %v6150
      %v6565 = vsel %vm1949, %v6024, %v6152
      %v6566 = vsel %vm1949, %v6026, %v6154
      %v6567 = vsel %vm1949, %v6028, %v6156
      %v6568 = vsel %vm1949, %v6030, %v6158
      %v6569 = vsel %vm1949, %v6032, %v6160
      %v6570 = vsel %vm1949, %v6034, %v6162
      %v6571 = vsel %vm1949, %v6036, %v6164
      %v6572 = vsel %vm1949, %v6038, %v6166
      %v6573 = vsel %vm1949, %v6040, %v6168
      %v6574 = vsel %vm1949, %v6042, %v6170
      %v6575 = vsel %vm1949, %v6044, %v6172
      %v6576 = vsel %vm1949, %v6046, %v6174
      %v6577 = vsel %vm1949, %v6048, %v6176
      %v6578 = vsel %vm1949, %v6050, %v6178
      %v6579 = vsel %vm1949, %v6052, %v6180
      %v6580 = vsel %vm1949, %v6054, %v6182
      %v6581 = vsel %vm1949, %v6056, %v6184
      %v6582 = vsel %vm1949, %v6058, %v6186
      %v6583 = vsel %vm1949, %v6060, %v6188
      %v6584 = vsel %vm1949, %v6062, %v6190
      %v6585 = vsel %vm1949, %v6064, %v6192
      %v6586 = vsel %vm1949, %v6066, %v6194
      %v6587 = vsel %vm1949, %v6068, %v6196
      %v6588 = vsel %vm1949, %v6070, %v6198
      %v6589 = vsel %vm1949, %v6072, %v6200
      %v6590 = vsel %vm1949, %v6074, %v6202
      %v6591 = vsel %vm2113, %v6559, %v6268
      %v6592 = vsel %vm2113, %v6560, %v6270
      %v6593 = vsel %vm2113, %v6561, %v6272
      %v6594 = vsel %vm2113, %v6562, %v6274
      %v6595 = vsel %vm2113, %v6563, %v6276
      %v6596 = vsel %vm2113, %v6564, %v6278
      %v6597 = vsel %vm2113, %v6565, %v6280
      %v6598 = vsel %vm2113, %v6566, %v6282
      %v6599 = vsel %vm2113, %v6567, %v6284
      %v6600 = vsel %vm2113, %v6568, %v6286
      %v6601 = vsel %vm2113, %v6569, %v6288
      %v6602 = vsel %vm2113, %v6570, %v6290
      %v6603 = vsel %vm2113, %v6571, %v6292
      %v6604 = vsel %vm2113, %v6572, %v6294
      %v6605 = vsel %vm2113, %v6573, %v6296
      %v6606 = vsel %vm2113, %v6574, %v6298
      %v6607 = vsel %vm2113, %v6575, %v6300
      %v6608 = vsel %vm2113, %v6576, %v6302
      %v6609 = vsel %vm2113, %v6577, %v6304
      %v6610 = vsel %vm2113, %v6578, %v6306
      %v6611 = vsel %vm2113, %v6579, %v6308
      %v6612 = vsel %vm2113, %v6580, %v6310
      %v6613 = vsel %vm2113, %v6581, %v6312
      %v6614 = vsel %vm2113, %v6582, %v6314
      %v6615 = vsel %vm2113, %v6583, %v6316
      %v6616 = vsel %vm2113, %v6584, %v6318
      %v6617 = vsel %vm2113, %v6585, %v6320
      %v6618 = vsel %vm2113, %v6586, %v6322
      %v6619 = vsel %vm2113, %v6587, %v6324
      %v6620 = vsel %vm2113, %v6588, %v6326
      %v6621 = vsel %vm2113, %v6589, %v6328
      %v6622 = vsel %vm2113, %v6590, %v6330
      %v6623 = vld [vmem:[%s6] sm:$0xff]
      %v6624 = vld [vmem:[%s6 + $0x8] sm:$0xff]
      %v6625 = vld [vmem:[%s6 + $0x10] sm:$0xff]
      %v6626 = vld [vmem:[%s6 + $0x18] sm:$0xff]
      %v6627 = vld [vmem:[%s6 + $0x20] sm:$0xff]
      %v6628 = vld [vmem:[%s6 + $0x28] sm:$0xff]
      %v6629 = vld [vmem:[%s6 + $0x30] sm:$0xff]
      %v6630 = vld [vmem:[%s6 + $0x38] sm:$0xff]
      %v6631 = vld [vmem:[%s6 + $0x40] sm:$0xff]
      %v6632 = vld [vmem:[%s6 + $0x48] sm:$0xff]
      %v6633 = vld [vmem:[%s6 + $0x50] sm:$0xff]
      %v6634 = vld [vmem:[%s6 + $0x58] sm:$0xff]
      %v6635 = vld [vmem:[%s6 + $0x60] sm:$0xff]
      %v6636 = vld [vmem:[%s6 + $0x68] sm:$0xff]
      %v6637 = vld [vmem:[%s6 + $0x70] sm:$0xff]
      %v6638 = vld [vmem:[%s6 + $0x78] sm:$0xff]
      %v6639 = vld [vmem:[%s6 + $0x80] sm:$0xff]
      %v6640 = vld [vmem:[%s6 + $0x88] sm:$0xff]
      %v6641 = vld [vmem:[%s6 + $0x90] sm:$0xff]
      %v6642 = vld [vmem:[%s6 + $0x98] sm:$0xff]
      %v6643 = vld [vmem:[%s6 + $0xa0] sm:$0xff]
      %v6644 = vld [vmem:[%s6 + $0xa8] sm:$0xff]
      %v6645 = vld [vmem:[%s6 + $0xb0] sm:$0xf]
      %vm6646 = vcmask 424960
      %v6648 = vsel %vm6646, %v6591, 0
      %v6651 = vsel %vm6646, %v6592, 0
      %v6654 = vsel %vm6646, %v6593, 0
      %v6657 = vsel %vm6646, %v6594, 0
      %v6660 = vsel %vm6646, %v6595, 0
      %v6663 = vsel %vm6646, %v6596, 0
      %v6666 = vsel %vm6646, %v6597, 0
      %v6669 = vsel %vm6646, %v6598, 0
      %v6672 = vsel %vm6646, %v6599, 0
      %v6675 = vsel %vm6646, %v6600, 0
      %v6678 = vsel %vm6646, %v6601, 0
      %v6681 = vsel %vm6646, %v6602, 0
      %v6684 = vsel %vm6646, %v6603, 0
      %v6687 = vsel %vm6646, %v6604, 0
      %v6690 = vsel %vm6646, %v6605, 0
      %v6693 = vsel %vm6646, %v6606, 0
      %v6696 = vsel %vm6646, %v6607, 0
      %v6699 = vsel %vm6646, %v6608, 0
      %v6702 = vsel %vm6646, %v6609, 0
      %v6705 = vsel %vm6646, %v6610, 0
      %v6708 = vsel %vm6646, %v6611, 0
      %v6711 = vsel %vm6646, %v6612, 0
      %v6714 = vsel %vm6646, %v6613, 0
      %v6717 = vsel %vm6646, %v6614, 0
      %v6720 = vsel %vm6646, %v6615, 0
      %v6723 = vsel %vm6646, %v6616, 0
      %v6726 = vsel %vm6646, %v6617, 0
      %v6729 = vsel %vm6646, %v6618, 0
      %v6732 = vsel %vm6646, %v6619, 0
      %v6735 = vsel %vm6646, %v6620, 0
      %v6738 = vsel %vm6646, %v6621, 0
      %v6741 = vsel %vm6646, %v6622, 0
      %v6744 = vsel %vm2248, %v6645, 0
      %6746 = vmatprep.subr.mxu0 0.0
      %6747 = vmatpush1.msra.mxu0 %v6638
      %6748 = vmatprep.subr.mxu0 0.0
      %6749 = vmatpush1.msra.mxu0 %v6637
      %6750 = vmatprep.subr.mxu0 0.0
      %6751 = vmatpush1.msra.mxu0 %v6636
      %6752 = vmatprep.subr.mxu0 0.0
      %6753 = vmatpush1.msra.mxu0 %v6635
      %6754 = vmatprep.subr.mxu0 0.0
      %6755 = vmatpush1.msra.mxu0 %v6634
      %6756 = vmatprep.subr.mxu0 0.0
      %6757 = vmatpush1.msra.mxu0 %v6633
      %6758 = vmatprep.subr.mxu0 0.0
      %6759 = vmatpush1.msra.mxu0 %v6632
      %6760 = vmatprep.subr.mxu0 0.0
      %6761 = vmatpush1.msra.mxu0 %v6631
      %6762 = vmatprep.subr.mxu0 0.0
      %6763 = vmatpush1.msra.mxu0 %v6630
      %6764 = vmatprep.subr.mxu0 0.0
      %6765 = vmatpush1.msra.mxu0 %v6629
      %6766 = vmatprep.subr.mxu0 0.0
      %6767 = vmatpush1.msra.mxu0 %v6628
      %6768 = vmatprep.subr.mxu0 0.0
      %6769 = vmatpush1.msra.mxu0 %v6627
      %6770 = vmatprep.subr.mxu0 0.0
      %6771 = vmatpush1.msra.mxu0 %v6626
      %6772 = vmatprep.subr.mxu0 0.0
      %6773 = vmatpush1.msra.mxu0 %v6625
      %6774 = vmatprep.subr.mxu0 0.0
      %6775 = vmatpush1.msra.mxu0 %v6624
      %6776 = vmatprep.subr.mxu0 0.0
      %6777 = vmatpush1.msra.mxu0 %v6623
      %6778 = vmatprep.subr.mxu0 0.0
      %6779 = vmatpush2.msra.mxu0 0.0
      %6780 = vmatprep.subr.mxu0 0.0
      %6781 = vmatpush2.msra.mxu0 0.0
      %6782 = vmatprep.subr.mxu0 0.0
      %6783 = vmatpush2.msra.mxu0 0.0
      %6784 = vmatprep.subr.mxu0 0.0
      %6785 = vmatpush2.msra.mxu0 0.0
      %6786 = vmatprep.subr.mxu0 0.0
      %6787 = vmatpush2.msra.mxu0 0.0
      %6788 = vmatprep.subr.mxu0 0.0
      %6789 = vmatpush2.msra.mxu0 0.0
      %6790 = vmatprep.subr.mxu0 0.0
      %6791 = vmatpush2.msra.mxu0 0.0
      %6792 = vmatprep.subr.mxu0 0.0
      %6793 = vmatpush2.msra.mxu0 0.0
      %6794 = vmatprep.subr.mxu0 0.0
      %6795 = vmatpush2.msra.mxu0 0.0
      %6796 = vmatprep.subr.mxu0 0.0
      %6797 = vmatpush2.msra.mxu0 %v6744
      %6798 = vmatprep.subr.mxu0 0.0
      %6799 = vmatpush2.msra.mxu0 %v6644
      %6800 = vmatprep.subr.mxu0 0.0
      %6801 = vmatpush2.msra.mxu0 %v6643
      %6802 = vmatprep.subr.mxu0 0.0
      %6803 = vmatpush2.msra.mxu0 %v6642
      %6804 = vmatprep.subr.mxu0 0.0
      %6805 = vmatpush2.msra.mxu0 %v6641
      %6806 = vmatprep.subr.mxu0 0.0
      %6807 = vmatpush2.msra.mxu0 %v6640
      %6808 = vmatprep.subr.mxu0 0.0
      %6809 = vmatpush2.msra.mxu0 %v6639
      %6810 = vmatprep.mubr.f32.mxu0 %v6648
      %6811 = vmatmul.mubr.f32.gmra.mxu0 %v6527
      %v6812 = vpop.f32.mrf.mxu0
      %v6813 = vadd.f32 0.0, %v6812
      %v6814 = vpop.f32.mrf.mxu0
      %6815 = vmatprep.mubr.f32.mxu0 %v6651
      %6816 = vmatmul.mubr.f32.gmra.mxu0 %v6528
      %v6817 = vpop.f32.mrf.mxu0
      %v6818 = vadd.f32 0.0, %v6817
      %v6819 = vpop.f32.mrf.mxu0
      %6820 = vmatprep.mubr.f32.mxu0 %v6654
      %6821 = vmatmul.mubr.f32.gmra.mxu0 %v6529
      %v6822 = vpop.f32.mrf.mxu0
      %v6823 = vadd.f32 0.0, %v6822
      %v6824 = vpop.f32.mrf.mxu0
      %6825 = vmatprep.mubr.f32.mxu0 %v6657
      %6826 = vmatmul.mubr.f32.gmra.mxu0 %v6530
      %v6827 = vpop.f32.mrf.mxu0
      %v6828 = vadd.f32 0.0, %v6827
      %v6829 = vpop.f32.mrf.mxu0
      %6830 = vmatprep.mubr.f32.mxu0 %v6660
      %6831 = vmatmul.mubr.f32.gmra.mxu0 %v6531
      %v6832 = vpop.f32.mrf.mxu0
      %v6833 = vadd.f32 0.0, %v6832
      %v6834 = vpop.f32.mrf.mxu0
      %6835 = vmatprep.mubr.f32.mxu0 %v6663
      %6836 = vmatmul.mubr.f32.gmra.mxu0 %v6532
      %v6837 = vpop.f32.mrf.mxu0
      %v6838 = vadd.f32 0.0, %v6837
      %v6839 = vpop.f32.mrf.mxu0
      %6840 = vmatprep.mubr.f32.mxu0 %v6666
      %6841 = vmatmul.mubr.f32.gmra.mxu0 %v6533
      %v6842 = vpop.f32.mrf.mxu0
      %v6843 = vadd.f32 0.0, %v6842
      %v6844 = vpop.f32.mrf.mxu0
      %6845 = vmatprep.mubr.f32.mxu0 %v6669
      %6846 = vmatmul.mubr.f32.gmra.mxu0 %v6534
      %v6847 = vpop.f32.mrf.mxu0
      %v6848 = vadd.f32 0.0, %v6847
      %v6849 = vpop.f32.mrf.mxu0
      %6850 = vmatprep.mubr.f32.mxu0 %v6672
      %6851 = vmatmul.mubr.f32.gmra.mxu0 %v6535
      %v6852 = vpop.f32.mrf.mxu0
      %v6853 = vadd.f32 0.0, %v6852
      %v6854 = vpop.f32.mrf.mxu0
      %6855 = vmatprep.mubr.f32.mxu0 %v6675
      %6856 = vmatmul.mubr.f32.gmra.mxu0 %v6536
      %v6857 = vpop.f32.mrf.mxu0
      %v6858 = vadd.f32 0.0, %v6857
      %v6859 = vpop.f32.mrf.mxu0
      %6860 = vmatprep.mubr.f32.mxu0 %v6678
      %6861 = vmatmul.mubr.f32.gmra.mxu0 %v6537
      %v6862 = vpop.f32.mrf.mxu0
      %v6863 = vadd.f32 0.0, %v6862
      %v6864 = vpop.f32.mrf.mxu0
      %6865 = vmatprep.mubr.f32.mxu0 %v6681
      %6866 = vmatmul.mubr.f32.gmra.mxu0 %v6538
      %v6867 = vpop.f32.mrf.mxu0
      %v6868 = vadd.f32 0.0, %v6867
      %v6869 = vpop.f32.mrf.mxu0
      %6870 = vmatprep.mubr.f32.mxu0 %v6684
      %6871 = vmatmul.mubr.f32.gmra.mxu0 %v6539
      %v6872 = vpop.f32.mrf.mxu0
      %v6873 = vadd.f32 0.0, %v6872
      %v6874 = vpop.f32.mrf.mxu0
      %6875 = vmatprep.mubr.f32.mxu0 %v6687
      %6876 = vmatmul.mubr.f32.gmra.mxu0 %v6540
      %v6877 = vpop.f32.mrf.mxu0
      %v6878 = vadd.f32 0.0, %v6877
      %v6879 = vpop.f32.mrf.mxu0
      %6880 = vmatprep.mubr.f32.mxu0 %v6690
      %6881 = vmatmul.mubr.f32.gmra.mxu0 %v6541
      %v6882 = vpop.f32.mrf.mxu0
      %v6883 = vadd.f32 0.0, %v6882
      %v6884 = vpop.f32.mrf.mxu0
      %6885 = vmatprep.mubr.f32.mxu0 %v6693
      %6886 = vmatmul.mubr.f32.gmra.mxu0 %v6542
      %v6887 = vpop.f32.mrf.mxu0
      %v6888 = vadd.f32 0.0, %v6887
      %v6889 = vpop.f32.mrf.mxu0
      %6890 = vmatprep.mubr.f32.mxu0 %v6696
      %6891 = vmatmul.mubr.f32.gmra.mxu0 %v6543
      %v6892 = vpop.f32.mrf.mxu0
      %v6893 = vadd.f32 0.0, %v6892
      %v6894 = vpop.f32.mrf.mxu0
      %6895 = vmatprep.mubr.f32.mxu0 %v6699
      %6896 = vmatmul.mubr.f32.gmra.mxu0 %v6544
      %v6897 = vpop.f32.mrf.mxu0
      %v6898 = vadd.f32 0.0, %v6897
      %v6899 = vpop.f32.mrf.mxu0
      %6900 = vmatprep.mubr.f32.mxu0 %v6702
      %6901 = vmatmul.mubr.f32.gmra.mxu0 %v6545
      %v6902 = vpop.f32.mrf.mxu0
      %v6903 = vadd.f32 0.0, %v6902
      %v6904 = vpop.f32.mrf.mxu0
      %6905 = vmatprep.mubr.f32.mxu0 %v6705
      %6906 = vmatmul.mubr.f32.gmra.mxu0 %v6546
      %v6907 = vpop.f32.mrf.mxu0
      %v6908 = vadd.f32 0.0, %v6907
      %v6909 = vpop.f32.mrf.mxu0
      %6910 = vmatprep.mubr.f32.mxu0 %v6708
      %6911 = vmatmul.mubr.f32.gmra.mxu0 %v6547
      %v6912 = vpop.f32.mrf.mxu0
      %v6913 = vadd.f32 0.0, %v6912
      %v6914 = vpop.f32.mrf.mxu0
      %6915 = vmatprep.mubr.f32.mxu0 %v6711
      %6916 = vmatmul.mubr.f32.gmra.mxu0 %v6548
      %v6917 = vpop.f32.mrf.mxu0
      %v6918 = vadd.f32 0.0, %v6917
      %v6919 = vpop.f32.mrf.mxu0
      %6920 = vmatprep.mubr.f32.mxu0 %v6714
      %6921 = vmatmul.mubr.f32.gmra.mxu0 %v6549
      %v6922 = vpop.f32.mrf.mxu0
      %v6923 = vadd.f32 0.0, %v6922
      %v6924 = vpop.f32.mrf.mxu0
      %6925 = vmatprep.mubr.f32.mxu0 %v6717
      %6926 = vmatmul.mubr.f32.gmra.mxu0 %v6550
      %v6927 = vpop.f32.mrf.mxu0
      %v6928 = vadd.f32 0.0, %v6927
      %v6929 = vpop.f32.mrf.mxu0
      %6930 = vmatprep.mubr.f32.mxu0 %v6720
      %6931 = vmatmul.mubr.f32.gmra.mxu0 %v6551
      %v6932 = vpop.f32.mrf.mxu0
      %v6933 = vadd.f32 0.0, %v6932
      %v6934 = vpop.f32.mrf.mxu0
      %6935 = vmatprep.mubr.f32.mxu0 %v6723
      %6936 = vmatmul.mubr.f32.gmra.mxu0 %v6552
      %v6937 = vpop.f32.mrf.mxu0
      %v6938 = vadd.f32 0.0, %v6937
      %v6939 = vpop.f32.mrf.mxu0
      %6940 = vmatprep.mubr.f32.mxu0 %v6726
      %6941 = vmatmul.mubr.f32.gmra.mxu0 %v6553
      %v6942 = vpop.f32.mrf.mxu0
      %v6943 = vadd.f32 0.0, %v6942
      %v6944 = vpop.f32.mrf.mxu0
      %6945 = vmatprep.mubr.f32.mxu0 %v6729
      %6946 = vmatmul.mubr.f32.gmra.mxu0 %v6554
      %v6947 = vpop.f32.mrf.mxu0
      %v6948 = vadd.f32 0.0, %v6947
      %v6949 = vpop.f32.mrf.mxu0
      %6950 = vmatprep.mubr.f32.mxu0 %v6732
      %6951 = vmatmul.mubr.f32.gmra.mxu0 %v6555
      %v6952 = vpop.f32.mrf.mxu0
      %v6953 = vadd.f32 0.0, %v6952
      %v6954 = vpop.f32.mrf.mxu0
      %6955 = vmatprep.mubr.f32.mxu0 %v6735
      %6956 = vmatmul.mubr.f32.gmra.mxu0 %v6556
      %v6957 = vpop.f32.mrf.mxu0
      %v6958 = vadd.f32 0.0, %v6957
      %v6959 = vpop.f32.mrf.mxu0
      %6960 = vmatprep.mubr.f32.mxu0 %v6738
      %6961 = vmatmul.mubr.f32.gmra.mxu0 %v6557
      %v6962 = vpop.f32.mrf.mxu0
      %v6963 = vadd.f32 0.0, %v6962
      %v6964 = vpop.f32.mrf.mxu0
      %6965 = vmatprep.mubr.f32.mxu0 %v6741
      %6966 = vmatmul.mubr.f32.gmra.mxu0 %v6558
      %v6967 = vpop.f32.mrf.mxu0
      %v6968 = vadd.f32 0.0, %v6967
      %v6969 = vpop.f32.mrf.mxu0
      %6970 = vdwg.mxu0
      %6971 = vst [vmem:[%s278] sm:$0xff] %v6813
      %6972 = vst [vmem:[%s278 + $0x8] sm:$0xff] %v6818
      %6973 = vst [vmem:[%s278 + $0x10] sm:$0xff] %v6823
      %6974 = vst [vmem:[%s278 + $0x18] sm:$0xff] %v6828
      %6975 = vst [vmem:[%s278 + $0x20] sm:$0xff] %v6833
      %6976 = vst [vmem:[%s278 + $0x28] sm:$0xff] %v6838
      %6977 = vst [vmem:[%s278 + $0x30] sm:$0xff] %v6843
      %6978 = vst [vmem:[%s278 + $0x38] sm:$0xff] %v6848
      %6979 = vst [vmem:[%s278 + $0x40] sm:$0xff] %v6853
      %6980 = vst [vmem:[%s278 + $0x48] sm:$0xff] %v6858
      %6981 = vst [vmem:[%s278 + $0x50] sm:$0xff] %v6863
      %6982 = vst [vmem:[%s278 + $0x58] sm:$0xff] %v6868
      %6983 = vst [vmem:[%s278 + $0x60] sm:$0xff] %v6873
      %6984 = vst [vmem:[%s278 + $0x68] sm:$0xff] %v6878
      %6985 = vst [vmem:[%s278 + $0x70] sm:$0xff] %v6883
      %6986 = vst [vmem:[%s278 + $0x78] sm:$0xff] %v6888
      %6987 = vst [vmem:[%s278 + $0x80] sm:$0xff] %v6893
      %6988 = vst [vmem:[%s278 + $0x88] sm:$0xff] %v6898
      %6989 = vst [vmem:[%s278 + $0x90] sm:$0xff] %v6903
      %6990 = vst [vmem:[%s278 + $0x98] sm:$0xff] %v6908
      %6991 = vst [vmem:[%s278 + $0xa0] sm:$0xff] %v6913
      %6992 = vst [vmem:[%s278 + $0xa8] sm:$0xff] %v6918
      %6993 = vst [vmem:[%s278 + $0xb0] sm:$0xff] %v6923
      %6994 = vst [vmem:[%s278 + $0xb8] sm:$0xff] %v6928
      %6995 = vst [vmem:[%s278 + $0xc0] sm:$0xff] %v6933
      %6996 = vst [vmem:[%s278 + $0xc8] sm:$0xff] %v6938
      %6997 = vst [vmem:[%s278 + $0xd0] sm:$0xff] %v6943
      %6998 = vst [vmem:[%s278 + $0xd8] sm:$0xff] %v6948
      %6999 = vst [vmem:[%s278 + $0xe0] sm:$0xff] %v6953
      %7000 = vst [vmem:[%s278 + $0xe8] sm:$0xff] %v6958
      %7001 = vst [vmem:[%s278 + $0xf0] sm:$0xff] %v6963
      %7002 = vst [vmem:[%s278 + $0xf8] sm:$0xff] %v6968
      %p7003 = scmp.lt.s32.totalorder %s18, 1
      %s7004 = scalar_select %p7003, %s18, 1
      %s7005 = smul.addr %s7004, 32
      %s7006 = smul.addr %s7005, 8
      %s7007 = scalar_lea.vmem %s7, %s7006
      // Predicated region
      $region49: #{dense_block_forward.1} parent=47 // pred_check
        %p7008 = pneg %p188
      $region50: #{dense_block_forward.1} parent=47 // pred_check_branch
        %7010 = sbr.rel (%p7008) target = $region52
      $region51: #{dense_block_forward.1} parent=47 // pred_region
        _
      $region52: #{dense_block_forward.1} parent=47 // pred_fallthru
        _
    $region48: #{dense_block_forward.1} parent=5 // pred_fallthru
      _
    %p7011 = scmp.le.s32.totalorder 2, %s13
    // Predicated region
    $region53: #{dense_block_forward.1} parent=5 // pred_check
      %p7012 = pneg %p7011
    $region54: #{dense_block_forward.1} parent=5 // pred_check_branch
      %7014 = sbr.rel (%p7012) target = $region56
    $region55: #{dense_block_forward.1} parent=5 // pred_region
      %s7015 = ssub.s32 %s13, 2
      // Predicated region
      $region57: #{dense_block_forward.1} parent=55 // pred_check
        %p7016 = pneg %p194
      $region58: #{dense_block_forward.1} parent=55 // pred_check_branch
        %7018 = sbr.rel (%p7016) target = $region60
      $region59: #{dense_block_forward.1} parent=55 // pred_region
        %p7019 = scmp.lt.s32.totalorder %s19, 1
        %s7020 = scalar_select %p7019, %s19, 1
        %s7021 = smul.addr %s7020, 32
        %s7022 = smul.addr %s7021, 8
        %s7023 = scalar_lea.vmem %s7, %s7022
      $region60: #{dense_block_forward.1} parent=55 // pred_fallthru
        _
    $region56: #{dense_block_forward.1} parent=5 // pred_fallthru
      _
  $region6: #{dense_block_forward.1} parent=0 // loop_footer
    %s17 = sadd.s32 1, %s13
  $region7: #{dense_block_forward.1} parent=0 // loop_footer_branch
    %12 = sbr.rel target = $region3
  $region8: #{dense_block_forward.1} parent=0 // loop_exit
    _

</llo_original>
